<compile_context>
chip_gen: v6e
topology: v6e:2x2x1
jax: 0.10.0
libtpu: 0.0.40
codegen_flags: <defaults>
</compile_context>

<pallas_src>
import functools

import jax
import jax.numpy as jnp
from jax import lax
from jax.experimental import pallas as pl
from jax.experimental.pallas import tpu as pltpu

_LANES = 128
_COMPUTE_DTYPE = jnp.bfloat16


def _round_up(x, m):
    return (x + m - 1) // m * m


def _pick_row_block(H, W, Cp, budget_bytes=2 << 20):
    """Largest divisor of H whose im2col LHS + f32 accumulator fit the budget."""
    best = 1
    for rb in range(1, H + 1):
        if H % rb:
            continue
        lhs_bytes = rb * W * 9 * Cp * 2          # bf16 im2col LHS
        acc_bytes = rb * W * Cp * 4              # f32 accumulator
        if lhs_bytes + acc_bytes <= budget_bytes:
            best = rb
    return best


def _basic_block_kernel(x_ref, w1_ref, s1_ref, b1_ref, w2_ref, s2_ref, b2_ref,
                        out_ref, xpad_ref, y1pad_ref, *, rb):
    # x_ref   : (1, H, W, Cp)  unpadded image, native dtype, channels lane-padded
    # w*_ref  : (9*Cp, Cp)     im2col conv weights, bf16, rows ordered (dy, dx, cin)
    # s*/b*   : (1, Cp)        folded inference-BN scale / bias, f32
    # out_ref : (1, H, W, Cp)
    # xpad_ref / y1pad_ref : (H+2, W+2, Cp) bf16 VMEM scratch (zero spatial border)
    _, H, W, Cp = x_ref.shape
    Wp = W + 2
    nblk = H // rb
    cdt = xpad_ref.dtype

    # Zero only the border rows every grid step (interior is fully overwritten;
    # zero border *columns* are baked into every full-row slab store below).
    # NOTE: not gated on program_id -- safe under "parallel" semantics.
    zrow = jnp.zeros((Wp, Cp), cdt)
    xpad_ref[0] = zrow
    xpad_ref[H + 1] = zrow
    y1pad_ref[0] = zrow
    y1pad_ref[H + 1] = zrow

    # Build the zero-padded bf16 input in VMEM with one aligned full-slab store.
    zcol_img = jnp.zeros((H, 1, Cp), cdt)
    xpad_ref[1:H + 1] = jnp.concatenate(
        [zcol_img, x_ref[0].astype(cdt), zcol_img], axis=1)

    zcol_blk = jnp.zeros((rb, 1, Cp), cdt)

    def im2col(src_ref, r0):
        # (rb*W, 9*Cp) bf16 patch matrix for output rows [r0, r0+rb).
        slab = src_ref[pl.ds(r0, rb + 2)]                        # (rb+2, Wp, Cp)
        taps = [slab[dy:dy + rb, dx:dx + W, :].reshape(rb * W, Cp)
                for dy in range(3) for dx in range(3)]
        return jnp.concatenate(taps, axis=-1)

    # ---- conv1 + bn1 + relu  ->  interior of y1pad (never leaves VMEM) ----
    def conv1_body(i, carry):
        r0 = pl.multiple_of(i * rb, rb)
        acc = jnp.dot(im2col(xpad_ref, r0), w1_ref[...],
                      preferred_element_type=jnp.float32)        # (rb*W, Cp) f32
        y1 = jnp.maximum(acc * s1_ref[...] + b1_ref[...], 0.0)   # f32 epilogue
        y1 = y1.astype(cdt).reshape(rb, W, Cp)
        y1pad_ref[pl.ds(r0 + 1, rb)] = jnp.concatenate(
            [zcol_blk, y1, zcol_blk], axis=1)
        return carry

    lax.fori_loop(0, nblk, conv1_body, None)

    # ---- conv2 + bn2 + residual + relu  ->  out ----
    def conv2_body(i, carry):
        r0 = pl.multiple_of(i * rb, rb)
        acc = jnp.dot(im2col(y1pad_ref, r0), w2_ref[...],
                      preferred_element_type=jnp.float32)        # (rb*W, Cp) f32
        res = x_ref[0, pl.ds(r0, rb)].astype(jnp.float32).reshape(rb * W, Cp)
        y = jnp.maximum(acc * s2_ref[...] + b2_ref[...] + res, 0.0)
        out_ref[0, pl.ds(r0, rb)] = y.reshape(rb, W, Cp).astype(out_ref.dtype)
        return carry

    lax.fori_loop(0, nblk, conv2_body, None)


def _fold_bn(gamma, beta, mean, var, eps, cp):
    scale = gamma.astype(jnp.float32) * lax.rsqrt(var.astype(jnp.float32) + eps)
    bias = beta.astype(jnp.float32) - mean.astype(jnp.float32) * scale
    pad = cp - scale.shape[0]
    return jnp.pad(scale, (0, pad))[None, :], jnp.pad(bias, (0, pad))[None, :]


def _prep_weight(w, cp):
    # OIHW -> HWIO, zero-pad channels to cp, flatten taps so rows = (dy, dx, cin).
    cout, cin = w.shape[0], w.shape[1]
    w = jnp.transpose(w, (2, 3, 1, 0))
    w = jnp.pad(w, ((0, 0), (0, 0), (0, cp - cin), (0, cp - cout)))
    return w.reshape(9 * cp, cp).astype(_COMPUTE_DTYPE)


def basic_block_forward(x, w1, bn1, w2, bn2, *, eps=1e-5):
    """Pallas TPU forward of BasicBlock (stride=1, downsample=None, eval-mode BN).

    x  : (N, C, H, W)  NCHW as in PyTorch.
    w1 : (Cmid, Cin, 3, 3), w2 : (Cout, Cmid, 3, 3)   OIHW, bias-free conv3x3.
    bn1/bn2 : (gamma, beta, running_mean, running_var).
    """
    N, Cin, H, W = x.shape
    Cmid, Cout = w1.shape[0], w2.shape[0]
    assert w1.shape == (Cmid, Cin, 3, 3) and w2.shape == (Cout, Cmid, 3, 3)
    assert Cout == Cin, "stride=1 / downsample=None requires planes == inplanes"

    cp = _round_up(max(Cin, Cmid, Cout), _LANES)   # lane-dense channel padding
    rb = _pick_row_block(H, W, cp)

    # NCHW -> NHWC (channels on lanes), zero-pad channels to cp.  No spatial
    # pad here: the 1-pixel conv border is built in VMEM inside the kernel.
    x_nhwc = jnp.transpose(x, (0, 2, 3, 1))
    if cp != Cin:
        x_nhwc = jnp.pad(x_nhwc, ((0, 0), (0, 0), (0, 0), (0, cp - Cin)))

    w1p = _prep_weight(w1, cp)
    w2p = _prep_weight(w2, cp)
    s1, b1 = _fold_bn(*bn1, eps, cp)
    s2, b2 = _fold_bn(*bn2, eps, cp)

    # VMEM budget: double-buffered in/out image blocks + weights + scratch.
    img_bytes = H * W * cp * x.dtype.itemsize
    est = (4 * img_bytes + 4 * (9 * cp * cp * 2)
           + 2 * (H + 2) * (W + 2) * cp * 2 + 8 * cp * 4)
    vmem_limit = int(min(max(2 * est, 32 << 20), 64 << 20))

    kernel = functools.partial(_basic_block_kernel, rb=rb)
    out_nhwc = pl.pallas_call(
        kernel,
        out_shape=jax.ShapeDtypeStruct((N, H, W, cp), x.dtype),
        grid_spec=pltpu.PrefetchScalarGridSpec(
            num_scalar_prefetch=0,
            grid=(N,),
            in_specs=[
                pl.BlockSpec((1, H, W, cp), lambda n: (n, 0, 0, 0)),
                pl.BlockSpec((9 * cp, cp), lambda n: (0, 0)),
                pl.BlockSpec((1, cp), lambda n: (0, 0)),
                pl.BlockSpec((1, cp), lambda n: (0, 0)),
                pl.BlockSpec((9 * cp, cp), lambda n: (0, 0)),
                pl.BlockSpec((1, cp), lambda n: (0, 0)),
                pl.BlockSpec((1, cp), lambda n: (0, 0)),
            ],
            out_specs=pl.BlockSpec((1, H, W, cp), lambda n: (n, 0, 0, 0)),
            scratch_shapes=[
                pltpu.VMEM((H + 2, W + 2, cp), _COMPUTE_DTYPE),
                pltpu.VMEM((H + 2, W + 2, cp), _COMPUTE_DTYPE),
            ],
        ),
        compiler_params=pltpu.CompilerParams(
            dimension_semantics=("parallel",),
            vmem_limit_bytes=vmem_limit,
        ),
    )(x_nhwc, w1p, s1, b1, w2p, s2, b2)

    return jnp.transpose(out_nhwc[..., :Cout], (0, 3, 1, 2))   # NHWC -> NCHW


def _reference_basic_block(x, w1, bn1, w2, bn2, *, eps=1e-5):
    def conv(y, w):
        return lax.conv_general_dilated(
            y, w, window_strides=(1, 1), padding=((1, 1), (1, 1)),
            dimension_numbers=("NCHW", "OIHW", "NCHW"),
            precision=lax.Precision.HIGHEST)

    def bn(y, p):
        gamma, beta, mean, var = p
        s = gamma / jnp.sqrt(var + eps)
        b = beta - mean * s
        return y * s[None, :, None, None] + b[None, :, None, None]

    out = jax.nn.relu(bn(conv(x, w1), bn1))
    out = bn(conv(out, w2), bn2)
    return jax.nn.relu(out + x)


if __name__ == "__main__":
    key = jax.random.PRNGKey(0)
    ks = jax.random.split(key, 11)

    N, C, H, W = 2, 16, 16, 16   # small example: batch=2, channels=16, spatial=16x16
    x = jax.random.normal(ks[0], (N, C, H, W), dtype=jnp.float32)
    w1 = 0.1 * jax.random.normal(ks[1], (C, C, 3, 3), dtype=jnp.float32)
    w2 = 0.1 * jax.random.normal(ks[2], (C, C, 3, 3), dtype=jnp.float32)
    bn1 = (1.0 + 0.1 * jax.random.normal(ks[3], (C,), dtype=jnp.float32),
           0.1 * jax.random.normal(ks[4], (C,), dtype=jnp.float32),
           0.1 * jax.random.normal(ks[5], (C,), dtype=jnp.float32),
           0.5 + jax.random.uniform(ks[6], (C,), dtype=jnp.float32))
    bn2 = (1.0 + 0.1 * jax.random.normal(ks[7], (C,), dtype=jnp.float32),
           0.1 * jax.random.normal(ks[8], (C,), dtype=jnp.float32),
           0.1 * jax.random.normal(ks[9], (C,), dtype=jnp.float32),
           0.5 + jax.random.uniform(ks[10], (C,), dtype=jnp.float32))

    out = jax.block_until_ready(basic_block_forward(x, w1, bn1, w2, bn2))

    ref = _reference_basic_block(x, w1, bn1, w2, bn2)
    assert out.shape == ref.shape, (out.shape, ref.shape)
    err = float(jnp.max(jnp.abs(out - ref)))
    # bf16 single-pass MXU inputs -> loosened tolerance vs the f32 reference.
    assert jnp.allclose(out, ref, rtol=5e-2, atol=5e-2), err
    print("KERNEL_OK")
</pallas_src>

<mosaic_0001>
module attributes {stable_mosaic.version = 11 : i64} {
  func.func @_basic_block_kernel(%arg0: i32, %arg1: memref<1x16x16x128xf32, #tpu.memory_space<vmem>>, %arg2: memref<1152x128xbf16, #tpu.memory_space<vmem>>, %arg3: memref<1x128xf32, #tpu.memory_space<vmem>>, %arg4: memref<1x128xf32, #tpu.memory_space<vmem>>, %arg5: memref<1152x128xbf16, #tpu.memory_space<vmem>>, %arg6: memref<1x128xf32, #tpu.memory_space<vmem>>, %arg7: memref<1x128xf32, #tpu.memory_space<vmem>>, %arg8: memref<1x16x16x128xf32, #tpu.memory_space<vmem>>, %arg9: memref<18x18x128xbf16, #tpu.memory_space<vmem>>, %arg10: memref<18x18x128xbf16, #tpu.memory_space<vmem>>) attributes {dimension_semantics = [#tpu.dimension_semantics<parallel>], iteration_bounds = array<i64: 2>, scalar_prefetch = 0 : i64, scratch_operands = 2 : i64, tpu.core_type = #tpu.core_type<tc>, window_params = [{transform_indices = @transform_0, window_bounds = array<i64: 1, 16, 16, 128>}, {pipeline_mode = #tpu.pipeline_mode<synchronous>, transform_indices = @transform_1, window_bounds = array<i64: 1152, 128>}, {pipeline_mode = #tpu.pipeline_mode<synchronous>, transform_indices = @transform_2, window_bounds = array<i64: 1, 128>}, {pipeline_mode = #tpu.pipeline_mode<synchronous>, transform_indices = @transform_3, window_bounds = array<i64: 1, 128>}, {pipeline_mode = #tpu.pipeline_mode<synchronous>, transform_indices = @transform_4, window_bounds = array<i64: 1152, 128>}, {pipeline_mode = #tpu.pipeline_mode<synchronous>, transform_indices = @transform_5, window_bounds = array<i64: 1, 128>}, {pipeline_mode = #tpu.pipeline_mode<synchronous>, transform_indices = @transform_6, window_bounds = array<i64: 1, 128>}, {transform_indices = @transform_7, window_bounds = array<i64: 1, 16, 16, 128>}]} {
    %cst = arith.constant 0.000000e+00 : bf16
    %0 = vector.broadcast %cst : bf16 to vector<18x128xbf16>
    %c0 = arith.constant 0 : index
    %c0_0 = arith.constant 0 : index
    %c0_1 = arith.constant 0 : index
    %1 = vector.load %arg9[%c0, %c0_0, %c0_1] : memref<18x18x128xbf16, #tpu.memory_space<vmem>>, vector<1x18x128xbf16>
    %2 = vector.shape_cast %1 : vector<1x18x128xbf16> to vector<18x128xbf16>
    %3 = vector.shape_cast %0 : vector<18x128xbf16> to vector<1x18x128xbf16>
    tpu.vector_store %arg9[%c0, %c0_0, %c0_1], %3 {strides = array<i32>} : memref<18x18x128xbf16, #tpu.memory_space<vmem>>, vector<1x18x128xbf16>,
    %c17 = arith.constant 17 : index
    %c0_2 = arith.constant 0 : index
    %c0_3 = arith.constant 0 : index
    %4 = vector.load %arg9[%c17, %c0_2, %c0_3] : memref<18x18x128xbf16, #tpu.memory_space<vmem>>, vector<1x18x128xbf16>
    %5 = vector.shape_cast %4 : vector<1x18x128xbf16> to vector<18x128xbf16>
    %6 = vector.shape_cast %0 : vector<18x128xbf16> to vector<1x18x128xbf16>
    tpu.vector_store %arg9[%c17, %c0_2, %c0_3], %6 {strides = array<i32>} : memref<18x18x128xbf16, #tpu.memory_space<vmem>>, vector<1x18x128xbf16>,
    %c0_4 = arith.constant 0 : index
    %c0_5 = arith.constant 0 : index
    %c0_6 = arith.constant 0 : index
    %7 = vector.load %arg10[%c0_4, %c0_5, %c0_6] : memref<18x18x128xbf16, #tpu.memory_space<vmem>>, vector<1x18x128xbf16>
    %8 = vector.shape_cast %7 : vector<1x18x128xbf16> to vector<18x128xbf16>
    %9 = vector.shape_cast %0 : vector<18x128xbf16> to vector<1x18x128xbf16>
    tpu.vector_store %arg10[%c0_4, %c0_5, %c0_6], %9 {strides = array<i32>} : memref<18x18x128xbf16, #tpu.memory_space<vmem>>, vector<1x18x128xbf16>,
    %c17_7 = arith.constant 17 : index
    %c0_8 = arith.constant 0 : index
    %c0_9 = arith.constant 0 : index
    %10 = vector.load %arg10[%c17_7, %c0_8, %c0_9] : memref<18x18x128xbf16, #tpu.memory_space<vmem>>, vector<1x18x128xbf16>
    %11 = vector.shape_cast %10 : vector<1x18x128xbf16> to vector<18x128xbf16>
    %12 = vector.shape_cast %0 : vector<18x128xbf16> to vector<1x18x128xbf16>
    tpu.vector_store %arg10[%c17_7, %c0_8, %c0_9], %12 {strides = array<i32>} : memref<18x18x128xbf16, #tpu.memory_space<vmem>>, vector<1x18x128xbf16>,
    %cst_10 = arith.constant 0.000000e+00 : bf16
    %13 = vector.broadcast %cst_10 : bf16 to vector<16x1x128xbf16>
    %c0_11 = arith.constant 0 : index
    %c0_12 = arith.constant 0 : index
    %c0_13 = arith.constant 0 : index
    %c0_14 = arith.constant 0 : index
    %14 = vector.load %arg1[%c0_11, %c0_12, %c0_13, %c0_14] : memref<1x16x16x128xf32, #tpu.memory_space<vmem>>, vector<1x16x16x128xf32>
    %15 = vector.shape_cast %14 : vector<1x16x16x128xf32> to vector<16x16x128xf32>
    %16 = arith.truncf %15 : vector<16x16x128xf32> to vector<16x16x128xbf16>
    %17 = tpu.concatenate %13, %16, %13 in 1 : vector<16x1x128xbf16>, vector<16x16x128xbf16>, vector<16x1x128xbf16> -> vector<16x18x128xbf16>
    %c1 = arith.constant 1 : index
    %c0_15 = arith.constant 0 : index
    %c0_16 = arith.constant 0 : index
    %18 = vector.load %arg9[%c1, %c0_15, %c0_16] : memref<18x18x128xbf16, #tpu.memory_space<vmem>>, vector<16x18x128xbf16>
    tpu.vector_store %arg9[%c1, %c0_15, %c0_16], %17 {strides = array<i32>} : memref<18x18x128xbf16, #tpu.memory_space<vmem>>, vector<16x18x128xbf16>,
    %cst_17 = arith.constant 0.000000e+00 : bf16
    %19 = vector.broadcast %cst_17 : bf16 to vector<16x1x128xbf16>
    %c0_i32 = arith.constant 0 : i32
    %c16_i32 = arith.constant 16 : i32
    %20 = arith.muli %c0_i32, %c16_i32 : i32
    %21 = tpu.assume_multiple %20, 16 : i32
    %22 = arith.index_cast %21 : i32 to index
    %c0_18 = arith.constant 0 : index
    %c0_19 = arith.constant 0 : index
    %23 = vector.load %arg9[%22, %c0_18, %c0_19] : memref<18x18x128xbf16, #tpu.memory_space<vmem>>, vector<18x18x128xbf16>
    %24 = vector.extract_strided_slice %23 {offsets = [0, 0, 0], sizes = [16, 16, 128], strides = [1, 1, 1]} : vector<18x18x128xbf16> to vector<16x16x128xbf16>
    %25 = vector.shape_cast %24 : vector<16x16x128xbf16> to vector<256x128xbf16>
    %26 = vector.extract_strided_slice %23 {offsets = [0, 1, 0], sizes = [16, 16, 128], strides = [1, 1, 1]} : vector<18x18x128xbf16> to vector<16x16x128xbf16>
    %27 = vector.shape_cast %26 : vector<16x16x128xbf16> to vector<256x128xbf16>
    %28 = vector.extract_strided_slice %23 {offsets = [0, 2, 0], sizes = [16, 16, 128], strides = [1, 1, 1]} : vector<18x18x128xbf16> to vector<16x16x128xbf16>
    %29 = vector.shape_cast %28 : vector<16x16x128xbf16> to vector<256x128xbf16>
    %30 = vector.extract_strided_slice %23 {offsets = [1, 0, 0], sizes = [16, 16, 128], strides = [1, 1, 1]} : vector<18x18x128xbf16> to vector<16x16x128xbf16>
    %31 = vector.shape_cast %30 : vector<16x16x128xbf16> to vector<256x128xbf16>
    %32 = vector.extract_strided_slice %23 {offsets = [1, 1, 0], sizes = [16, 16, 128], strides = [1, 1, 1]} : vector<18x18x128xbf16> to vector<16x16x128xbf16>
    %33 = vector.shape_cast %32 : vector<16x16x128xbf16> to vector<256x128xbf16>
    %34 = vector.extract_strided_slice %23 {offsets = [1, 2, 0], sizes = [16, 16, 128], strides = [1, 1, 1]} : vector<18x18x128xbf16> to vector<16x16x128xbf16>
    %35 = vector.shape_cast %34 : vector<16x16x128xbf16> to vector<256x128xbf16>
    %36 = vector.extract_strided_slice %23 {offsets = [2, 0, 0], sizes = [16, 16, 128], strides = [1, 1, 1]} : vector<18x18x128xbf16> to vector<16x16x128xbf16>
    %37 = vector.shape_cast %36 : vector<16x16x128xbf16> to vector<256x128xbf16>
    %38 = vector.extract_strided_slice %23 {offsets = [2, 1, 0], sizes = [16, 16, 128], strides = [1, 1, 1]} : vector<18x18x128xbf16> to vector<16x16x128xbf16>
    %39 = vector.shape_cast %38 : vector<16x16x128xbf16> to vector<256x128xbf16>
    %40 = vector.extract_strided_slice %23 {offsets = [2, 2, 0], sizes = [16, 16, 128], strides = [1, 1, 1]} : vector<18x18x128xbf16> to vector<16x16x128xbf16>
    %41 = vector.shape_cast %40 : vector<16x16x128xbf16> to vector<256x128xbf16>
    %42 = tpu.concatenate %25, %27, %29, %31, %33, %35, %37, %39, %41 in 1 : vector<256x128xbf16>, vector<256x128xbf16>, vector<256x128xbf16>, vector<256x128xbf16>, vector<256x128xbf16>, vector<256x128xbf16>, vector<256x128xbf16>, vector<256x128xbf16>, vector<256x128xbf16> -> vector<256x1152xbf16>
    %c0_20 = arith.constant 0 : index
    %c0_21 = arith.constant 0 : index
    %43 = vector.load %arg2[%c0_20, %c0_21] : memref<1152x128xbf16, #tpu.memory_space<vmem>>, vector<1152x128xbf16>
    %cst_22 = arith.constant dense<0.000000e+00> : vector<256x128xf32>
    %44 = tpu.matmul %42, %43, %cst_22 {dimension_numbers = #tpu.dot_dimension_numbers<[1], [0], [0], [1], [0, 0, 1, 1], [], []>} : vector<256x1152xbf16>, vector<1152x128xbf16>, vector<256x128xf32> -> vector<256x128xf32>
    %c0_23 = arith.constant 0 : index
    %c0_24 = arith.constant 0 : index
    %45 = vector.load %arg3[%c0_23, %c0_24] : memref<1x128xf32, #tpu.memory_space<vmem>>, vector<1x128xf32>
    %46 = vector.broadcast %45 : vector<1x128xf32> to vector<256x128xf32>
    %47 = arith.mulf %44, %46 : vector<256x128xf32>
    %c0_25 = arith.constant 0 : index
    %c0_26 = arith.constant 0 : index
    %48 = vector.load %arg4[%c0_25, %c0_26] : memref<1x128xf32, #tpu.memory_space<vmem>>, vector<1x128xf32>
    %49 = vector.broadcast %48 : vector<1x128xf32> to vector<256x128xf32>
    %50 = arith.addf %47, %49 : vector<256x128xf32>
    %cst_27 = arith.constant 0.000000e+00 : f32
    %51 = vector.broadcast %cst_27 : f32 to vector<256x128xf32>
    %52 = arith.maximumf %50, %51 : vector<256x128xf32>
    %53 = arith.truncf %52 : vector<256x128xf32> to vector<256x128xbf16>
    %54 = vector.shape_cast %53 : vector<256x128xbf16> to vector<16x16x128xbf16>
    %55 = tpu.concatenate %19, %54, %19 in 1 : vector<16x1x128xbf16>, vector<16x16x128xbf16>, vector<16x1x128xbf16> -> vector<16x18x128xbf16>
    %c1_i32 = arith.constant 1 : i32
    %56 = arith.addi %21, %c1_i32 : i32
    %57 = arith.index_cast %56 : i32 to index
    %c0_28 = arith.constant 0 : index
    %c0_29 = arith.constant 0 : index
    %58 = vector.load %arg10[%57, %c0_28, %c0_29] : memref<18x18x128xbf16, #tpu.memory_space<vmem>>, vector<16x18x128xbf16>
    tpu.vector_store %arg10[%57, %c0_28, %c0_29], %55 {strides = array<i32>} : memref<18x18x128xbf16, #tpu.memory_space<vmem>>, vector<16x18x128xbf16>,
    %c1_i32_30 = arith.constant 1 : i32
    %c0_i32_31 = arith.constant 0 : i32
    %c16_i32_32 = arith.constant 16 : i32
    %59 = arith.muli %c0_i32_31, %c16_i32_32 : i32
    %60 = tpu.assume_multiple %59, 16 : i32
    %61 = arith.index_cast %60 : i32 to index
    %c0_33 = arith.constant 0 : index
    %c0_34 = arith.constant 0 : index
    %62 = vector.load %arg10[%61, %c0_33, %c0_34] : memref<18x18x128xbf16, #tpu.memory_space<vmem>>, vector<18x18x128xbf16>
    %63 = vector.extract_strided_slice %62 {offsets = [0, 0, 0], sizes = [16, 16, 128], strides = [1, 1, 1]} : vector<18x18x128xbf16> to vector<16x16x128xbf16>
    %64 = vector.shape_cast %63 : vector<16x16x128xbf16> to vector<256x128xbf16>
    %65 = vector.extract_strided_slice %62 {offsets = [0, 1, 0], sizes = [16, 16, 128], strides = [1, 1, 1]} : vector<18x18x128xbf16> to vector<16x16x128xbf16>
    %66 = vector.shape_cast %65 : vector<16x16x128xbf16> to vector<256x128xbf16>
    %67 = vector.extract_strided_slice %62 {offsets = [0, 2, 0], sizes = [16, 16, 128], strides = [1, 1, 1]} : vector<18x18x128xbf16> to vector<16x16x128xbf16>
    %68 = vector.shape_cast %67 : vector<16x16x128xbf16> to vector<256x128xbf16>
    %69 = vector.extract_strided_slice %62 {offsets = [1, 0, 0], sizes = [16, 16, 128], strides = [1, 1, 1]} : vector<18x18x128xbf16> to vector<16x16x128xbf16>
    %70 = vector.shape_cast %69 : vector<16x16x128xbf16> to vector<256x128xbf16>
    %71 = vector.extract_strided_slice %62 {offsets = [1, 1, 0], sizes = [16, 16, 128], strides = [1, 1, 1]} : vector<18x18x128xbf16> to vector<16x16x128xbf16>
    %72 = vector.shape_cast %71 : vector<16x16x128xbf16> to vector<256x128xbf16>
    %73 = vector.extract_strided_slice %62 {offsets = [1, 2, 0], sizes = [16, 16, 128], strides = [1, 1, 1]} : vector<18x18x128xbf16> to vector<16x16x128xbf16>
    %74 = vector.shape_cast %73 : vector<16x16x128xbf16> to vector<256x128xbf16>
    %75 = vector.extract_strided_slice %62 {offsets = [2, 0, 0], sizes = [16, 16, 128], strides = [1, 1, 1]} : vector<18x18x128xbf16> to vector<16x16x128xbf16>
    %76 = vector.shape_cast %75 : vector<16x16x128xbf16> to vector<256x128xbf16>
    %77 = vector.extract_strided_slice %62 {offsets = [2, 1, 0], sizes = [16, 16, 128], strides = [1, 1, 1]} : vector<18x18x128xbf16> to vector<16x16x128xbf16>
    %78 = vector.shape_cast %77 : vector<16x16x128xbf16> to vector<256x128xbf16>
    %79 = vector.extract_strided_slice %62 {offsets = [2, 2, 0], sizes = [16, 16, 128], strides = [1, 1, 1]} : vector<18x18x128xbf16> to vector<16x16x128xbf16>
    %80 = vector.shape_cast %79 : vector<16x16x128xbf16> to vector<256x128xbf16>
    %81 = tpu.concatenate %64, %66, %68, %70, %72, %74, %76, %78, %80 in 1 : vector<256x128xbf16>, vector<256x128xbf16>, vector<256x128xbf16>, vector<256x128xbf16>, vector<256x128xbf16>, vector<256x128xbf16>, vector<256x128xbf16>, vector<256x128xbf16>, vector<256x128xbf16> -> vector<256x1152xbf16>
    %c0_35 = arith.constant 0 : index
    %c0_36 = arith.constant 0 : index
    %82 = vector.load %arg5[%c0_35, %c0_36] : memref<1152x128xbf16, #tpu.memory_space<vmem>>, vector<1152x128xbf16>
    %cst_37 = arith.constant dense<0.000000e+00> : vector<256x128xf32>
    %83 = tpu.matmul %81, %82, %cst_37 {dimension_numbers = #tpu.dot_dimension_numbers<[1], [0], [0], [1], [0, 0, 1, 1], [], []>} : vector<256x1152xbf16>, vector<1152x128xbf16>, vector<256x128xf32> -> vector<256x128xf32>
    %c0_38 = arith.constant 0 : index
    %84 = arith.index_cast %60 : i32 to index
    %c0_39 = arith.constant 0 : index
    %c0_40 = arith.constant 0 : index
    %85 = vector.load %arg1[%c0_38, %84, %c0_39, %c0_40] : memref<1x16x16x128xf32, #tpu.memory_space<vmem>>, vector<1x16x16x128xf32>
    %86 = vector.shape_cast %85 : vector<1x16x16x128xf32> to vector<16x16x128xf32>
    %87 = vector.shape_cast %86 : vector<16x16x128xf32> to vector<256x128xf32>
    %c0_41 = arith.constant 0 : index
    %c0_42 = arith.constant 0 : index
    %88 = vector.load %arg6[%c0_41, %c0_42] : memref<1x128xf32, #tpu.memory_space<vmem>>, vector<1x128xf32>
    %89 = vector.broadcast %88 : vector<1x128xf32> to vector<256x128xf32>
    %90 = arith.mulf %83, %89 : vector<256x128xf32>
    %c0_43 = arith.constant 0 : index
    %c0_44 = arith.constant 0 : index
    %91 = vector.load %arg7[%c0_43, %c0_44] : memref<1x128xf32, #tpu.memory_space<vmem>>, vector<1x128xf32>
    %92 = vector.broadcast %91 : vector<1x128xf32> to vector<256x128xf32>
    %93 = arith.addf %90, %92 : vector<256x128xf32>
    %94 = arith.addf %93, %87 : vector<256x128xf32>
    %cst_45 = arith.constant 0.000000e+00 : f32
    %95 = vector.broadcast %cst_45 : f32 to vector<256x128xf32>
    %96 = arith.maximumf %94, %95 : vector<256x128xf32>
    %97 = vector.shape_cast %96 : vector<256x128xf32> to vector<16x16x128xf32>
    %c0_46 = arith.constant 0 : index
    %98 = arith.index_cast %60 : i32 to index
    %c0_47 = arith.constant 0 : index
    %c0_48 = arith.constant 0 : index
    %99 = vector.load %arg8[%c0_46, %98, %c0_47, %c0_48] : memref<1x16x16x128xf32, #tpu.memory_space<vmem>>, vector<1x16x16x128xf32>
    %100 = vector.shape_cast %99 : vector<1x16x16x128xf32> to vector<16x16x128xf32>
    %101 = vector.shape_cast %97 : vector<16x16x128xf32> to vector<1x16x16x128xf32>
    tpu.vector_store %arg8[%c0_46, %98, %c0_47, %c0_48], %101 {strides = array<i32>} : memref<1x16x16x128xf32, #tpu.memory_space<vmem>>, vector<1x16x16x128xf32>,
    %c1_i32_49 = arith.constant 1 : i32
    return
  }
  func.func @transform_0(%arg0: i32) -> (i32, i32, i32, i32) {
    %c0_i32 = arith.constant 0 : i32
    %c0_i32_0 = arith.constant 0 : i32
    %c0_i32_1 = arith.constant 0 : i32
    %c0_i32_2 = arith.constant 0 : i32
    return %arg0, %c0_i32, %c0_i32_0, %c0_i32_1 : i32, i32, i32, i32
  }
  func.func @transform_1(%arg0: i32) -> (i32, i32) {
    %c0_i32 = arith.constant 0 : i32
    %c0_i32_0 = arith.constant 0 : i32
    %c0_i32_1 = arith.constant 0 : i32
    return %c0_i32, %c0_i32_0 : i32, i32
  }
  func.func @transform_2(%arg0: i32) -> (i32, i32) {
    %c0_i32 = arith.constant 0 : i32
    %c0_i32_0 = arith.constant 0 : i32
    %c0_i32_1 = arith.constant 0 : i32
    return %c0_i32, %c0_i32_0 : i32, i32
  }
  func.func @transform_3(%arg0: i32) -> (i32, i32) {
    %c0_i32 = arith.constant 0 : i32
    %c0_i32_0 = arith.constant 0 : i32
    %c0_i32_1 = arith.constant 0 : i32
    return %c0_i32, %c0_i32_0 : i32, i32
  }
  func.func @transform_4(%arg0: i32) -> (i32, i32) {
    %c0_i32 = arith.constant 0 : i32
    %c0_i32_0 = arith.constant 0 : i32
    %c0_i32_1 = arith.constant 0 : i32
    return %c0_i32, %c0_i32_0 : i32, i32
  }
  func.func @transform_5(%arg0: i32) -> (i32, i32) {
    %c0_i32 = arith.constant 0 : i32
    %c0_i32_0 = arith.constant 0 : i32
    %c0_i32_1 = arith.constant 0 : i32
    return %c0_i32, %c0_i32_0 : i32, i32
  }
  func.func @transform_6(%arg0: i32) -> (i32, i32) {
    %c0_i32 = arith.constant 0 : i32
    %c0_i32_0 = arith.constant 0 : i32
    %c0_i32_1 = arith.constant 0 : i32
    return %c0_i32, %c0_i32_0 : i32, i32
  }
  func.func @transform_7(%arg0: i32) -> (i32, i32, i32, i32) {
    %c0_i32 = arith.constant 0 : i32
    %c0_i32_0 = arith.constant 0 : i32
    %c0_i32_1 = arith.constant 0 : i32
    %c0_i32_2 = arith.constant 0 : i32
    return %arg0, %c0_i32, %c0_i32_0, %c0_i32_1 : i32, i32, i32, i32
  }
}

</mosaic_0001>

<llo_original>
// kernel: tpu_custom_call.1
$region0: #{tpu_custom_call.1}
  #allocation0 [shape = 'u32[]', space=smem, size = 0x4, offset = 0x4, fixed_abs, tag = 'smem constant byte address 0x4 - core index']
  #allocation1 [shape = 'u32[144,128]{1,0:T(1,128)}', space=vmem, size = 0x12000, scoped, tag = 'internal scratch']
  #allocation2 [shape = 'bf16[18,18,128]{2,1,0:T(8,128)(2,1)}', space=vmem, size = 0x1b000, scoped, tag = 'scratch operand']
  #allocation3 [shape = 'bf16[18,18,128]{2,1,0:T(8,128)(2,1)}', space=vmem, size = 0x1b000, scoped, tag = 'scratch operand']
  %s0 = inlined_call_operand.hbm [shape: f32[2,16,16,128], index: 0, kind: input, shape index: {}]
  %s1 = inlined_call_operand.hbm [shape: bf16[1152,128], index: 1, kind: input, shape index: {}]
  %s2 = inlined_call_operand.vmem [shape: f32[1,128], index: 2, kind: input, shape index: {}]
  %s3 = inlined_call_operand.vmem [shape: f32[1,128], index: 3, kind: input, shape index: {}]
  %s4 = inlined_call_operand.hbm [shape: bf16[1152,128], index: 4, kind: input, shape index: {}]
  %s5 = inlined_call_operand.vmem [shape: f32[1,128], index: 5, kind: input, shape index: {}]
  %s6 = inlined_call_operand.vmem [shape: f32[1,128], index: 6, kind: input, shape index: {}]
  %s7 = inlined_call_operand.hbm [shape: f32[2,16,16,128], index: 7, kind: output, shape index: {}]
  %s8 = sld [smem:[#allocation0]]
  $region73: #{tpu_custom_call.1} parent=0
    _
  %s10 = ssub.s32 1, %s8
  %s11 = scalar_select 0, %s10, %s8
  $region1: #{tpu_custom_call.1} parent=0
    #allocation4 [shape = 'u8[262144]{0}', space=vmem, size = 0x40000, scoped, tag = 'input window, operand 0']
    #allocation5 [shape = 's32[2]{0}', space=sflag, size = 0x8, scoped, tag = 'scoped memory for tpu_custom_call.1']
    #allocation6 [shape = 's32[2]{0}', space=sflag, size = 0x8, scoped, tag = 'scoped memory for tpu_custom_call.1']
    #allocation7 [shape = 'u8[294912]{0}', space=vmem, size = 0x48000, scoped, tag = 'input window, operand 1, single buffered']
    #allocation8 [shape = 's32[1]{0}', space=sflag, size = 0x4, scoped, tag = 'scoped memory for tpu_custom_call.1']
    #allocation9 [shape = 'u8[294912]{0}', space=vmem, size = 0x48000, scoped, tag = 'input window, operand 4, single buffered']
    #allocation10 [shape = 'u8[262144]{0}', space=vmem, size = 0x40000, scoped, tag = 'output window, operand 0']
    %12 = vsyncpa [#allocation5], 0
    %s13 = scalar_lea.sflag [#allocation5], 1
    %14 = vsyncpa %s13, 0
    %15 = vsyncpa [#allocation8], 0
    %16 = vsyncpa [#allocation6], 0
    %s17 = scalar_lea.sflag [#allocation6], 1
    %18 = vsyncpa %s17, 0
    loop: start=0, step=1, limit=4
    $region2: #{tpu_custom_call.1} parent=1 // loop_pre_header
      _
    $region3: #{tpu_custom_call.1} parent=1 // loop_header
      %s20 = sphi 0, %s24
      %p21 = scmp.ge.s32.totalorder %s20, 4
      %s30 = sphi 0, %s32
      %s33 = sphi 0, %s30
      %s34 = sphi 0, %s33
      %s50 = sphi 0, %s34
      %s54 = sphi 0, %s54
      %s56 = sphi 0, %s54
      %s57 = sphi 0, %s56
      %s71 = sphi 0, %s57
      %s75 = sphi 0, %s75
      %s77 = sphi 0, %s75
      %s78 = sphi 0, %s77
      %s92 = sphi 0, %s78
      %s96 = sphi 0, %s96
      %s98 = sphi 0, %s96
      %s99 = sphi 0, %s98
      %s113 = sphi 0, %s99
      %s117 = sphi 0, %s117
      %s119 = sphi 0, %s117
      %s120 = sphi 0, %s119
      %s134 = sphi 0, %s120
      %s138 = sphi 0, %s138
      %s140 = sphi 0, %s138
      %s141 = sphi 0, %s140
      %s155 = sphi 0, %s141
      %s159 = sphi 0, %s159
      %s161 = sphi 0, %s159
      %s162 = sphi 0, %s161
      %s176 = sphi 0, %s162
      %s182 = sphi 0, %s184
      %s185 = sphi 0, %s182
      %s186 = sphi 0, %s185
      %s202 = sphi 0, %s186
    $region4: #{tpu_custom_call.1} parent=1 // loop_header_branch
      %23 = sbr.rel (%p21) target = $region8
    $region5: #{tpu_custom_call.1} parent=1 // loop_body
      %s25 = ssub.s32 %s20, 1
      %s26 = ssub.s32 %s20, 2
      %s27 = sadd.s32 %s20, 1
      %s28 = ssub.s32 %s20, %s27
      %p29 = scmp.eq.s32.totalorder %s28, 0
      %s31 = sadd.s32 %s30, 1
      %s32 = scalar_select %p29, %s30, %s31
      %p35 = pneg %p29
      %p36 = scmp.eq.s32.totalorder %s20, 1
      %p37 = por %p35, %p36
      %p38 = scmp.ne.s32.totalorder %s30, %s33
      %p39 = scmp.eq.s32.totalorder %s20, 0
      %p40 = por %p38, %p39
      %p41 = scmp.ne.s32.totalorder %s30, %s33
      %p42 = scmp.eq.s32.totalorder %s25, 1
      %p43 = por %p41, %p42
      %p44 = scmp.ne.s32.totalorder %s33, %s34
      %p45 = scmp.eq.s32.totalorder %s25, 0
      %p46 = por %p44, %p45
      %p47 = scmp.ne.s32.totalorder %s33, %s34
      %p48 = scmp.eq.s32.totalorder %s26, 1
      %p49 = por %p47, %p48
      %p51 = scmp.ne.s32.totalorder %s34, %s50
      %p52 = scmp.eq.s32.totalorder %s26, 0
      %p53 = por %p51, %p52
      %s55 = sadd.s32 %s54, 1
      %p58 = scmp.eq.s32.totalorder %s20, 1
      %p59 = scmp.ne.s32.totalorder %s54, %s56
      %p60 = scmp.eq.s32.totalorder %s20, 0
      %p61 = por %p59, %p60
      %p62 = scmp.ne.s32.totalorder %s54, %s56
      %p63 = scmp.eq.s32.totalorder %s25, 1
      %p64 = por %p62, %p63
      %p65 = scmp.ne.s32.totalorder %s56, %s57
      %p66 = scmp.eq.s32.totalorder %s25, 0
      %p67 = por %p65, %p66
      %p68 = scmp.ne.s32.totalorder %s56, %s57
      %p69 = scmp.eq.s32.totalorder %s26, 1
      %p70 = por %p68, %p69
      %p72 = scmp.ne.s32.totalorder %s57, %s71
      %p73 = scmp.eq.s32.totalorder %s26, 0
      %p74 = por %p72, %p73
      %s76 = sadd.s32 %s75, 1
      %p79 = scmp.eq.s32.totalorder %s20, 1
      %p80 = scmp.ne.s32.totalorder %s75, %s77
      %p81 = scmp.eq.s32.totalorder %s20, 0
      %p82 = por %p80, %p81
      %p83 = scmp.ne.s32.totalorder %s75, %s77
      %p84 = scmp.eq.s32.totalorder %s25, 1
      %p85 = por %p83, %p84
      %p86 = scmp.ne.s32.totalorder %s77, %s78
      %p87 = scmp.eq.s32.totalorder %s25, 0
      %p88 = por %p86, %p87
      %p89 = scmp.ne.s32.totalorder %s77, %s78
      %p90 = scmp.eq.s32.totalorder %s26, 1
      %p91 = por %p89, %p90
      %p93 = scmp.ne.s32.totalorder %s78, %s92
      %p94 = scmp.eq.s32.totalorder %s26, 0
      %p95 = por %p93, %p94
      %s97 = sadd.s32 %s96, 1
      %p100 = scmp.eq.s32.totalorder %s20, 1
      %p101 = scmp.ne.s32.totalorder %s96, %s98
      %p102 = scmp.eq.s32.totalorder %s20, 0
      %p103 = por %p101, %p102
      %p104 = scmp.ne.s32.totalorder %s96, %s98
      %p105 = scmp.eq.s32.totalorder %s25, 1
      %p106 = por %p104, %p105
      %p107 = scmp.ne.s32.totalorder %s98, %s99
      %p108 = scmp.eq.s32.totalorder %s25, 0
      %p109 = por %p107, %p108
      %p110 = scmp.ne.s32.totalorder %s98, %s99
      %p111 = scmp.eq.s32.totalorder %s26, 1
      %p112 = por %p110, %p111
      %p114 = scmp.ne.s32.totalorder %s99, %s113
      %p115 = scmp.eq.s32.totalorder %s26, 0
      %p116 = por %p114, %p115
      %s118 = sadd.s32 %s117, 1
      %p121 = scmp.eq.s32.totalorder %s20, 1
      %p122 = scmp.ne.s32.totalorder %s117, %s119
      %p123 = scmp.eq.s32.totalorder %s20, 0
      %p124 = por %p122, %p123
      %p125 = scmp.ne.s32.totalorder %s117, %s119
      %p126 = scmp.eq.s32.totalorder %s25, 1
      %p127 = por %p125, %p126
      %p128 = scmp.ne.s32.totalorder %s119, %s120
      %p129 = scmp.eq.s32.totalorder %s25, 0
      %p130 = por %p128, %p129
      %p131 = scmp.ne.s32.totalorder %s119, %s120
      %p132 = scmp.eq.s32.totalorder %s26, 1
      %p133 = por %p131, %p132
      %p135 = scmp.ne.s32.totalorder %s120, %s134
      %p136 = scmp.eq.s32.totalorder %s26, 0
      %p137 = por %p135, %p136
      %s139 = sadd.s32 %s138, 1
      %p142 = scmp.eq.s32.totalorder %s20, 1
      %p143 = scmp.ne.s32.totalorder %s138, %s140
      %p144 = scmp.eq.s32.totalorder %s20, 0
      %p145 = por %p143, %p144
      %p146 = scmp.ne.s32.totalorder %s138, %s140
      %p147 = scmp.eq.s32.totalorder %s25, 1
      %p148 = por %p146, %p147
      %p149 = scmp.ne.s32.totalorder %s140, %s141
      %p150 = scmp.eq.s32.totalorder %s25, 0
      %p151 = por %p149, %p150
      %p152 = scmp.ne.s32.totalorder %s140, %s141
      %p153 = scmp.eq.s32.totalorder %s26, 1
      %p154 = por %p152, %p153
      %p156 = scmp.ne.s32.totalorder %s141, %s155
      %p157 = scmp.eq.s32.totalorder %s26, 0
      %p158 = por %p156, %p157
      %s160 = sadd.s32 %s159, 1
      %p163 = scmp.eq.s32.totalorder %s20, 1
      %p164 = scmp.ne.s32.totalorder %s159, %s161
      %p165 = scmp.eq.s32.totalorder %s20, 0
      %p166 = por %p164, %p165
      %p167 = scmp.ne.s32.totalorder %s159, %s161
      %p168 = scmp.eq.s32.totalorder %s25, 1
      %p169 = por %p167, %p168
      %p170 = scmp.ne.s32.totalorder %s161, %s162
      %p171 = scmp.eq.s32.totalorder %s25, 0
      %p172 = por %p170, %p171
      %p173 = scmp.ne.s32.totalorder %s161, %s162
      %p174 = scmp.eq.s32.totalorder %s26, 1
      %p175 = por %p173, %p174
      %p177 = scmp.ne.s32.totalorder %s162, %s176
      %p178 = scmp.eq.s32.totalorder %s26, 0
      %p179 = por %p177, %p178
      %s180 = ssub.s32 %s20, %s27
      %p181 = scmp.eq.s32.totalorder %s180, 0
      %s183 = sadd.s32 %s182, 1
      %s184 = scalar_select %p181, %s182, %s183
      %p187 = pneg %p181
      %p188 = scmp.eq.s32.totalorder %s20, 1
      %p189 = por %p187, %p188
      %p190 = scmp.ne.s32.totalorder %s182, %s185
      %p191 = scmp.eq.s32.totalorder %s20, 0
      %p192 = por %p190, %p191
      %p193 = scmp.ne.s32.totalorder %s182, %s185
      %p194 = scmp.eq.s32.totalorder %s25, 1
      %p195 = por %p193, %p194
      %p196 = scmp.ne.s32.totalorder %s185, %s186
      %p197 = scmp.eq.s32.totalorder %s25, 0
      %p198 = por %p196, %p197
      %p199 = scmp.ne.s32.totalorder %s185, %s186
      %p200 = scmp.eq.s32.totalorder %s26, 1
      %p201 = por %p199, %p200
      %p203 = scmp.ne.s32.totalorder %s186, %s202
      %p204 = scmp.eq.s32.totalorder %s26, 0
      %p205 = por %p203, %p204
      %p206 = scmp.le.s32.totalorder 1, %s20
      %p207 = scmp.lt.s32.totalorder %s20, 3
      %p208 = pnand %p206, %p207
      %p209 = pneg %p208
      // Predicated region
      $region9: #{tpu_custom_call.1} parent=5 // pred_check
        _
      $region10: #{tpu_custom_call.1} parent=5 // pred_check_branch
        %211 = sbr.rel (%p208) target = $region12
      $region11: #{tpu_custom_call.1} parent=5 // pred_region
        %s212 = ssub.s32 %s20, 1
        // Predicated region
        $region13: #{tpu_custom_call.1} parent=11 // pred_check
          %p213 = pneg %p67
        $region14: #{tpu_custom_call.1} parent=11 // pred_check_branch
          %215 = sbr.rel (%p213) target = $region16
        $region15: #{tpu_custom_call.1} parent=11 // pred_region
          %s217 = ssub.s32 9216, 9216
          %218 = vsyncadd [#allocation8], %s217
          %s219 = sshll.u32 [#allocation7], 4
          %s220 = int_to_ptr.vmem [resolvable:$true] %s219
          %225 = dma.hbm_to_vmem [thread:$0]  %s1, 9216, %s220, [#allocation8], 64, 64, 4
        $region16: #{tpu_custom_call.1} parent=11 // pred_fallthru
          _
        // Predicated region
        $region17: #{tpu_custom_call.1} parent=11 // pred_check
          %p226 = pneg %p88
        $region18: #{tpu_custom_call.1} parent=11 // pred_check_branch
          %228 = sbr.rel (%p226) target = $region20
        $region19: #{tpu_custom_call.1} parent=11 // pred_region
          _
        $region20: #{tpu_custom_call.1} parent=11 // pred_fallthru
          _
        // Predicated region
        $region21: #{tpu_custom_call.1} parent=11 // pred_check
          %p229 = pneg %p109
        $region22: #{tpu_custom_call.1} parent=11 // pred_check_branch
          %231 = sbr.rel (%p229) target = $region24
        $region23: #{tpu_custom_call.1} parent=11 // pred_region
          _
        $region24: #{tpu_custom_call.1} parent=11 // pred_fallthru
          _
        // Predicated region
        $region25: #{tpu_custom_call.1} parent=11 // pred_check
          %p232 = pneg %p130
        $region26: #{tpu_custom_call.1} parent=11 // pred_check_branch
          %234 = sbr.rel (%p232) target = $region28
        $region27: #{tpu_custom_call.1} parent=11 // pred_region
          %s236 = ssub.s32 9216, 9216
          %237 = vsyncadd [#allocation8], %s236
          %s238 = sshll.u32 [#allocation9], 4
          %s239 = int_to_ptr.vmem [resolvable:$true] %s238
          %244 = dma.hbm_to_vmem [thread:$0]  %s4, 9216, %s239, [#allocation8], 64, 64, 4
        $region28: #{tpu_custom_call.1} parent=11 // pred_fallthru
          _
        // Predicated region
        $region29: #{tpu_custom_call.1} parent=11 // pred_check
          %p245 = pneg %p151
        $region30: #{tpu_custom_call.1} parent=11 // pred_check_branch
          %247 = sbr.rel (%p245) target = $region32
        $region31: #{tpu_custom_call.1} parent=11 // pred_region
          _
        $region32: #{tpu_custom_call.1} parent=11 // pred_fallthru
          _
        // Predicated region
        $region33: #{tpu_custom_call.1} parent=11 // pred_check
          %p248 = pneg %p172
        $region34: #{tpu_custom_call.1} parent=11 // pred_check_branch
          %250 = sbr.rel (%p248) target = $region36
        $region35: #{tpu_custom_call.1} parent=11 // pred_region
          _
        $region36: #{tpu_custom_call.1} parent=11 // pred_fallthru
          _
      $region12: #{tpu_custom_call.1} parent=5 // pred_fallthru
        _
      %p251 = scmp.lt.s32.totalorder %s20, 2
      // Predicated region
      $region37: #{tpu_custom_call.1} parent=5 // pred_check
        %p252 = pneg %p251
      $region38: #{tpu_custom_call.1} parent=5 // pred_check_branch
        %254 = sbr.rel (%p252) target = $region40
      $region39: #{tpu_custom_call.1} parent=5 // pred_region
        // Predicated region
        $region41: #{tpu_custom_call.1} parent=39 // pred_check
          %p255 = pneg %p40
        $region42: #{tpu_custom_call.1} parent=39 // pred_check_branch
          %257 = sbr.rel (%p255) target = $region44
        $region43: #{tpu_custom_call.1} parent=39 // pred_region
          %s258 = sand.u32 %s30, 1
          %s259 = scalar_lea.sflag [#allocation5], %s258
          %s260 = sand.u32 %s30, 1
          %s261 = smul.addr %s260, 256
          %s262 = scalar_lea.vmem [#allocation4], %s261
          %s264 = ssub.s32 4096, 4096
          %265 = vsyncadd %s259, %s264
          %s266 = smul.addr %s20, 32
          %s267 = smul.addr %s266, 128
          %s268 = scalar_lea.hbm %s0, %s267
          %s269 = sshll.u32 %s262, 4
          %s270 = int_to_ptr.vmem [resolvable:$true] %s269
          %275 = dma.hbm_to_vmem [thread:$0]  %s268, 4096, %s270, %s259, 128, 128, 8
        $region44: #{tpu_custom_call.1} parent=39 // pred_fallthru
          _
      $region40: #{tpu_custom_call.1} parent=5 // pred_fallthru
        _
      %p276 = scmp.le.s32.totalorder 1, %s20
      %p277 = scmp.lt.s32.totalorder %s20, 3
      %p278 = pnand %p276, %p277
      %p279 = pneg %p278
      // Predicated region
      $region45: #{tpu_custom_call.1} parent=5 // pred_check
        _
      $region46: #{tpu_custom_call.1} parent=5 // pred_check_branch
        %281 = sbr.rel (%p278) target = $region48
      $region47: #{tpu_custom_call.1} parent=5 // pred_region
        %s282 = ssub.s32 %s20, 1
        %s283 = sand.u32 %s33, 1
        %s284 = scalar_lea.sflag [#allocation5], %s283
        %s285 = sand.u32 %s33, 1
        %s286 = smul.addr %s285, 256
        %s287 = scalar_lea.vmem [#allocation4], %s286
        // Predicated region
        $region49: #{tpu_custom_call.1} parent=47 // pred_check
          %p288 = pneg %p46
        $region50: #{tpu_custom_call.1} parent=47 // pred_check_branch
          %290 = sbr.rel (%p288) target = $region52
        $region51: #{tpu_custom_call.1} parent=47 // pred_region
          %291 = dma.done %s284, 4096
        $region52: #{tpu_custom_call.1} parent=47 // pred_fallthru
          _
        // Predicated region
        $region53: #{tpu_custom_call.1} parent=47 // pred_check
          %p292 = pneg %p67
        $region54: #{tpu_custom_call.1} parent=47 // pred_check_branch
          %294 = sbr.rel (%p292) target = $region56
        $region55: #{tpu_custom_call.1} parent=47 // pred_region
          %295 = dma.done [#allocation8], 9216
        $region56: #{tpu_custom_call.1} parent=47 // pred_fallthru
          _
        // Predicated region
        $region57: #{tpu_custom_call.1} parent=47 // pred_check
          %p296 = pneg %p130
        $region58: #{tpu_custom_call.1} parent=47 // pred_check_branch
          %298 = sbr.rel (%p296) target = $region60
        $region59: #{tpu_custom_call.1} parent=47 // pred_region
          %299 = dma.done [#allocation8], 9216
        $region60: #{tpu_custom_call.1} parent=47 // pred_fallthru
          _
        %s300 = sand.u32 %s33, 1
        %s301 = scalar_lea.sflag [#allocation5], %s300
        %s302 = sand.u32 %s33, 1
        %s303 = smul.addr %s302, 256
        %s304 = scalar_lea.vmem [#allocation4], %s303
        %p305 = pneg %p46
        %p306 = pneg %p43
        %p307 = pneg %p67
        %p308 = pneg %p64
        %p309 = pneg %p88
        %p310 = pneg %p85
        %p311 = pneg %p109
        %p312 = pneg %p106
        %p313 = pneg %p130
        %p314 = pneg %p127
        %p315 = pneg %p151
        %p316 = pneg %p148
        %p317 = pneg %p172
        %p318 = pneg %p169
        %p319 = pneg %p198
        %p320 = pneg %p195
        %s321 = sand.u32 %s185, 1
        %s322 = scalar_lea.sflag [#allocation6], %s321
        %s323 = sand.u32 %s185, 1
        %s324 = smul.addr %s323, 256
        %s325 = scalar_lea.vmem [#allocation10], %s324
        %327 = vst [vmem:[#allocation2] sm:$0xf] 0
        %328 = vst [vmem:[#allocation2 + $0x4] sm:$0xf] 0
        %329 = vst [vmem:[#allocation2 + $0x8] sm:$0x1] 0
        %s330 = scalar_lea.vmem [#allocation2], 204
        %331 = vst [vmem:[%s330] sm:$0xf] 0
        %332 = vst [vmem:[%s330 + $0x4] sm:$0xf] 0
        %333 = vst [vmem:[%s330 + $0x8] sm:$0x1] 0
        %334 = vst [vmem:[#allocation3] sm:$0xf] 0
        %335 = vst [vmem:[#allocation3 + $0x4] sm:$0xf] 0
        %336 = vst [vmem:[#allocation3 + $0x8] sm:$0x1] 0
        %s337 = scalar_lea.vmem [#allocation3], 204
        %338 = vst [vmem:[%s337] sm:$0xf] 0
        %339 = vst [vmem:[%s337 + $0x4] sm:$0xf] 0
        %340 = vst [vmem:[%s337 + $0x8] sm:$0x1] 0
        %v341 = vld [vmem:[%s287] sm:$0xff]
        %v342 = vld [vmem:[%s287 + $0x8] sm:$0xff]
        %v343 = vld [vmem:[%s287 + $0x10] sm:$0xff]
        %v344 = vld [vmem:[%s287 + $0x18] sm:$0xff]
        %v345 = vld [vmem:[%s287 + $0x20] sm:$0xff]
        %v346 = vld [vmem:[%s287 + $0x28] sm:$0xff]
        %v347 = vld [vmem:[%s287 + $0x30] sm:$0xff]
        %v348 = vld [vmem:[%s287 + $0x38] sm:$0xff]
        %v349 = vld [vmem:[%s287 + $0x40] sm:$0xff]
        %v350 = vld [vmem:[%s287 + $0x48] sm:$0xff]
        %v351 = vld [vmem:[%s287 + $0x50] sm:$0xff]
        %v352 = vld [vmem:[%s287 + $0x58] sm:$0xff]
        %v353 = vld [vmem:[%s287 + $0x60] sm:$0xff]
        %v354 = vld [vmem:[%s287 + $0x68] sm:$0xff]
        %v355 = vld [vmem:[%s287 + $0x70] sm:$0xff]
        %v356 = vld [vmem:[%s287 + $0x78] sm:$0xff]
        %v357 = vld [vmem:[%s287 + $0x80] sm:$0xff]
        %v358 = vld [vmem:[%s287 + $0x88] sm:$0xff]
        %v359 = vld [vmem:[%s287 + $0x90] sm:$0xff]
        %v360 = vld [vmem:[%s287 + $0x98] sm:$0xff]
        %v361 = vld [vmem:[%s287 + $0xa0] sm:$0xff]
        %v362 = vld [vmem:[%s287 + $0xa8] sm:$0xff]
        %v363 = vld [vmem:[%s287 + $0xb0] sm:$0xff]
        %v364 = vld [vmem:[%s287 + $0xb8] sm:$0xff]
        %v365 = vld [vmem:[%s287 + $0xc0] sm:$0xff]
        %v366 = vld [vmem:[%s287 + $0xc8] sm:$0xff]
        %v367 = vld [vmem:[%s287 + $0xd0] sm:$0xff]
        %v368 = vld [vmem:[%s287 + $0xd8] sm:$0xff]
        %v369 = vld [vmem:[%s287 + $0xe0] sm:$0xff]
        %v370 = vld [vmem:[%s287 + $0xe8] sm:$0xff]
        %v371 = vld [vmem:[%s287 + $0xf0] sm:$0xff]
        %v372 = vld [vmem:[%s287 + $0xf8] sm:$0xff]
        %v373 = vpack.c.bf16 %v342, %v341
        %v374 = vpack.c.bf16 %v344, %v343
        %v375 = vpack.c.bf16 %v346, %v345
        %v376 = vpack.c.bf16 %v348, %v347
        %v377 = vpack.c.bf16 %v350, %v349
        %v378 = vpack.c.bf16 %v352, %v351
        %v379 = vpack.c.bf16 %v354, %v353
        %v380 = vpack.c.bf16 %v356, %v355
        %v381 = vpack.c.bf16 %v358, %v357
        %v382 = vpack.c.bf16 %v360, %v359
        %v383 = vpack.c.bf16 %v362, %v361
        %v384 = vpack.c.bf16 %v364, %v363
        %v385 = vpack.c.bf16 %v366, %v365
        %v386 = vpack.c.bf16 %v368, %v367
        %v387 = vpack.c.bf16 %v370, %v369
        %v388 = vpack.c.bf16 %v372, %v371
        %v390 = vshrl.u32 %v373, 16
        %v392 = vrot.slane %v390, 7
        %v393 = vshll.u32 %v373, 16
        %v395 = vor.u32 %v392, %v393
        %v397 = vshrl.u32 %v374, 16
        %v399 = vrot.slane %v397, 7
        %v400 = vshll.u32 %v374, 16
        %v402 = vor.u32 %v399, %v400
        %v404 = vshrl.u32 %v375, 16
        %v406 = vrot.slane %v404, 7
        %v407 = vshll.u32 %v375, 16
        %v409 = vor.u32 %v406, %v407
        %v411 = vshrl.u32 %v376, 16
        %v413 = vrot.slane %v411, 7
        %v414 = vshll.u32 %v376, 16
        %v416 = vor.u32 %v413, %v414
        %v418 = vshrl.u32 %v377, 16
        %v420 = vrot.slane %v418, 7
        %v421 = vshll.u32 %v377, 16
        %v423 = vor.u32 %v420, %v421
        %v425 = vshrl.u32 %v378, 16
        %v427 = vrot.slane %v425, 7
        %v428 = vshll.u32 %v378, 16
        %v430 = vor.u32 %v427, %v428
        %v432 = vshrl.u32 %v379, 16
        %v434 = vrot.slane %v432, 7
        %v435 = vshll.u32 %v379, 16
        %v437 = vor.u32 %v434, %v435
        %v439 = vshrl.u32 %v380, 16
        %v441 = vrot.slane %v439, 7
        %v442 = vshll.u32 %v380, 16
        %v444 = vor.u32 %v441, %v442
        %v446 = vshrl.u32 %v381, 16
        %v448 = vrot.slane %v446, 7
        %v449 = vshll.u32 %v381, 16
        %v451 = vor.u32 %v448, %v449
        %v453 = vshrl.u32 %v382, 16
        %v455 = vrot.slane %v453, 7
        %v456 = vshll.u32 %v382, 16
        %v458 = vor.u32 %v455, %v456
        %v460 = vshrl.u32 %v383, 16
        %v462 = vrot.slane %v460, 7
        %v463 = vshll.u32 %v383, 16
        %v465 = vor.u32 %v462, %v463
        %v467 = vshrl.u32 %v384, 16
        %v469 = vrot.slane %v467, 7
        %v470 = vshll.u32 %v384, 16
        %v472 = vor.u32 %v469, %v470
        %v474 = vshrl.u32 %v385, 16
        %v476 = vrot.slane %v474, 7
        %v477 = vshll.u32 %v385, 16
        %v479 = vor.u32 %v476, %v477
        %v481 = vshrl.u32 %v386, 16
        %v483 = vrot.slane %v481, 7
        %v484 = vshll.u32 %v386, 16
        %v486 = vor.u32 %v483, %v484
        %v488 = vshrl.u32 %v387, 16
        %v490 = vrot.slane %v488, 7
        %v491 = vshll.u32 %v387, 16
        %v493 = vor.u32 %v490, %v491
        %v495 = vshrl.u32 %v388, 16
        %v497 = vrot.slane %v495, 7
        %v498 = vshll.u32 %v388, 16
        %v500 = vor.u32 %v497, %v498
        %vm533 = vcmask 1040384
        %vm534 = vsmask.f32 256
        %vm535 = vmand %vm533, %vm534
        %v536 = vsel %vm535, 0, %v395
        %v537 = vsel %vm535, 0, %v402
        %v538 = vsel %vm535, 0, %v409
        %v539 = vsel %vm535, 0, %v416
        %v540 = vsel %vm535, 0, %v423
        %v541 = vsel %vm535, 0, %v430
        %v542 = vsel %vm535, 0, %v437
        %v543 = vsel %vm535, 0, %v444
        %v544 = vsel %vm535, 0, %v451
        %v545 = vsel %vm535, 0, %v458
        %v546 = vsel %vm535, 0, %v465
        %v547 = vsel %vm535, 0, %v472
        %v548 = vsel %vm535, 0, %v479
        %v549 = vsel %vm535, 0, %v486
        %v550 = vsel %vm535, 0, %v493
        %v551 = vsel %vm535, 0, %v500
        %v552 = vsel %vm535, %v392, 0
        %v553 = vsel %vm535, %v399, 0
        %v554 = vsel %vm535, %v406, 0
        %v555 = vsel %vm535, %v413, 0
        %v556 = vsel %vm535, %v420, 0
        %v557 = vsel %vm535, %v427, 0
        %v558 = vsel %vm535, %v434, 0
        %v559 = vsel %vm535, %v441, 0
        %v560 = vsel %vm535, %v448, 0
        %v561 = vsel %vm535, %v455, 0
        %v562 = vsel %vm535, %v462, 0
        %v563 = vsel %vm535, %v469, 0
        %v564 = vsel %vm535, %v476, 0
        %v565 = vsel %vm535, %v483, 0
        %v566 = vsel %vm535, %v490, 0
        %v567 = vsel %vm535, %v497, 0
        %v600 = vunpack.c.l.b16 %v536
        %v601 = vunpack.c.h.b16 %v536
        %v602 = vunpack.c.l.b16 %v552
        %v603 = vunpack.c.l.b16 %v537
        %v604 = vunpack.c.h.b16 %v537
        %v605 = vunpack.c.l.b16 %v553
        %v606 = vunpack.c.l.b16 %v538
        %v607 = vunpack.c.h.b16 %v538
        %v608 = vunpack.c.l.b16 %v554
        %v609 = vunpack.c.l.b16 %v539
        %v610 = vunpack.c.h.b16 %v539
        %v611 = vunpack.c.l.b16 %v555
        %v612 = vunpack.c.l.b16 %v540
        %v613 = vunpack.c.h.b16 %v540
        %v614 = vunpack.c.l.b16 %v556
        %v615 = vunpack.c.l.b16 %v541
        %v616 = vunpack.c.h.b16 %v541
        %v617 = vunpack.c.l.b16 %v557
        %v618 = vunpack.c.l.b16 %v542
        %v619 = vunpack.c.h.b16 %v542
        %v620 = vunpack.c.l.b16 %v558
        %v621 = vunpack.c.l.b16 %v543
        %v622 = vunpack.c.h.b16 %v543
        %v623 = vunpack.c.l.b16 %v559
        %v624 = vunpack.c.l.b16 %v544
        %v625 = vunpack.c.h.b16 %v544
        %v626 = vunpack.c.l.b16 %v560
        %v627 = vunpack.c.l.b16 %v545
        %v628 = vunpack.c.h.b16 %v545
        %v629 = vunpack.c.l.b16 %v561
        %v630 = vunpack.c.l.b16 %v546
        %v631 = vunpack.c.h.b16 %v546
        %v632 = vunpack.c.l.b16 %v562
        %v633 = vunpack.c.l.b16 %v547
        %v634 = vunpack.c.h.b16 %v547
        %v635 = vunpack.c.l.b16 %v563
        %v636 = vunpack.c.l.b16 %v548
        %v637 = vunpack.c.h.b16 %v548
        %v638 = vunpack.c.l.b16 %v564
        %v639 = vunpack.c.l.b16 %v549
        %v640 = vunpack.c.h.b16 %v549
        %v641 = vunpack.c.l.b16 %v565
        %v642 = vunpack.c.l.b16 %v550
        %v643 = vunpack.c.h.b16 %v550
        %v644 = vunpack.c.l.b16 %v566
        %v645 = vunpack.c.l.b16 %v551
        %v646 = vunpack.c.h.b16 %v551
        %v647 = vunpack.c.l.b16 %v567
        %v648 = vpack.c.b16 %v600, %v600
        %v649 = vpack.c.b16 %v601, %v601
        %v650 = vpack.c.b16 %v602, %v602
        %v651 = vpack.c.b16 %v603, %v603
        %v652 = vpack.c.b16 %v604, %v604
        %v653 = vpack.c.b16 %v605, %v605
        %v654 = vpack.c.b16 %v606, %v606
        %v655 = vpack.c.b16 %v607, %v607
        %v656 = vpack.c.b16 %v608, %v608
        %v657 = vpack.c.b16 %v609, %v609
        %v658 = vpack.c.b16 %v610, %v610
        %v659 = vpack.c.b16 %v611, %v611
        %v660 = vpack.c.b16 %v612, %v612
        %v661 = vpack.c.b16 %v613, %v613
        %v662 = vpack.c.b16 %v614, %v614
        %v663 = vpack.c.b16 %v615, %v615
        %v664 = vpack.c.b16 %v616, %v616
        %v665 = vpack.c.b16 %v617, %v617
        %v666 = vpack.c.b16 %v618, %v618
        %v667 = vpack.c.b16 %v619, %v619
        %v668 = vpack.c.b16 %v620, %v620
        %v669 = vpack.c.b16 %v621, %v621
        %v670 = vpack.c.b16 %v622, %v622
        %v671 = vpack.c.b16 %v623, %v623
        %v672 = vpack.c.b16 %v624, %v624
        %v673 = vpack.c.b16 %v625, %v625
        %v674 = vpack.c.b16 %v626, %v626
        %v675 = vpack.c.b16 %v627, %v627
        %v676 = vpack.c.b16 %v628, %v628
        %v677 = vpack.c.b16 %v629, %v629
        %v678 = vpack.c.b16 %v630, %v630
        %v679 = vpack.c.b16 %v631, %v631
        %v680 = vpack.c.b16 %v632, %v632
        %v681 = vpack.c.b16 %v633, %v633
        %v682 = vpack.c.b16 %v634, %v634
        %v683 = vpack.c.b16 %v635, %v635
        %v684 = vpack.c.b16 %v636, %v636
        %v685 = vpack.c.b16 %v637, %v637
        %v686 = vpack.c.b16 %v638, %v638
        %v687 = vpack.c.b16 %v639, %v639
        %v688 = vpack.c.b16 %v640, %v640
        %v689 = vpack.c.b16 %v641, %v641
        %v690 = vpack.c.b16 %v642, %v642
        %v691 = vpack.c.b16 %v643, %v643
        %v692 = vpack.c.b16 %v644, %v644
        %v693 = vpack.c.b16 %v645, %v645
        %v694 = vpack.c.b16 %v646, %v646
        %v695 = vpack.c.b16 %v647, %v647
        %s744 = scalar_lea.vmem [#allocation2], 12
        %745 = vst [vmem:[%s744] sm:$0xf] %v648
        %746 = vst [vmem:[%s744 + $0x4] sm:$0xf] %v649
        %747 = vst [vmem:[%s744 + $0x8] sm:$0x1] %v650
        %748 = vst [vmem:[%s744 + $0xc] sm:$0xf] %v651
        %749 = vst [vmem:[%s744 + $0x10] sm:$0xf] %v652
        %750 = vst [vmem:[%s744 + $0x14] sm:$0x1] %v653
        %751 = vst [vmem:[%s744 + $0x18] sm:$0xf] %v654
        %752 = vst [vmem:[%s744 + $0x1c] sm:$0xf] %v655
        %753 = vst [vmem:[%s744 + $0x20] sm:$0x1] %v656
        %754 = vst [vmem:[%s744 + $0x24] sm:$0xf] %v657
        %755 = vst [vmem:[%s744 + $0x28] sm:$0xf] %v658
        %756 = vst [vmem:[%s744 + $0x2c] sm:$0x1] %v659
        %757 = vst [vmem:[%s744 + $0x30] sm:$0xf] %v660
        %758 = vst [vmem:[%s744 + $0x34] sm:$0xf] %v661
        %759 = vst [vmem:[%s744 + $0x38] sm:$0x1] %v662
        %760 = vst [vmem:[%s744 + $0x3c] sm:$0xf] %v663
        %761 = vst [vmem:[%s744 + $0x40] sm:$0xf] %v664
        %762 = vst [vmem:[%s744 + $0x44] sm:$0x1] %v665
        %763 = vst [vmem:[%s744 + $0x48] sm:$0xf] %v666
        %764 = vst [vmem:[%s744 + $0x4c] sm:$0xf] %v667
        %765 = vst [vmem:[%s744 + $0x50] sm:$0x1] %v668
        %766 = vst [vmem:[%s744 + $0x54] sm:$0xf] %v669
        %767 = vst [vmem:[%s744 + $0x58] sm:$0xf] %v670
        %768 = vst [vmem:[%s744 + $0x5c] sm:$0x1] %v671
        %769 = vst [vmem:[%s744 + $0x60] sm:$0xf] %v672
        %770 = vst [vmem:[%s744 + $0x64] sm:$0xf] %v673
        %771 = vst [vmem:[%s744 + $0x68] sm:$0x1] %v674
        %772 = vst [vmem:[%s744 + $0x6c] sm:$0xf] %v675
        %773 = vst [vmem:[%s744 + $0x70] sm:$0xf] %v676
        %774 = vst [vmem:[%s744 + $0x74] sm:$0x1] %v677
        %775 = vst [vmem:[%s744 + $0x78] sm:$0xf] %v678
        %776 = vst [vmem:[%s744 + $0x7c] sm:$0xf] %v679
        %777 = vst [vmem:[%s744 + $0x80] sm:$0x1] %v680
        %778 = vst [vmem:[%s744 + $0x84] sm:$0xf] %v681
        %779 = vst [vmem:[%s744 + $0x88] sm:$0xf] %v682
        %780 = vst [vmem:[%s744 + $0x8c] sm:$0x1] %v683
        %781 = vst [vmem:[%s744 + $0x90] sm:$0xf] %v684
        %782 = vst [vmem:[%s744 + $0x94] sm:$0xf] %v685
        %783 = vst [vmem:[%s744 + $0x98] sm:$0x1] %v686
        %784 = vst [vmem:[%s744 + $0x9c] sm:$0xf] %v687
        %785 = vst [vmem:[%s744 + $0xa0] sm:$0xf] %v688
        %786 = vst [vmem:[%s744 + $0xa4] sm:$0x1] %v689
        %787 = vst [vmem:[%s744 + $0xa8] sm:$0xf] %v690
        %788 = vst [vmem:[%s744 + $0xac] sm:$0xf] %v691
        %789 = vst [vmem:[%s744 + $0xb0] sm:$0x1] %v692
        %790 = vst [vmem:[%s744 + $0xb4] sm:$0xf] %v693
        %791 = vst [vmem:[%s744 + $0xb8] sm:$0xf] %v694
        %792 = vst [vmem:[%s744 + $0xbc] sm:$0x1] %v695
        %s793 = smul.u32 0, 3
        %s794 = smul.addr %s793, 4
        %s795 = scalar_lea.vmem [#allocation2], %s794
        %v796 = vld [vmem:[%s795] sm:$0xf]
        %v797 = vld [vmem:[%s795 + $0x4] sm:$0xf]
        %v798 = vld [vmem:[%s795 + $0x8] sm:$0x1]
        %v799 = vld [vmem:[%s795 + $0xc] sm:$0xf]
        %v800 = vld [vmem:[%s795 + $0x10] sm:$0xf]
        %v801 = vld [vmem:[%s795 + $0x14] sm:$0x1]
        %v802 = vld [vmem:[%s795 + $0x18] sm:$0xf]
        %v803 = vld [vmem:[%s795 + $0x1c] sm:$0xf]
        %v804 = vld [vmem:[%s795 + $0x20] sm:$0x1]
        %v805 = vld [vmem:[%s795 + $0x24] sm:$0xf]
        %v806 = vld [vmem:[%s795 + $0x28] sm:$0xf]
        %v807 = vld [vmem:[%s795 + $0x2c] sm:$0x1]
        %v808 = vld [vmem:[%s795 + $0x30] sm:$0xf]
        %v809 = vld [vmem:[%s795 + $0x34] sm:$0xf]
        %v810 = vld [vmem:[%s795 + $0x38] sm:$0x1]
        %v811 = vld [vmem:[%s795 + $0x3c] sm:$0xf]
        %v812 = vld [vmem:[%s795 + $0x40] sm:$0xf]
        %v813 = vld [vmem:[%s795 + $0x44] sm:$0x1]
        %v814 = vld [vmem:[%s795 + $0x48] sm:$0xf]
        %v815 = vld [vmem:[%s795 + $0x4c] sm:$0xf]
        %v816 = vld [vmem:[%s795 + $0x50] sm:$0x1]
        %v817 = vld [vmem:[%s795 + $0x54] sm:$0xf]
        %v818 = vld [vmem:[%s795 + $0x58] sm:$0xf]
        %v819 = vld [vmem:[%s795 + $0x5c] sm:$0x1]
        %v820 = vld [vmem:[%s795 + $0x60] sm:$0xf]
        %v821 = vld [vmem:[%s795 + $0x64] sm:$0xf]
        %v822 = vld [vmem:[%s795 + $0x68] sm:$0x1]
        %v823 = vld [vmem:[%s795 + $0x6c] sm:$0xf]
        %v824 = vld [vmem:[%s795 + $0x70] sm:$0xf]
        %v825 = vld [vmem:[%s795 + $0x74] sm:$0x1]
        %v826 = vld [vmem:[%s795 + $0x78] sm:$0xf]
        %v827 = vld [vmem:[%s795 + $0x7c] sm:$0xf]
        %v828 = vld [vmem:[%s795 + $0x80] sm:$0x1]
        %v829 = vld [vmem:[%s795 + $0x84] sm:$0xf]
        %v830 = vld [vmem:[%s795 + $0x88] sm:$0xf]
        %v831 = vld [vmem:[%s795 + $0x8c] sm:$0x1]
        %v832 = vld [vmem:[%s795 + $0x90] sm:$0xf]
        %v833 = vld [vmem:[%s795 + $0x94] sm:$0xf]
        %v834 = vld [vmem:[%s795 + $0x98] sm:$0x1]
        %v835 = vld [vmem:[%s795 + $0x9c] sm:$0xf]
        %v836 = vld [vmem:[%s795 + $0xa0] sm:$0xf]
        %v837 = vld [vmem:[%s795 + $0xa4] sm:$0x1]
        %v838 = vld [vmem:[%s795 + $0xa8] sm:$0xf]
        %v839 = vld [vmem:[%s795 + $0xac] sm:$0xf]
        %v840 = vld [vmem:[%s795 + $0xb0] sm:$0x1]
        %v841 = vld [vmem:[%s795 + $0xb4] sm:$0xf]
        %v842 = vld [vmem:[%s795 + $0xb8] sm:$0xf]
        %v843 = vld [vmem:[%s795 + $0xbc] sm:$0x1]
        %v844 = vld [vmem:[%s795 + $0xc0] sm:$0xf]
        %v845 = vld [vmem:[%s795 + $0xc4] sm:$0xf]
        %v846 = vld [vmem:[%s795 + $0xc8] sm:$0x1]
        %v847 = vld [vmem:[%s795 + $0xcc] sm:$0xf]
        %v848 = vld [vmem:[%s795 + $0xd0] sm:$0xf]
        %v849 = vld [vmem:[%s795 + $0xd4] sm:$0x1]
        %vm850 = vsmask.f32 3328
        %vm851 = vsmask.f32 7440
        %vm852 = vmor %vm850, %vm851
        %v854 = vshrl.u32 %v796, 16
        %v856 = vrot.slane %v854, 4
        %v857 = vshll.u32 %v796, 16
        %v859 = vrot.slane %v857, 5
        %v860 = vor.u32 %v856, %v859
        %v861 = vrot.slane %v860, 4
        %v863 = vshll.u32 %v797, 16
        %v865 = vrot.slane %v863, 5
        %v866 = vsel %vm852, %v861, %v865
        %v867 = vshrl.u32 %v797, 16
        %v869 = vrot.slane %v867, 4
        %v870 = vor.u32 %v869, %v865
        %v871 = vrot.slane %v870, 4
        %v873 = vshll.u32 %v798, 16
        %v875 = vrot.slane %v873, 5
        %v876 = vsel %vm852, %v871, %v875
        %v878 = vshrl.u32 %v799, 16
        %v880 = vrot.slane %v878, 4
        %v881 = vshll.u32 %v799, 16
        %v883 = vrot.slane %v881, 5
        %v884 = vor.u32 %v880, %v883
        %v885 = vrot.slane %v884, 4
        %v887 = vshll.u32 %v800, 16
        %v889 = vrot.slane %v887, 5
        %v890 = vsel %vm852, %v885, %v889
        %v891 = vshrl.u32 %v800, 16
        %v893 = vrot.slane %v891, 4
        %v894 = vor.u32 %v893, %v889
        %v895 = vrot.slane %v894, 4
        %v897 = vshll.u32 %v801, 16
        %v899 = vrot.slane %v897, 5
        %v900 = vsel %vm852, %v895, %v899
        %v902 = vshrl.u32 %v802, 16
        %v904 = vrot.slane %v902, 4
        %v905 = vshll.u32 %v802, 16
        %v907 = vrot.slane %v905, 5
        %v908 = vor.u32 %v904, %v907
        %v909 = vrot.slane %v908, 4
        %v911 = vshll.u32 %v803, 16
        %v913 = vrot.slane %v911, 5
        %v914 = vsel %vm852, %v909, %v913
        %v915 = vshrl.u32 %v803, 16
        %v917 = vrot.slane %v915, 4
        %v918 = vor.u32 %v917, %v913
        %v919 = vrot.slane %v918, 4
        %v921 = vshll.u32 %v804, 16
        %v923 = vrot.slane %v921, 5
        %v924 = vsel %vm852, %v919, %v923
        %v926 = vshrl.u32 %v805, 16
        %v928 = vrot.slane %v926, 4
        %v929 = vshll.u32 %v805, 16
        %v931 = vrot.slane %v929, 5
        %v932 = vor.u32 %v928, %v931
        %v933 = vrot.slane %v932, 4
        %v935 = vshll.u32 %v806, 16
        %v937 = vrot.slane %v935, 5
        %v938 = vsel %vm852, %v933, %v937
        %v939 = vshrl.u32 %v806, 16
        %v941 = vrot.slane %v939, 4
        %v942 = vor.u32 %v941, %v937
        %v943 = vrot.slane %v942, 4
        %v945 = vshll.u32 %v807, 16
        %v947 = vrot.slane %v945, 5
        %v948 = vsel %vm852, %v943, %v947
        %v950 = vshrl.u32 %v808, 16
        %v952 = vrot.slane %v950, 4
        %v953 = vshll.u32 %v808, 16
        %v955 = vrot.slane %v953, 5
        %v956 = vor.u32 %v952, %v955
        %v957 = vrot.slane %v956, 4
        %v959 = vshll.u32 %v809, 16
        %v961 = vrot.slane %v959, 5
        %v962 = vsel %vm852, %v957, %v961
        %v963 = vshrl.u32 %v809, 16
        %v965 = vrot.slane %v963, 4
        %v966 = vor.u32 %v965, %v961
        %v967 = vrot.slane %v966, 4
        %v969 = vshll.u32 %v810, 16
        %v971 = vrot.slane %v969, 5
        %v972 = vsel %vm852, %v967, %v971
        %v974 = vshrl.u32 %v811, 16
        %v976 = vrot.slane %v974, 4
        %v977 = vshll.u32 %v811, 16
        %v979 = vrot.slane %v977, 5
        %v980 = vor.u32 %v976, %v979
        %v981 = vrot.slane %v980, 4
        %v983 = vshll.u32 %v812, 16
        %v985 = vrot.slane %v983, 5
        %v986 = vsel %vm852, %v981, %v985
        %v987 = vshrl.u32 %v812, 16
        %v989 = vrot.slane %v987, 4
        %v990 = vor.u32 %v989, %v985
        %v991 = vrot.slane %v990, 4
        %v993 = vshll.u32 %v813, 16
        %v995 = vrot.slane %v993, 5
        %v996 = vsel %vm852, %v991, %v995
        %v998 = vshrl.u32 %v814, 16
        %v1000 = vrot.slane %v998, 4
        %v1001 = vshll.u32 %v814, 16
        %v1003 = vrot.slane %v1001, 5
        %v1004 = vor.u32 %v1000, %v1003
        %v1005 = vrot.slane %v1004, 4
        %v1007 = vshll.u32 %v815, 16
        %v1009 = vrot.slane %v1007, 5
        %v1010 = vsel %vm852, %v1005, %v1009
        %v1011 = vshrl.u32 %v815, 16
        %v1013 = vrot.slane %v1011, 4
        %v1014 = vor.u32 %v1013, %v1009
        %v1015 = vrot.slane %v1014, 4
        %v1017 = vshll.u32 %v816, 16
        %v1019 = vrot.slane %v1017, 5
        %v1020 = vsel %vm852, %v1015, %v1019
        %v1022 = vshrl.u32 %v817, 16
        %v1024 = vrot.slane %v1022, 4
        %v1025 = vshll.u32 %v817, 16
        %v1027 = vrot.slane %v1025, 5
        %v1028 = vor.u32 %v1024, %v1027
        %v1029 = vrot.slane %v1028, 4
        %v1031 = vshll.u32 %v818, 16
        %v1033 = vrot.slane %v1031, 5
        %v1034 = vsel %vm852, %v1029, %v1033
        %v1035 = vshrl.u32 %v818, 16
        %v1037 = vrot.slane %v1035, 4
        %v1038 = vor.u32 %v1037, %v1033
        %v1039 = vrot.slane %v1038, 4
        %v1041 = vshll.u32 %v819, 16
        %v1043 = vrot.slane %v1041, 5
        %v1044 = vsel %vm852, %v1039, %v1043
        %v1046 = vshrl.u32 %v820, 16
        %v1048 = vrot.slane %v1046, 4
        %v1049 = vshll.u32 %v820, 16
        %v1051 = vrot.slane %v1049, 5
        %v1052 = vor.u32 %v1048, %v1051
        %v1053 = vrot.slane %v1052, 4
        %v1055 = vshll.u32 %v821, 16
        %v1057 = vrot.slane %v1055, 5
        %v1058 = vsel %vm852, %v1053, %v1057
        %v1059 = vshrl.u32 %v821, 16
        %v1061 = vrot.slane %v1059, 4
        %v1062 = vor.u32 %v1061, %v1057
        %v1063 = vrot.slane %v1062, 4
        %v1065 = vshll.u32 %v822, 16
        %v1067 = vrot.slane %v1065, 5
        %v1068 = vsel %vm852, %v1063, %v1067
        %v1070 = vshrl.u32 %v823, 16
        %v1072 = vrot.slane %v1070, 4
        %v1073 = vshll.u32 %v823, 16
        %v1075 = vrot.slane %v1073, 5
        %v1076 = vor.u32 %v1072, %v1075
        %v1077 = vrot.slane %v1076, 4
        %v1079 = vshll.u32 %v824, 16
        %v1081 = vrot.slane %v1079, 5
        %v1082 = vsel %vm852, %v1077, %v1081
        %v1083 = vshrl.u32 %v824, 16
        %v1085 = vrot.slane %v1083, 4
        %v1086 = vor.u32 %v1085, %v1081
        %v1087 = vrot.slane %v1086, 4
        %v1089 = vshll.u32 %v825, 16
        %v1091 = vrot.slane %v1089, 5
        %v1092 = vsel %vm852, %v1087, %v1091
        %v1094 = vshrl.u32 %v826, 16
        %v1096 = vrot.slane %v1094, 4
        %v1097 = vshll.u32 %v826, 16
        %v1099 = vrot.slane %v1097, 5
        %v1100 = vor.u32 %v1096, %v1099
        %v1101 = vrot.slane %v1100, 4
        %v1103 = vshll.u32 %v827, 16
        %v1105 = vrot.slane %v1103, 5
        %v1106 = vsel %vm852, %v1101, %v1105
        %v1107 = vshrl.u32 %v827, 16
        %v1109 = vrot.slane %v1107, 4
        %v1110 = vor.u32 %v1109, %v1105
        %v1111 = vrot.slane %v1110, 4
        %v1113 = vshll.u32 %v828, 16
        %v1115 = vrot.slane %v1113, 5
        %v1116 = vsel %vm852, %v1111, %v1115
        %v1118 = vshrl.u32 %v829, 16
        %v1120 = vrot.slane %v1118, 4
        %v1121 = vshll.u32 %v829, 16
        %v1123 = vrot.slane %v1121, 5
        %v1124 = vor.u32 %v1120, %v1123
        %v1125 = vrot.slane %v1124, 4
        %v1127 = vshll.u32 %v830, 16
        %v1129 = vrot.slane %v1127, 5
        %v1130 = vsel %vm852, %v1125, %v1129
        %v1131 = vshrl.u32 %v830, 16
        %v1133 = vrot.slane %v1131, 4
        %v1134 = vor.u32 %v1133, %v1129
        %v1135 = vrot.slane %v1134, 4
        %v1137 = vshll.u32 %v831, 16
        %v1139 = vrot.slane %v1137, 5
        %v1140 = vsel %vm852, %v1135, %v1139
        %v1142 = vshrl.u32 %v832, 16
        %v1144 = vrot.slane %v1142, 4
        %v1145 = vshll.u32 %v832, 16
        %v1147 = vrot.slane %v1145, 5
        %v1148 = vor.u32 %v1144, %v1147
        %v1149 = vrot.slane %v1148, 4
        %v1151 = vshll.u32 %v833, 16
        %v1153 = vrot.slane %v1151, 5
        %v1154 = vsel %vm852, %v1149, %v1153
        %v1155 = vshrl.u32 %v833, 16
        %v1157 = vrot.slane %v1155, 4
        %v1158 = vor.u32 %v1157, %v1153
        %v1159 = vrot.slane %v1158, 4
        %v1161 = vshll.u32 %v834, 16
        %v1163 = vrot.slane %v1161, 5
        %v1164 = vsel %vm852, %v1159, %v1163
        %v1166 = vshrl.u32 %v835, 16
        %v1168 = vrot.slane %v1166, 4
        %v1169 = vshll.u32 %v835, 16
        %v1171 = vrot.slane %v1169, 5
        %v1172 = vor.u32 %v1168, %v1171
        %v1173 = vrot.slane %v1172, 4
        %v1175 = vshll.u32 %v836, 16
        %v1177 = vrot.slane %v1175, 5
        %v1178 = vsel %vm852, %v1173, %v1177
        %v1179 = vshrl.u32 %v836, 16
        %v1181 = vrot.slane %v1179, 4
        %v1182 = vor.u32 %v1181, %v1177
        %v1183 = vrot.slane %v1182, 4
        %v1185 = vshll.u32 %v837, 16
        %v1187 = vrot.slane %v1185, 5
        %v1188 = vsel %vm852, %v1183, %v1187
        %v1190 = vshrl.u32 %v838, 16
        %v1192 = vrot.slane %v1190, 4
        %v1193 = vshll.u32 %v838, 16
        %v1195 = vrot.slane %v1193, 5
        %v1196 = vor.u32 %v1192, %v1195
        %v1197 = vrot.slane %v1196, 4
        %v1199 = vshll.u32 %v839, 16
        %v1201 = vrot.slane %v1199, 5
        %v1202 = vsel %vm852, %v1197, %v1201
        %v1203 = vshrl.u32 %v839, 16
        %v1205 = vrot.slane %v1203, 4
        %v1206 = vor.u32 %v1205, %v1201
        %v1207 = vrot.slane %v1206, 4
        %v1209 = vshll.u32 %v840, 16
        %v1211 = vrot.slane %v1209, 5
        %v1212 = vsel %vm852, %v1207, %v1211
        %v1214 = vshrl.u32 %v841, 16
        %v1216 = vrot.slane %v1214, 4
        %v1217 = vshll.u32 %v841, 16
        %v1219 = vrot.slane %v1217, 5
        %v1220 = vor.u32 %v1216, %v1219
        %v1221 = vrot.slane %v1220, 4
        %v1223 = vshll.u32 %v842, 16
        %v1225 = vrot.slane %v1223, 5
        %v1226 = vsel %vm852, %v1221, %v1225
        %v1227 = vshrl.u32 %v842, 16
        %v1229 = vrot.slane %v1227, 4
        %v1230 = vor.u32 %v1229, %v1225
        %v1231 = vrot.slane %v1230, 4
        %v1233 = vshll.u32 %v843, 16
        %v1235 = vrot.slane %v1233, 5
        %v1236 = vsel %vm852, %v1231, %v1235
        %vm1285 = vcmask 1042432
        %vm1286 = vcmask 1046532
        %vm1287 = vmor %vm1285, %vm1286
        %v1288 = vrot.slane %v796, 5
        %v1289 = vrot.slane %v1288, 4
        %v1290 = vrot.slane %v797, 5
        %v1291 = vsel %vm1287, %v1289, %v1290
        %v1292 = vrot.slane %v1290, 4
        %v1293 = vrot.slane %v798, 5
        %v1294 = vsel %vm1287, %v1292, %v1293
        %v1295 = vrot.slane %v799, 5
        %v1296 = vrot.slane %v1295, 4
        %v1297 = vrot.slane %v800, 5
        %v1298 = vsel %vm1287, %v1296, %v1297
        %v1299 = vrot.slane %v1297, 4
        %v1300 = vrot.slane %v801, 5
        %v1301 = vsel %vm1287, %v1299, %v1300
        %v1302 = vrot.slane %v802, 5
        %v1303 = vrot.slane %v1302, 4
        %v1304 = vrot.slane %v803, 5
        %v1305 = vsel %vm1287, %v1303, %v1304
        %v1306 = vrot.slane %v1304, 4
        %v1307 = vrot.slane %v804, 5
        %v1308 = vsel %vm1287, %v1306, %v1307
        %v1309 = vrot.slane %v805, 5
        %v1310 = vrot.slane %v1309, 4
        %v1311 = vrot.slane %v806, 5
        %v1312 = vsel %vm1287, %v1310, %v1311
        %v1313 = vrot.slane %v1311, 4
        %v1314 = vrot.slane %v807, 5
        %v1315 = vsel %vm1287, %v1313, %v1314
        %v1316 = vrot.slane %v808, 5
        %v1317 = vrot.slane %v1316, 4
        %v1318 = vrot.slane %v809, 5
        %v1319 = vsel %vm1287, %v1317, %v1318
        %v1320 = vrot.slane %v1318, 4
        %v1321 = vrot.slane %v810, 5
        %v1322 = vsel %vm1287, %v1320, %v1321
        %v1323 = vrot.slane %v811, 5
        %v1324 = vrot.slane %v1323, 4
        %v1325 = vrot.slane %v812, 5
        %v1326 = vsel %vm1287, %v1324, %v1325
        %v1327 = vrot.slane %v1325, 4
        %v1328 = vrot.slane %v813, 5
        %v1329 = vsel %vm1287, %v1327, %v1328
        %v1330 = vrot.slane %v814, 5
        %v1331 = vrot.slane %v1330, 4
        %v1332 = vrot.slane %v815, 5
        %v1333 = vsel %vm1287, %v1331, %v1332
        %v1334 = vrot.slane %v1332, 4
        %v1335 = vrot.slane %v816, 5
        %v1336 = vsel %vm1287, %v1334, %v1335
        %v1337 = vrot.slane %v817, 5
        %v1338 = vrot.slane %v1337, 4
        %v1339 = vrot.slane %v818, 5
        %v1340 = vsel %vm1287, %v1338, %v1339
        %v1341 = vrot.slane %v1339, 4
        %v1342 = vrot.slane %v819, 5
        %v1343 = vsel %vm1287, %v1341, %v1342
        %v1344 = vrot.slane %v820, 5
        %v1345 = vrot.slane %v1344, 4
        %v1346 = vrot.slane %v821, 5
        %v1347 = vsel %vm1287, %v1345, %v1346
        %v1348 = vrot.slane %v1346, 4
        %v1349 = vrot.slane %v822, 5
        %v1350 = vsel %vm1287, %v1348, %v1349
        %v1351 = vrot.slane %v823, 5
        %v1352 = vrot.slane %v1351, 4
        %v1353 = vrot.slane %v824, 5
        %v1354 = vsel %vm1287, %v1352, %v1353
        %v1355 = vrot.slane %v1353, 4
        %v1356 = vrot.slane %v825, 5
        %v1357 = vsel %vm1287, %v1355, %v1356
        %v1358 = vrot.slane %v826, 5
        %v1359 = vrot.slane %v1358, 4
        %v1360 = vrot.slane %v827, 5
        %v1361 = vsel %vm1287, %v1359, %v1360
        %v1362 = vrot.slane %v1360, 4
        %v1363 = vrot.slane %v828, 5
        %v1364 = vsel %vm1287, %v1362, %v1363
        %v1365 = vrot.slane %v829, 5
        %v1366 = vrot.slane %v1365, 4
        %v1367 = vrot.slane %v830, 5
        %v1368 = vsel %vm1287, %v1366, %v1367
        %v1369 = vrot.slane %v1367, 4
        %v1370 = vrot.slane %v831, 5
        %v1371 = vsel %vm1287, %v1369, %v1370
        %v1372 = vrot.slane %v832, 5
        %v1373 = vrot.slane %v1372, 4
        %v1374 = vrot.slane %v833, 5
        %v1375 = vsel %vm1287, %v1373, %v1374
        %v1376 = vrot.slane %v1374, 4
        %v1377 = vrot.slane %v834, 5
        %v1378 = vsel %vm1287, %v1376, %v1377
        %v1379 = vrot.slane %v835, 5
        %v1380 = vrot.slane %v1379, 4
        %v1381 = vrot.slane %v836, 5
        %v1382 = vsel %vm1287, %v1380, %v1381
        %v1383 = vrot.slane %v1381, 4
        %v1384 = vrot.slane %v837, 5
        %v1385 = vsel %vm1287, %v1383, %v1384
        %v1386 = vrot.slane %v838, 5
        %v1387 = vrot.slane %v1386, 4
        %v1388 = vrot.slane %v839, 5
        %v1389 = vsel %vm1287, %v1387, %v1388
        %v1390 = vrot.slane %v1388, 4
        %v1391 = vrot.slane %v840, 5
        %v1392 = vsel %vm1287, %v1390, %v1391
        %v1393 = vrot.slane %v841, 5
        %v1394 = vrot.slane %v1393, 4
        %v1395 = vrot.slane %v842, 5
        %v1396 = vsel %vm1287, %v1394, %v1395
        %v1397 = vrot.slane %v1395, 4
        %v1398 = vrot.slane %v843, 5
        %v1399 = vsel %vm1287, %v1397, %v1398
        %v1401 = vshrl.u32 %v844, 16
        %v1403 = vrot.slane %v1401, 4
        %v1404 = vshll.u32 %v844, 16
        %v1406 = vrot.slane %v1404, 5
        %v1407 = vor.u32 %v1403, %v1406
        %v1408 = vrot.slane %v1407, 4
        %v1410 = vshll.u32 %v845, 16
        %v1412 = vrot.slane %v1410, 5
        %v1413 = vsel %vm852, %v1408, %v1412
        %v1414 = vshrl.u32 %v845, 16
        %v1416 = vrot.slane %v1414, 4
        %v1417 = vor.u32 %v1416, %v1412
        %v1418 = vrot.slane %v1417, 4
        %v1420 = vshll.u32 %v846, 16
        %v1422 = vrot.slane %v1420, 5
        %v1423 = vsel %vm852, %v1418, %v1422
        %v1427 = vrot.slane %v844, 5
        %v1428 = vrot.slane %v1427, 4
        %v1429 = vrot.slane %v845, 5
        %v1430 = vsel %vm1287, %v1428, %v1429
        %v1431 = vrot.slane %v1429, 4
        %v1432 = vrot.slane %v846, 5
        %v1433 = vsel %vm1287, %v1431, %v1432
        %v1435 = vshrl.u32 %v847, 16
        %v1437 = vrot.slane %v1435, 4
        %v1438 = vshll.u32 %v847, 16
        %v1440 = vrot.slane %v1438, 5
        %v1441 = vor.u32 %v1437, %v1440
        %v1442 = vrot.slane %v1441, 4
        %v1444 = vshll.u32 %v848, 16
        %v1446 = vrot.slane %v1444, 5
        %v1447 = vsel %vm852, %v1442, %v1446
        %v1448 = vshrl.u32 %v848, 16
        %v1450 = vrot.slane %v1448, 4
        %v1451 = vor.u32 %v1450, %v1446
        %v1452 = vrot.slane %v1451, 4
        %v1454 = vshll.u32 %v849, 16
        %v1456 = vrot.slane %v1454, 5
        %v1457 = vsel %vm852, %v1452, %v1456
        %v1461 = vrot.slane %v847, 5
        %v1462 = vrot.slane %v1461, 4
        %v1463 = vrot.slane %v848, 5
        %v1464 = vsel %vm1287, %v1462, %v1463
        %v1465 = vrot.slane %v1463, 4
        %v1466 = vrot.slane %v849, 5
        %v1467 = vsel %vm1287, %v1465, %v1466
        %v1468 = vunpack.c.l.b16 %v796
        %v1469 = vunpack.c.l.b16 %v797
        %v1470 = vunpack.c.l.b16 %v799
        %v1471 = vunpack.c.l.b16 %v800
        %v1472 = vunpack.c.l.b16 %v802
        %v1473 = vunpack.c.l.b16 %v803
        %v1474 = vunpack.c.l.b16 %v805
        %v1475 = vunpack.c.l.b16 %v806
        %v1476 = vunpack.c.l.b16 %v808
        %v1477 = vunpack.c.l.b16 %v809
        %v1478 = vunpack.c.l.b16 %v811
        %v1479 = vunpack.c.l.b16 %v812
        %v1480 = vunpack.c.l.b16 %v814
        %v1481 = vunpack.c.l.b16 %v815
        %v1482 = vunpack.c.l.b16 %v817
        %v1483 = vunpack.c.l.b16 %v818
        %v1484 = vunpack.c.l.b16 %v820
        %v1485 = vunpack.c.l.b16 %v821
        %v1486 = vunpack.c.l.b16 %v823
        %v1487 = vunpack.c.l.b16 %v824
        %v1488 = vunpack.c.l.b16 %v826
        %v1489 = vunpack.c.l.b16 %v827
        %v1490 = vunpack.c.l.b16 %v829
        %v1491 = vunpack.c.l.b16 %v830
        %v1492 = vunpack.c.l.b16 %v832
        %v1493 = vunpack.c.l.b16 %v833
        %v1494 = vunpack.c.l.b16 %v835
        %v1495 = vunpack.c.l.b16 %v836
        %v1496 = vunpack.c.l.b16 %v838
        %v1497 = vunpack.c.l.b16 %v839
        %v1498 = vunpack.c.l.b16 %v841
        %v1499 = vunpack.c.l.b16 %v842
        %v1500 = vpack.c.b16 %v1469, %v1468
        %v1501 = vpack.c.b16 %v1471, %v1470
        %v1502 = vpack.c.b16 %v1473, %v1472
        %v1503 = vpack.c.b16 %v1475, %v1474
        %v1504 = vpack.c.b16 %v1477, %v1476
        %v1505 = vpack.c.b16 %v1479, %v1478
        %v1506 = vpack.c.b16 %v1481, %v1480
        %v1507 = vpack.c.b16 %v1483, %v1482
        %v1508 = vpack.c.b16 %v1485, %v1484
        %v1509 = vpack.c.b16 %v1487, %v1486
        %v1510 = vpack.c.b16 %v1489, %v1488
        %v1511 = vpack.c.b16 %v1491, %v1490
        %v1512 = vpack.c.b16 %v1493, %v1492
        %v1513 = vpack.c.b16 %v1495, %v1494
        %v1514 = vpack.c.b16 %v1497, %v1496
        %v1515 = vpack.c.b16 %v1499, %v1498
        %v1532 = vunpack.c.l.b16 %v866
        %v1533 = vunpack.c.l.b16 %v876
        %v1534 = vunpack.c.l.b16 %v890
        %v1535 = vunpack.c.l.b16 %v900
        %v1536 = vunpack.c.l.b16 %v914
        %v1537 = vunpack.c.l.b16 %v924
        %v1538 = vunpack.c.l.b16 %v938
        %v1539 = vunpack.c.l.b16 %v948
        %v1540 = vunpack.c.l.b16 %v962
        %v1541 = vunpack.c.l.b16 %v972
        %v1542 = vunpack.c.l.b16 %v986
        %v1543 = vunpack.c.l.b16 %v996
        %v1544 = vunpack.c.l.b16 %v1010
        %v1545 = vunpack.c.l.b16 %v1020
        %v1546 = vunpack.c.l.b16 %v1034
        %v1547 = vunpack.c.l.b16 %v1044
        %v1548 = vunpack.c.l.b16 %v1058
        %v1549 = vunpack.c.l.b16 %v1068
        %v1550 = vunpack.c.l.b16 %v1082
        %v1551 = vunpack.c.l.b16 %v1092
        %v1552 = vunpack.c.l.b16 %v1106
        %v1553 = vunpack.c.l.b16 %v1116
        %v1554 = vunpack.c.l.b16 %v1130
        %v1555 = vunpack.c.l.b16 %v1140
        %v1556 = vunpack.c.l.b16 %v1154
        %v1557 = vunpack.c.l.b16 %v1164
        %v1558 = vunpack.c.l.b16 %v1178
        %v1559 = vunpack.c.l.b16 %v1188
        %v1560 = vunpack.c.l.b16 %v1202
        %v1561 = vunpack.c.l.b16 %v1212
        %v1562 = vunpack.c.l.b16 %v1226
        %v1563 = vunpack.c.l.b16 %v1236
        %v1564 = vpack.c.b16 %v1533, %v1532
        %v1565 = vpack.c.b16 %v1535, %v1534
        %v1566 = vpack.c.b16 %v1537, %v1536
        %v1567 = vpack.c.b16 %v1539, %v1538
        %v1568 = vpack.c.b16 %v1541, %v1540
        %v1569 = vpack.c.b16 %v1543, %v1542
        %v1570 = vpack.c.b16 %v1545, %v1544
        %v1571 = vpack.c.b16 %v1547, %v1546
        %v1572 = vpack.c.b16 %v1549, %v1548
        %v1573 = vpack.c.b16 %v1551, %v1550
        %v1574 = vpack.c.b16 %v1553, %v1552
        %v1575 = vpack.c.b16 %v1555, %v1554
        %v1576 = vpack.c.b16 %v1557, %v1556
        %v1577 = vpack.c.b16 %v1559, %v1558
        %v1578 = vpack.c.b16 %v1561, %v1560
        %v1579 = vpack.c.b16 %v1563, %v1562
        %v1596 = vunpack.c.l.b16 %v1291
        %v1597 = vunpack.c.l.b16 %v1294
        %v1598 = vunpack.c.l.b16 %v1298
        %v1599 = vunpack.c.l.b16 %v1301
        %v1600 = vunpack.c.l.b16 %v1305
        %v1601 = vunpack.c.l.b16 %v1308
        %v1602 = vunpack.c.l.b16 %v1312
        %v1603 = vunpack.c.l.b16 %v1315
        %v1604 = vunpack.c.l.b16 %v1319
        %v1605 = vunpack.c.l.b16 %v1322
        %v1606 = vunpack.c.l.b16 %v1326
        %v1607 = vunpack.c.l.b16 %v1329
        %v1608 = vunpack.c.l.b16 %v1333
        %v1609 = vunpack.c.l.b16 %v1336
        %v1610 = vunpack.c.l.b16 %v1340
        %v1611 = vunpack.c.l.b16 %v1343
        %v1612 = vunpack.c.l.b16 %v1347
        %v1613 = vunpack.c.l.b16 %v1350
        %v1614 = vunpack.c.l.b16 %v1354
        %v1615 = vunpack.c.l.b16 %v1357
        %v1616 = vunpack.c.l.b16 %v1361
        %v1617 = vunpack.c.l.b16 %v1364
        %v1618 = vunpack.c.l.b16 %v1368
        %v1619 = vunpack.c.l.b16 %v1371
        %v1620 = vunpack.c.l.b16 %v1375
        %v1621 = vunpack.c.l.b16 %v1378
        %v1622 = vunpack.c.l.b16 %v1382
        %v1623 = vunpack.c.l.b16 %v1385
        %v1624 = vunpack.c.l.b16 %v1389
        %v1625 = vunpack.c.l.b16 %v1392
        %v1626 = vunpack.c.l.b16 %v1396
        %v1627 = vunpack.c.l.b16 %v1399
        %v1628 = vpack.c.b16 %v1597, %v1596
        %v1629 = vpack.c.b16 %v1599, %v1598
        %v1630 = vpack.c.b16 %v1601, %v1600
        %v1631 = vpack.c.b16 %v1603, %v1602
        %v1632 = vpack.c.b16 %v1605, %v1604
        %v1633 = vpack.c.b16 %v1607, %v1606
        %v1634 = vpack.c.b16 %v1609, %v1608
        %v1635 = vpack.c.b16 %v1611, %v1610
        %v1636 = vpack.c.b16 %v1613, %v1612
        %v1637 = vpack.c.b16 %v1615, %v1614
        %v1638 = vpack.c.b16 %v1617, %v1616
        %v1639 = vpack.c.b16 %v1619, %v1618
        %v1640 = vpack.c.b16 %v1621, %v1620
        %v1641 = vpack.c.b16 %v1623, %v1622
        %v1642 = vpack.c.b16 %v1625, %v1624
        %v1643 = vpack.c.b16 %v1627, %v1626
        %v1660 = vunpack.c.l.b16 %v844
        %v1661 = vunpack.c.l.b16 %v845
        %v1662 = vpack.c.b16 %v1661, %v1660
        %v1664 = vunpack.c.l.b16 %v1413
        %v1665 = vunpack.c.l.b16 %v1423
        %v1666 = vpack.c.b16 %v1665, %v1664
        %v1668 = vunpack.c.l.b16 %v1430
        %v1669 = vunpack.c.l.b16 %v1433
        %v1670 = vpack.c.b16 %v1669, %v1668
        %v1672 = vunpack.c.l.b16 %v847
        %v1673 = vunpack.c.l.b16 %v848
        %v1674 = vpack.c.b16 %v1673, %v1672
        %v1676 = vunpack.c.l.b16 %v1447
        %v1677 = vunpack.c.l.b16 %v1457
        %v1678 = vpack.c.b16 %v1677, %v1676
        %v1680 = vunpack.c.l.b16 %v1464
        %v1681 = vunpack.c.l.b16 %v1467
        %v1682 = vpack.c.b16 %v1681, %v1680
        %v1684 = vld [vmem:[#allocation7] sm:$0xf]
        %v1685 = vld [vmem:[#allocation7 + $0x4] sm:$0xf]
        %v1686 = vld [vmem:[#allocation7 + $0x8] sm:$0xf]
        %v1687 = vld [vmem:[#allocation7 + $0xc] sm:$0xf]
        %v1688 = vld [vmem:[#allocation7 + $0x10] sm:$0xf]
        %v1689 = vld [vmem:[#allocation7 + $0x14] sm:$0xf]
        %v1690 = vld [vmem:[#allocation7 + $0x18] sm:$0xf]
        %v1691 = vld [vmem:[#allocation7 + $0x1c] sm:$0xf]
        %v1692 = vld [vmem:[#allocation7 + $0x20] sm:$0xf]
        %v1693 = vld [vmem:[#allocation7 + $0x24] sm:$0xf]
        %v1694 = vld [vmem:[#allocation7 + $0x28] sm:$0xf]
        %v1695 = vld [vmem:[#allocation7 + $0x2c] sm:$0xf]
        %v1696 = vld [vmem:[#allocation7 + $0x30] sm:$0xf]
        %v1697 = vld [vmem:[#allocation7 + $0x34] sm:$0xf]
        %v1698 = vld [vmem:[#allocation7 + $0x38] sm:$0xf]
        %v1699 = vld [vmem:[#allocation7 + $0x3c] sm:$0xf]
        %v1700 = vld [vmem:[#allocation7 + $0x40] sm:$0xf]
        %v1701 = vld [vmem:[#allocation7 + $0x44] sm:$0xf]
        %v1702 = vld [vmem:[#allocation7 + $0x48] sm:$0xf]
        %v1703 = vld [vmem:[#allocation7 + $0x4c] sm:$0xf]
        %v1704 = vld [vmem:[#allocation7 + $0x50] sm:$0xf]
        %v1705 = vld [vmem:[#allocation7 + $0x54] sm:$0xf]
        %v1706 = vld [vmem:[#allocation7 + $0x58] sm:$0xf]
        %v1707 = vld [vmem:[#allocation7 + $0x5c] sm:$0xf]
        %v1708 = vld [vmem:[#allocation7 + $0x60] sm:$0xf]
        %v1709 = vld [vmem:[#allocation7 + $0x64] sm:$0xf]
        %v1710 = vld [vmem:[#allocation7 + $0x68] sm:$0xf]
        %v1711 = vld [vmem:[#allocation7 + $0x6c] sm:$0xf]
        %v1712 = vld [vmem:[#allocation7 + $0x70] sm:$0xf]
        %v1713 = vld [vmem:[#allocation7 + $0x74] sm:$0xf]
        %v1714 = vld [vmem:[#allocation7 + $0x78] sm:$0xf]
        %v1715 = vld [vmem:[#allocation7 + $0x7c] sm:$0xf]
        %v1716 = vld [vmem:[#allocation7 + $0x80] sm:$0xf]
        %v1717 = vld [vmem:[#allocation7 + $0x84] sm:$0xf]
        %v1718 = vld [vmem:[#allocation7 + $0x88] sm:$0xf]
        %v1719 = vld [vmem:[#allocation7 + $0x8c] sm:$0xf]
        %v1720 = vld [vmem:[#allocation7 + $0x90] sm:$0xf]
        %v1721 = vld [vmem:[#allocation7 + $0x94] sm:$0xf]
        %v1722 = vld [vmem:[#allocation7 + $0x98] sm:$0xf]
        %v1723 = vld [vmem:[#allocation7 + $0x9c] sm:$0xf]
        %v1724 = vld [vmem:[#allocation7 + $0xa0] sm:$0xf]
        %v1725 = vld [vmem:[#allocation7 + $0xa4] sm:$0xf]
        %v1726 = vld [vmem:[#allocation7 + $0xa8] sm:$0xf]
        %v1727 = vld [vmem:[#allocation7 + $0xac] sm:$0xf]
        %v1728 = vld [vmem:[#allocation7 + $0xb0] sm:$0xf]
        %v1729 = vld [vmem:[#allocation7 + $0xb4] sm:$0xf]
        %v1730 = vld [vmem:[#allocation7 + $0xb8] sm:$0xf]
        %v1731 = vld [vmem:[#allocation7 + $0xbc] sm:$0xf]
        %v1732 = vld [vmem:[#allocation7 + $0xc0] sm:$0xf]
        %v1733 = vld [vmem:[#allocation7 + $0xc4] sm:$0xf]
        %v1734 = vld [vmem:[#allocation7 + $0xc8] sm:$0xf]
        %v1735 = vld [vmem:[#allocation7 + $0xcc] sm:$0xf]
        %v1736 = vld [vmem:[#allocation7 + $0xd0] sm:$0xf]
        %v1737 = vld [vmem:[#allocation7 + $0xd4] sm:$0xf]
        %v1738 = vld [vmem:[#allocation7 + $0xd8] sm:$0xf]
        %v1739 = vld [vmem:[#allocation7 + $0xdc] sm:$0xf]
        %v1740 = vld [vmem:[#allocation7 + $0xe0] sm:$0xf]
        %v1741 = vld [vmem:[#allocation7 + $0xe4] sm:$0xf]
        %v1742 = vld [vmem:[#allocation7 + $0xe8] sm:$0xf]
        %v1743 = vld [vmem:[#allocation7 + $0xec] sm:$0xf]
        %v1744 = vld [vmem:[#allocation7 + $0xf0] sm:$0xf]
        %v1745 = vld [vmem:[#allocation7 + $0xf4] sm:$0xf]
        %v1746 = vld [vmem:[#allocation7 + $0xf8] sm:$0xf]
        %v1747 = vld [vmem:[#allocation7 + $0xfc] sm:$0xf]
        %v1748 = vld [vmem:[#allocation7 + $0x100] sm:$0xf]
        %v1749 = vld [vmem:[#allocation7 + $0x104] sm:$0xf]
        %v1750 = vld [vmem:[#allocation7 + $0x108] sm:$0xf]
        %v1751 = vld [vmem:[#allocation7 + $0x10c] sm:$0xf]
        %v1752 = vld [vmem:[#allocation7 + $0x110] sm:$0xf]
        %v1753 = vld [vmem:[#allocation7 + $0x114] sm:$0xf]
        %v1754 = vld [vmem:[#allocation7 + $0x118] sm:$0xf]
        %v1755 = vld [vmem:[#allocation7 + $0x11c] sm:$0xf]
        %v1756 = vld [vmem:[#allocation7 + $0x120] sm:$0xf]
        %v1757 = vld [vmem:[#allocation7 + $0x124] sm:$0xf]
        %v1758 = vld [vmem:[#allocation7 + $0x128] sm:$0xf]
        %v1759 = vld [vmem:[#allocation7 + $0x12c] sm:$0xf]
        %v1760 = vld [vmem:[#allocation7 + $0x130] sm:$0xf]
        %v1761 = vld [vmem:[#allocation7 + $0x134] sm:$0xf]
        %v1762 = vld [vmem:[#allocation7 + $0x138] sm:$0xf]
        %v1763 = vld [vmem:[#allocation7 + $0x13c] sm:$0xf]
        %v1764 = vld [vmem:[#allocation7 + $0x140] sm:$0xf]
        %v1765 = vld [vmem:[#allocation7 + $0x144] sm:$0xf]
        %v1766 = vld [vmem:[#allocation7 + $0x148] sm:$0xf]
        %v1767 = vld [vmem:[#allocation7 + $0x14c] sm:$0xf]
        %v1768 = vld [vmem:[#allocation7 + $0x150] sm:$0xf]
        %v1769 = vld [vmem:[#allocation7 + $0x154] sm:$0xf]
        %v1770 = vld [vmem:[#allocation7 + $0x158] sm:$0xf]
        %v1771 = vld [vmem:[#allocation7 + $0x15c] sm:$0xf]
        %v1772 = vld [vmem:[#allocation7 + $0x160] sm:$0xf]
        %v1773 = vld [vmem:[#allocation7 + $0x164] sm:$0xf]
        %v1774 = vld [vmem:[#allocation7 + $0x168] sm:$0xf]
        %v1775 = vld [vmem:[#allocation7 + $0x16c] sm:$0xf]
        %v1776 = vld [vmem:[#allocation7 + $0x170] sm:$0xf]
        %v1777 = vld [vmem:[#allocation7 + $0x174] sm:$0xf]
        %v1778 = vld [vmem:[#allocation7 + $0x178] sm:$0xf]
        %v1779 = vld [vmem:[#allocation7 + $0x17c] sm:$0xf]
        %v1780 = vld [vmem:[#allocation7 + $0x180] sm:$0xf]
        %v1781 = vld [vmem:[#allocation7 + $0x184] sm:$0xf]
        %v1782 = vld [vmem:[#allocation7 + $0x188] sm:$0xf]
        %v1783 = vld [vmem:[#allocation7 + $0x18c] sm:$0xf]
        %v1784 = vld [vmem:[#allocation7 + $0x190] sm:$0xf]
        %v1785 = vld [vmem:[#allocation7 + $0x194] sm:$0xf]
        %v1786 = vld [vmem:[#allocation7 + $0x198] sm:$0xf]
        %v1787 = vld [vmem:[#allocation7 + $0x19c] sm:$0xf]
        %v1788 = vld [vmem:[#allocation7 + $0x1a0] sm:$0xf]
        %v1789 = vld [vmem:[#allocation7 + $0x1a4] sm:$0xf]
        %v1790 = vld [vmem:[#allocation7 + $0x1a8] sm:$0xf]
        %v1791 = vld [vmem:[#allocation7 + $0x1ac] sm:$0xf]
        %v1792 = vld [vmem:[#allocation7 + $0x1b0] sm:$0xf]
        %v1793 = vld [vmem:[#allocation7 + $0x1b4] sm:$0xf]
        %v1794 = vld [vmem:[#allocation7 + $0x1b8] sm:$0xf]
        %v1795 = vld [vmem:[#allocation7 + $0x1bc] sm:$0xf]
        %v1796 = vld [vmem:[#allocation7 + $0x1c0] sm:$0xf]
        %v1797 = vld [vmem:[#allocation7 + $0x1c4] sm:$0xf]
        %v1798 = vld [vmem:[#allocation7 + $0x1c8] sm:$0xf]
        %v1799 = vld [vmem:[#allocation7 + $0x1cc] sm:$0xf]
        %v1800 = vld [vmem:[#allocation7 + $0x1d0] sm:$0xf]
        %v1801 = vld [vmem:[#allocation7 + $0x1d4] sm:$0xf]
        %v1802 = vld [vmem:[#allocation7 + $0x1d8] sm:$0xf]
        %v1803 = vld [vmem:[#allocation7 + $0x1dc] sm:$0xf]
        %v1804 = vld [vmem:[#allocation7 + $0x1e0] sm:$0xf]
        %v1805 = vld [vmem:[#allocation7 + $0x1e4] sm:$0xf]
        %v1806 = vld [vmem:[#allocation7 + $0x1e8] sm:$0xf]
        %v1807 = vld [vmem:[#allocation7 + $0x1ec] sm:$0xf]
        %v1808 = vld [vmem:[#allocation7 + $0x1f0] sm:$0xf]
        %v1809 = vld [vmem:[#allocation7 + $0x1f4] sm:$0xf]
        %v1810 = vld [vmem:[#allocation7 + $0x1f8] sm:$0xf]
        %v1811 = vld [vmem:[#allocation7 + $0x1fc] sm:$0xf]
        %v1812 = vld [vmem:[#allocation7 + $0x200] sm:$0xf]
        %v1813 = vld [vmem:[#allocation7 + $0x204] sm:$0xf]
        %v1814 = vld [vmem:[#allocation7 + $0x208] sm:$0xf]
        %v1815 = vld [vmem:[#allocation7 + $0x20c] sm:$0xf]
        %v1816 = vld [vmem:[#allocation7 + $0x210] sm:$0xf]
        %v1817 = vld [vmem:[#allocation7 + $0x214] sm:$0xf]
        %v1818 = vld [vmem:[#allocation7 + $0x218] sm:$0xf]
        %v1819 = vld [vmem:[#allocation7 + $0x21c] sm:$0xf]
        %v1820 = vld [vmem:[#allocation7 + $0x220] sm:$0xf]
        %v1821 = vld [vmem:[#allocation7 + $0x224] sm:$0xf]
        %v1822 = vld [vmem:[#allocation7 + $0x228] sm:$0xf]
        %v1823 = vld [vmem:[#allocation7 + $0x22c] sm:$0xf]
        %v1824 = vld [vmem:[#allocation7 + $0x230] sm:$0xf]
        %v1825 = vld [vmem:[#allocation7 + $0x234] sm:$0xf]
        %v1826 = vld [vmem:[#allocation7 + $0x238] sm:$0xf]
        %v1827 = vld [vmem:[#allocation7 + $0x23c] sm:$0xf]
        %v1972 = vunpack.c.l.b16 %v1684
        %v1973 = vunpack.c.l.b16 %v1685
        %v1974 = vunpack.c.l.b16 %v1686
        %v1975 = vunpack.c.l.b16 %v1687
        %v1976 = vunpack.c.l.b16 %v1688
        %v1977 = vunpack.c.l.b16 %v1689
        %v1978 = vunpack.c.l.b16 %v1690
        %v1979 = vunpack.c.l.b16 %v1691
        %v1980 = vunpack.c.l.b16 %v1692
        %v1981 = vunpack.c.l.b16 %v1693
        %v1982 = vunpack.c.l.b16 %v1694
        %v1983 = vunpack.c.l.b16 %v1695
        %v1984 = vunpack.c.l.b16 %v1696
        %v1985 = vunpack.c.l.b16 %v1697
        %v1986 = vunpack.c.l.b16 %v1698
        %v1987 = vunpack.c.l.b16 %v1699
        %v1988 = vunpack.c.l.b16 %v1700
        %v1989 = vunpack.c.l.b16 %v1701
        %v1990 = vunpack.c.l.b16 %v1702
        %v1991 = vunpack.c.l.b16 %v1703
        %v1992 = vunpack.c.l.b16 %v1704
        %v1993 = vunpack.c.l.b16 %v1705
        %v1994 = vunpack.c.l.b16 %v1706
        %v1995 = vunpack.c.l.b16 %v1707
        %v1996 = vunpack.c.l.b16 %v1708
        %v1997 = vunpack.c.l.b16 %v1709
        %v1998 = vunpack.c.l.b16 %v1710
        %v1999 = vunpack.c.l.b16 %v1711
        %v2000 = vunpack.c.l.b16 %v1712
        %v2001 = vunpack.c.l.b16 %v1713
        %v2002 = vunpack.c.l.b16 %v1714
        %v2003 = vunpack.c.l.b16 %v1715
        %v2004 = vunpack.c.l.b16 %v1716
        %v2005 = vunpack.c.l.b16 %v1717
        %v2006 = vunpack.c.l.b16 %v1718
        %v2007 = vunpack.c.l.b16 %v1719
        %v2008 = vunpack.c.l.b16 %v1720
        %v2009 = vunpack.c.l.b16 %v1721
        %v2010 = vunpack.c.l.b16 %v1722
        %v2011 = vunpack.c.l.b16 %v1723
        %v2012 = vunpack.c.l.b16 %v1724
        %v2013 = vunpack.c.l.b16 %v1725
        %v2014 = vunpack.c.l.b16 %v1726
        %v2015 = vunpack.c.l.b16 %v1727
        %v2016 = vunpack.c.l.b16 %v1728
        %v2017 = vunpack.c.l.b16 %v1729
        %v2018 = vunpack.c.l.b16 %v1730
        %v2019 = vunpack.c.l.b16 %v1731
        %v2020 = vunpack.c.l.b16 %v1732
        %v2021 = vunpack.c.l.b16 %v1733
        %v2022 = vunpack.c.l.b16 %v1734
        %v2023 = vunpack.c.l.b16 %v1735
        %v2024 = vunpack.c.l.b16 %v1736
        %v2025 = vunpack.c.l.b16 %v1737
        %v2026 = vunpack.c.l.b16 %v1738
        %v2027 = vunpack.c.l.b16 %v1739
        %v2028 = vunpack.c.l.b16 %v1740
        %v2029 = vunpack.c.l.b16 %v1741
        %v2030 = vunpack.c.l.b16 %v1742
        %v2031 = vunpack.c.l.b16 %v1743
        %v2032 = vunpack.c.l.b16 %v1744
        %v2033 = vunpack.c.l.b16 %v1745
        %v2034 = vunpack.c.l.b16 %v1746
        %v2035 = vunpack.c.l.b16 %v1747
        %v2036 = vunpack.c.l.b16 %v1748
        %v2037 = vunpack.c.l.b16 %v1749
        %v2038 = vunpack.c.l.b16 %v1750
        %v2039 = vunpack.c.l.b16 %v1751
        %v2040 = vunpack.c.l.b16 %v1752
        %v2041 = vunpack.c.l.b16 %v1753
        %v2042 = vunpack.c.l.b16 %v1754
        %v2043 = vunpack.c.l.b16 %v1755
        %v2044 = vunpack.c.l.b16 %v1756
        %v2045 = vunpack.c.l.b16 %v1757
        %v2046 = vunpack.c.l.b16 %v1758
        %v2047 = vunpack.c.l.b16 %v1759
        %v2048 = vunpack.c.l.b16 %v1760
        %v2049 = vunpack.c.l.b16 %v1761
        %v2050 = vunpack.c.l.b16 %v1762
        %v2051 = vunpack.c.l.b16 %v1763
        %v2052 = vunpack.c.l.b16 %v1764
        %v2053 = vunpack.c.l.b16 %v1765
        %v2054 = vunpack.c.l.b16 %v1766
        %v2055 = vunpack.c.l.b16 %v1767
        %v2056 = vunpack.c.l.b16 %v1768
        %v2057 = vunpack.c.l.b16 %v1769
        %v2058 = vunpack.c.l.b16 %v1770
        %v2059 = vunpack.c.l.b16 %v1771
        %v2060 = vunpack.c.l.b16 %v1772
        %v2061 = vunpack.c.l.b16 %v1773
        %v2062 = vunpack.c.l.b16 %v1774
        %v2063 = vunpack.c.l.b16 %v1775
        %v2064 = vunpack.c.l.b16 %v1776
        %v2065 = vunpack.c.l.b16 %v1777
        %v2066 = vunpack.c.l.b16 %v1778
        %v2067 = vunpack.c.l.b16 %v1779
        %v2068 = vunpack.c.l.b16 %v1780
        %v2069 = vunpack.c.l.b16 %v1781
        %v2070 = vunpack.c.l.b16 %v1782
        %v2071 = vunpack.c.l.b16 %v1783
        %v2072 = vunpack.c.l.b16 %v1784
        %v2073 = vunpack.c.l.b16 %v1785
        %v2074 = vunpack.c.l.b16 %v1786
        %v2075 = vunpack.c.l.b16 %v1787
        %v2076 = vunpack.c.l.b16 %v1788
        %v2077 = vunpack.c.l.b16 %v1789
        %v2078 = vunpack.c.l.b16 %v1790
        %v2079 = vunpack.c.l.b16 %v1791
        %v2080 = vunpack.c.l.b16 %v1792
        %v2081 = vunpack.c.l.b16 %v1793
        %v2082 = vunpack.c.l.b16 %v1794
        %v2083 = vunpack.c.l.b16 %v1795
        %v2084 = vunpack.c.l.b16 %v1796
        %v2085 = vunpack.c.l.b16 %v1797
        %v2086 = vunpack.c.l.b16 %v1798
        %v2087 = vunpack.c.l.b16 %v1799
        %v2088 = vunpack.c.l.b16 %v1800
        %v2089 = vunpack.c.l.b16 %v1801
        %v2090 = vunpack.c.l.b16 %v1802
        %v2091 = vunpack.c.l.b16 %v1803
        %v2092 = vunpack.c.l.b16 %v1804
        %v2093 = vunpack.c.l.b16 %v1805
        %v2094 = vunpack.c.l.b16 %v1806
        %v2095 = vunpack.c.l.b16 %v1807
        %v2096 = vunpack.c.l.b16 %v1808
        %v2097 = vunpack.c.l.b16 %v1809
        %v2098 = vunpack.c.l.b16 %v1810
        %v2099 = vunpack.c.l.b16 %v1811
        %v2100 = vunpack.c.l.b16 %v1812
        %v2101 = vunpack.c.l.b16 %v1813
        %v2102 = vunpack.c.l.b16 %v1814
        %v2103 = vunpack.c.l.b16 %v1815
        %v2104 = vunpack.c.l.b16 %v1816
        %v2105 = vunpack.c.l.b16 %v1817
        %v2106 = vunpack.c.l.b16 %v1818
        %v2107 = vunpack.c.l.b16 %v1819
        %v2108 = vunpack.c.l.b16 %v1820
        %v2109 = vunpack.c.l.b16 %v1821
        %v2110 = vunpack.c.l.b16 %v1822
        %v2111 = vunpack.c.l.b16 %v1823
        %v2112 = vunpack.c.l.b16 %v1824
        %v2113 = vunpack.c.l.b16 %v1825
        %v2114 = vunpack.c.l.b16 %v1826
        %v2115 = vunpack.c.l.b16 %v1827
        %v2116 = vpack.c.b16 %v1973, %v1972
        %v2117 = vpack.c.b16 %v1975, %v1974
        %v2118 = vpack.c.b16 %v1977, %v1976
        %v2119 = vpack.c.b16 %v1979, %v1978
        %v2120 = vpack.c.b16 %v1981, %v1980
        %v2121 = vpack.c.b16 %v1983, %v1982
        %v2122 = vpack.c.b16 %v1985, %v1984
        %v2123 = vpack.c.b16 %v1987, %v1986
        %v2124 = vpack.c.b16 %v1989, %v1988
        %v2125 = vpack.c.b16 %v1991, %v1990
        %v2126 = vpack.c.b16 %v1993, %v1992
        %v2127 = vpack.c.b16 %v1995, %v1994
        %v2128 = vpack.c.b16 %v1997, %v1996
        %v2129 = vpack.c.b16 %v1999, %v1998
        %v2130 = vpack.c.b16 %v2001, %v2000
        %v2131 = vpack.c.b16 %v2003, %v2002
        %v2132 = vpack.c.b16 %v2005, %v2004
        %v2133 = vpack.c.b16 %v2007, %v2006
        %v2134 = vpack.c.b16 %v2009, %v2008
        %v2135 = vpack.c.b16 %v2011, %v2010
        %v2136 = vpack.c.b16 %v2013, %v2012
        %v2137 = vpack.c.b16 %v2015, %v2014
        %v2138 = vpack.c.b16 %v2017, %v2016
        %v2139 = vpack.c.b16 %v2019, %v2018
        %v2140 = vpack.c.b16 %v2021, %v2020
        %v2141 = vpack.c.b16 %v2023, %v2022
        %v2142 = vpack.c.b16 %v2025, %v2024
        %v2143 = vpack.c.b16 %v2027, %v2026
        %v2144 = vpack.c.b16 %v2029, %v2028
        %v2145 = vpack.c.b16 %v2031, %v2030
        %v2146 = vpack.c.b16 %v2033, %v2032
        %v2147 = vpack.c.b16 %v2035, %v2034
        %v2148 = vpack.c.b16 %v2037, %v2036
        %v2149 = vpack.c.b16 %v2039, %v2038
        %v2150 = vpack.c.b16 %v2041, %v2040
        %v2151 = vpack.c.b16 %v2043, %v2042
        %v2152 = vpack.c.b16 %v2045, %v2044
        %v2153 = vpack.c.b16 %v2047, %v2046
        %v2154 = vpack.c.b16 %v2049, %v2048
        %v2155 = vpack.c.b16 %v2051, %v2050
        %v2156 = vpack.c.b16 %v2053, %v2052
        %v2157 = vpack.c.b16 %v2055, %v2054
        %v2158 = vpack.c.b16 %v2057, %v2056
        %v2159 = vpack.c.b16 %v2059, %v2058
        %v2160 = vpack.c.b16 %v2061, %v2060
        %v2161 = vpack.c.b16 %v2063, %v2062
        %v2162 = vpack.c.b16 %v2065, %v2064
        %v2163 = vpack.c.b16 %v2067, %v2066
        %v2164 = vpack.c.b16 %v2069, %v2068
        %v2165 = vpack.c.b16 %v2071, %v2070
        %v2166 = vpack.c.b16 %v2073, %v2072
        %v2167 = vpack.c.b16 %v2075, %v2074
        %v2168 = vpack.c.b16 %v2077, %v2076
        %v2169 = vpack.c.b16 %v2079, %v2078
        %v2170 = vpack.c.b16 %v2081, %v2080
        %v2171 = vpack.c.b16 %v2083, %v2082
        %v2172 = vpack.c.b16 %v2085, %v2084
        %v2173 = vpack.c.b16 %v2087, %v2086
        %v2174 = vpack.c.b16 %v2089, %v2088
        %v2175 = vpack.c.b16 %v2091, %v2090
        %v2176 = vpack.c.b16 %v2093, %v2092
        %v2177 = vpack.c.b16 %v2095, %v2094
        %v2178 = vpack.c.b16 %v2097, %v2096
        %v2179 = vpack.c.b16 %v2099, %v2098
        %v2180 = vpack.c.b16 %v2101, %v2100
        %v2181 = vpack.c.b16 %v2103, %v2102
        %v2182 = vpack.c.b16 %v2105, %v2104
        %v2183 = vpack.c.b16 %v2107, %v2106
        %v2184 = vpack.c.b16 %v2109, %v2108
        %v2185 = vpack.c.b16 %v2111, %v2110
        %v2186 = vpack.c.b16 %v2113, %v2112
        %v2187 = vpack.c.b16 %v2115, %v2114
        %2260 = vmatprep.subr.bf16.mxu0 0
        %2261 = vmatpush1.bf16.msra.mxu0 %v2123
        %2262 = vmatprep.subr.bf16.mxu0 0
        %2263 = vmatpush1.bf16.msra.mxu0 %v2122
        %2264 = vmatprep.subr.bf16.mxu0 0
        %2265 = vmatpush1.bf16.msra.mxu0 %v2121
        %2266 = vmatprep.subr.bf16.mxu0 0
        %2267 = vmatpush1.bf16.msra.mxu0 %v2120
        %2268 = vmatprep.subr.bf16.mxu0 0
        %2269 = vmatpush1.bf16.msra.mxu0 %v2119
        %2270 = vmatprep.subr.bf16.mxu0 0
        %2271 = vmatpush1.bf16.msra.mxu0 %v2118
        %2272 = vmatprep.subr.bf16.mxu0 0
        %2273 = vmatpush1.bf16.msra.mxu0 %v2117
        %2274 = vmatprep.subr.bf16.mxu0 0
        %2275 = vmatpush1.bf16.msra.mxu0 %v2116
        %2276 = vmatprep.subr.bf16.mxu0 0
        %2277 = vmatpush2.bf16.msra.mxu0 %v2131
        %2278 = vmatprep.subr.bf16.mxu0 0
        %2279 = vmatpush2.bf16.msra.mxu0 %v2130
        %2280 = vmatprep.subr.bf16.mxu0 0
        %2281 = vmatpush2.bf16.msra.mxu0 %v2129
        %2282 = vmatprep.subr.bf16.mxu0 0
        %2283 = vmatpush2.bf16.msra.mxu0 %v2128
        %2284 = vmatprep.subr.bf16.mxu0 0
        %2285 = vmatpush2.bf16.msra.mxu0 %v2127
        %2286 = vmatprep.subr.bf16.mxu0 0
        %2287 = vmatpush2.bf16.msra.mxu0 %v2126
        %2288 = vmatprep.subr.bf16.mxu0 0
        %2289 = vmatpush2.bf16.msra.mxu0 %v2125
        %2290 = vmatprep.subr.bf16.mxu0 0
        %2291 = vmatpush2.bf16.msra.mxu0 %v2124
        %2292 = vmatprep.mubr.bf16.mxu0 %v1564
        %2293 = vmatmul.mubr.bf16.gmra.mxu0 %v1500
        %v2294 = vpop.f32.mrf.mxu0
        %v2295 = vadd.f32 0.0, %v2294
        %v2296 = vpop.f32.mrf.mxu0
        %v2297 = vpop.f32.mrf.mxu0
        %v2298 = vadd.f32 0.0, %v2297
        %v2299 = vpop.f32.mrf.mxu0
        %2300 = vmatprep.mubr.bf16.mxu0 %v1565
        %2301 = vmatmul.mubr.bf16.gmra.mxu0 %v1501
        %v2302 = vpop.f32.mrf.mxu0
        %v2303 = vadd.f32 0.0, %v2302
        %v2304 = vpop.f32.mrf.mxu0
        %v2305 = vpop.f32.mrf.mxu0
        %v2306 = vadd.f32 0.0, %v2305
        %v2307 = vpop.f32.mrf.mxu0
        %2308 = vmatprep.mubr.bf16.mxu0 %v1566
        %2309 = vmatmul.mubr.bf16.gmra.mxu0 %v1502
        %v2310 = vpop.f32.mrf.mxu0
        %v2311 = vadd.f32 0.0, %v2310
        %v2312 = vpop.f32.mrf.mxu0
        %v2313 = vpop.f32.mrf.mxu0
        %v2314 = vadd.f32 0.0, %v2313
        %v2315 = vpop.f32.mrf.mxu0
        %2316 = vmatprep.mubr.bf16.mxu0 %v1567
        %2317 = vmatmul.mubr.bf16.gmra.mxu0 %v1503
        %v2318 = vpop.f32.mrf.mxu0
        %v2319 = vadd.f32 0.0, %v2318
        %v2320 = vpop.f32.mrf.mxu0
        %v2321 = vpop.f32.mrf.mxu0
        %v2322 = vadd.f32 0.0, %v2321
        %v2323 = vpop.f32.mrf.mxu0
        %2324 = vmatprep.mubr.bf16.mxu0 %v1568
        %2325 = vmatmul.mubr.bf16.gmra.mxu0 %v1504
        %v2326 = vpop.f32.mrf.mxu0
        %v2327 = vadd.f32 0.0, %v2326
        %v2328 = vpop.f32.mrf.mxu0
        %v2329 = vpop.f32.mrf.mxu0
        %v2330 = vadd.f32 0.0, %v2329
        %v2331 = vpop.f32.mrf.mxu0
        %2332 = vmatprep.mubr.bf16.mxu0 %v1569
        %2333 = vmatmul.mubr.bf16.gmra.mxu0 %v1505
        %v2334 = vpop.f32.mrf.mxu0
        %v2335 = vadd.f32 0.0, %v2334
        %v2336 = vpop.f32.mrf.mxu0
        %v2337 = vpop.f32.mrf.mxu0
        %v2338 = vadd.f32 0.0, %v2337
        %v2339 = vpop.f32.mrf.mxu0
        %2340 = vmatprep.mubr.bf16.mxu0 %v1570
        %2341 = vmatmul.mubr.bf16.gmra.mxu0 %v1506
        %v2342 = vpop.f32.mrf.mxu0
        %v2343 = vadd.f32 0.0, %v2342
        %v2344 = vpop.f32.mrf.mxu0
        %v2345 = vpop.f32.mrf.mxu0
        %v2346 = vadd.f32 0.0, %v2345
        %v2347 = vpop.f32.mrf.mxu0
        %2348 = vmatprep.mubr.bf16.mxu0 %v1571
        %2349 = vmatmul.mubr.bf16.gmra.mxu0 %v1507
        %v2350 = vpop.f32.mrf.mxu0
        %v2351 = vadd.f32 0.0, %v2350
        %v2352 = vpop.f32.mrf.mxu0
        %v2353 = vpop.f32.mrf.mxu0
        %v2354 = vadd.f32 0.0, %v2353
        %v2355 = vpop.f32.mrf.mxu0
        %2356 = vmatprep.mubr.bf16.mxu0 %v1572
        %2357 = vmatmul.mubr.bf16.gmra.mxu0 %v1508
        %v2358 = vpop.f32.mrf.mxu0
        %v2359 = vadd.f32 0.0, %v2358
        %v2360 = vpop.f32.mrf.mxu0
        %v2361 = vpop.f32.mrf.mxu0
        %v2362 = vadd.f32 0.0, %v2361
        %v2363 = vpop.f32.mrf.mxu0
        %2364 = vmatprep.mubr.bf16.mxu0 %v1573
        %2365 = vmatmul.mubr.bf16.gmra.mxu0 %v1509
        %v2366 = vpop.f32.mrf.mxu0
        %v2367 = vadd.f32 0.0, %v2366
        %v2368 = vpop.f32.mrf.mxu0
        %v2369 = vpop.f32.mrf.mxu0
        %v2370 = vadd.f32 0.0, %v2369
        %v2371 = vpop.f32.mrf.mxu0
        %2372 = vmatprep.mubr.bf16.mxu0 %v1574
        %2373 = vmatmul.mubr.bf16.gmra.mxu0 %v1510
        %v2374 = vpop.f32.mrf.mxu0
        %v2375 = vadd.f32 0.0, %v2374
        %v2376 = vpop.f32.mrf.mxu0
        %v2377 = vpop.f32.mrf.mxu0
        %v2378 = vadd.f32 0.0, %v2377
        %v2379 = vpop.f32.mrf.mxu0
        %2380 = vmatprep.mubr.bf16.mxu0 %v1575
        %2381 = vmatmul.mubr.bf16.gmra.mxu0 %v1511
        %v2382 = vpop.f32.mrf.mxu0
        %v2383 = vadd.f32 0.0, %v2382
        %v2384 = vpop.f32.mrf.mxu0
        %v2385 = vpop.f32.mrf.mxu0
        %v2386 = vadd.f32 0.0, %v2385
        %v2387 = vpop.f32.mrf.mxu0
        %2388 = vmatprep.mubr.bf16.mxu0 %v1576
        %2389 = vmatmul.mubr.bf16.gmra.mxu0 %v1512
        %v2390 = vpop.f32.mrf.mxu0
        %v2391 = vadd.f32 0.0, %v2390
        %v2392 = vpop.f32.mrf.mxu0
        %v2393 = vpop.f32.mrf.mxu0
        %v2394 = vadd.f32 0.0, %v2393
        %v2395 = vpop.f32.mrf.mxu0
        %2396 = vmatprep.mubr.bf16.mxu0 %v1577
        %2397 = vmatmul.mubr.bf16.gmra.mxu0 %v1513
        %v2398 = vpop.f32.mrf.mxu0
        %v2399 = vadd.f32 0.0, %v2398
        %v2400 = vpop.f32.mrf.mxu0
        %v2401 = vpop.f32.mrf.mxu0
        %v2402 = vadd.f32 0.0, %v2401
        %v2403 = vpop.f32.mrf.mxu0
        %2404 = vmatprep.mubr.bf16.mxu0 %v1578
        %2405 = vmatmul.mubr.bf16.gmra.mxu0 %v1514
        %v2406 = vpop.f32.mrf.mxu0
        %v2407 = vadd.f32 0.0, %v2406
        %v2408 = vpop.f32.mrf.mxu0
        %v2409 = vpop.f32.mrf.mxu0
        %v2410 = vadd.f32 0.0, %v2409
        %v2411 = vpop.f32.mrf.mxu0
        %2412 = vmatprep.mubr.bf16.mxu0 %v1579
        %2413 = vmatmul.mubr.bf16.gmra.mxu0 %v1515
        %v2414 = vpop.f32.mrf.mxu0
        %v2415 = vadd.f32 0.0, %v2414
        %v2416 = vpop.f32.mrf.mxu0
        %v2417 = vpop.f32.mrf.mxu0
        %v2418 = vadd.f32 0.0, %v2417
        %v2419 = vpop.f32.mrf.mxu0
        %2420 = vdwg.mxu0
        %2421 = vmatprep.subr.bf16.mxu0 0
        %2422 = vmatpush1.bf16.msra.mxu0 %v2139
        %2423 = vmatprep.subr.bf16.mxu0 0
        %2424 = vmatpush1.bf16.msra.mxu0 %v2138
        %2425 = vmatprep.subr.bf16.mxu0 0
        %2426 = vmatpush1.bf16.msra.mxu0 %v2137
        %2427 = vmatprep.subr.bf16.mxu0 0
        %2428 = vmatpush1.bf16.msra.mxu0 %v2136
        %2429 = vmatprep.subr.bf16.mxu0 0
        %2430 = vmatpush1.bf16.msra.mxu0 %v2135
        %2431 = vmatprep.subr.bf16.mxu0 0
        %2432 = vmatpush1.bf16.msra.mxu0 %v2134
        %2433 = vmatprep.subr.bf16.mxu0 0
        %2434 = vmatpush1.bf16.msra.mxu0 %v2133
        %2435 = vmatprep.subr.bf16.mxu0 0
        %2436 = vmatpush1.bf16.msra.mxu0 %v2132
        %2437 = vmatprep.subr.bf16.mxu0 0
        %2438 = vmatpush2.bf16.msra.mxu0 %v2147
        %2439 = vmatprep.subr.bf16.mxu0 0
        %2440 = vmatpush2.bf16.msra.mxu0 %v2146
        %2441 = vmatprep.subr.bf16.mxu0 0
        %2442 = vmatpush2.bf16.msra.mxu0 %v2145
        %2443 = vmatprep.subr.bf16.mxu0 0
        %2444 = vmatpush2.bf16.msra.mxu0 %v2144
        %2445 = vmatprep.subr.bf16.mxu0 0
        %2446 = vmatpush2.bf16.msra.mxu0 %v2143
        %2447 = vmatprep.subr.bf16.mxu0 0
        %2448 = vmatpush2.bf16.msra.mxu0 %v2142
        %2449 = vmatprep.subr.bf16.mxu0 0
        %2450 = vmatpush2.bf16.msra.mxu0 %v2141
        %2451 = vmatprep.subr.bf16.mxu0 0
        %2452 = vmatpush2.bf16.msra.mxu0 %v2140
        %2453 = vmatprep.mubr.bf16.mxu0 %v1501
        %2454 = vmatmul.mubr.bf16.gmra.mxu0 %v1628
        %v2455 = vpop.f32.mrf.mxu0
        %v2456 = vadd.f32 %v2295, %v2455
        %v2457 = vpop.f32.mrf.mxu0
        %v2458 = vpop.f32.mrf.mxu0
        %v2459 = vadd.f32 %v2298, %v2458
        %v2460 = vpop.f32.mrf.mxu0
        %2461 = vmatprep.mubr.bf16.mxu0 %v1502
        %2462 = vmatmul.mubr.bf16.gmra.mxu0 %v1629
        %v2463 = vpop.f32.mrf.mxu0
        %v2464 = vadd.f32 %v2303, %v2463
        %v2465 = vpop.f32.mrf.mxu0
        %v2466 = vpop.f32.mrf.mxu0
        %v2467 = vadd.f32 %v2306, %v2466
        %v2468 = vpop.f32.mrf.mxu0
        %2469 = vmatprep.mubr.bf16.mxu0 %v1503
        %2470 = vmatmul.mubr.bf16.gmra.mxu0 %v1630
        %v2471 = vpop.f32.mrf.mxu0
        %v2472 = vadd.f32 %v2311, %v2471
        %v2473 = vpop.f32.mrf.mxu0
        %v2474 = vpop.f32.mrf.mxu0
        %v2475 = vadd.f32 %v2314, %v2474
        %v2476 = vpop.f32.mrf.mxu0
        %2477 = vmatprep.mubr.bf16.mxu0 %v1504
        %2478 = vmatmul.mubr.bf16.gmra.mxu0 %v1631
        %v2479 = vpop.f32.mrf.mxu0
        %v2480 = vadd.f32 %v2319, %v2479
        %v2481 = vpop.f32.mrf.mxu0
        %v2482 = vpop.f32.mrf.mxu0
        %v2483 = vadd.f32 %v2322, %v2482
        %v2484 = vpop.f32.mrf.mxu0
        %2485 = vmatprep.mubr.bf16.mxu0 %v1505
        %2486 = vmatmul.mubr.bf16.gmra.mxu0 %v1632
        %v2487 = vpop.f32.mrf.mxu0
        %v2488 = vadd.f32 %v2327, %v2487
        %v2489 = vpop.f32.mrf.mxu0
        %v2490 = vpop.f32.mrf.mxu0
        %v2491 = vadd.f32 %v2330, %v2490
        %v2492 = vpop.f32.mrf.mxu0
        %2493 = vmatprep.mubr.bf16.mxu0 %v1506
        %2494 = vmatmul.mubr.bf16.gmra.mxu0 %v1633
        %v2495 = vpop.f32.mrf.mxu0
        %v2496 = vadd.f32 %v2335, %v2495
        %v2497 = vpop.f32.mrf.mxu0
        %v2498 = vpop.f32.mrf.mxu0
        %v2499 = vadd.f32 %v2338, %v2498
        %v2500 = vpop.f32.mrf.mxu0
        %2501 = vmatprep.mubr.bf16.mxu0 %v1507
        %2502 = vmatmul.mubr.bf16.gmra.mxu0 %v1634
        %v2503 = vpop.f32.mrf.mxu0
        %v2504 = vadd.f32 %v2343, %v2503
        %v2505 = vpop.f32.mrf.mxu0
        %v2506 = vpop.f32.mrf.mxu0
        %v2507 = vadd.f32 %v2346, %v2506
        %v2508 = vpop.f32.mrf.mxu0
        %2509 = vmatprep.mubr.bf16.mxu0 %v1508
        %2510 = vmatmul.mubr.bf16.gmra.mxu0 %v1635
        %v2511 = vpop.f32.mrf.mxu0
        %v2512 = vadd.f32 %v2351, %v2511
        %v2513 = vpop.f32.mrf.mxu0
        %v2514 = vpop.f32.mrf.mxu0
        %v2515 = vadd.f32 %v2354, %v2514
        %v2516 = vpop.f32.mrf.mxu0
        %2517 = vmatprep.mubr.bf16.mxu0 %v1509
        %2518 = vmatmul.mubr.bf16.gmra.mxu0 %v1636
        %v2519 = vpop.f32.mrf.mxu0
        %v2520 = vadd.f32 %v2359, %v2519
        %v2521 = vpop.f32.mrf.mxu0
        %v2522 = vpop.f32.mrf.mxu0
        %v2523 = vadd.f32 %v2362, %v2522
        %v2524 = vpop.f32.mrf.mxu0
        %2525 = vmatprep.mubr.bf16.mxu0 %v1510
        %2526 = vmatmul.mubr.bf16.gmra.mxu0 %v1637
        %v2527 = vpop.f32.mrf.mxu0
        %v2528 = vadd.f32 %v2367, %v2527
        %v2529 = vpop.f32.mrf.mxu0
        %v2530 = vpop.f32.mrf.mxu0
        %v2531 = vadd.f32 %v2370, %v2530
        %v2532 = vpop.f32.mrf.mxu0
        %2533 = vmatprep.mubr.bf16.mxu0 %v1511
        %2534 = vmatmul.mubr.bf16.gmra.mxu0 %v1638
        %v2535 = vpop.f32.mrf.mxu0
        %v2536 = vadd.f32 %v2375, %v2535
        %v2537 = vpop.f32.mrf.mxu0
        %v2538 = vpop.f32.mrf.mxu0
        %v2539 = vadd.f32 %v2378, %v2538
        %v2540 = vpop.f32.mrf.mxu0
        %2541 = vmatprep.mubr.bf16.mxu0 %v1512
        %2542 = vmatmul.mubr.bf16.gmra.mxu0 %v1639
        %v2543 = vpop.f32.mrf.mxu0
        %v2544 = vadd.f32 %v2383, %v2543
        %v2545 = vpop.f32.mrf.mxu0
        %v2546 = vpop.f32.mrf.mxu0
        %v2547 = vadd.f32 %v2386, %v2546
        %v2548 = vpop.f32.mrf.mxu0
        %2549 = vmatprep.mubr.bf16.mxu0 %v1513
        %2550 = vmatmul.mubr.bf16.gmra.mxu0 %v1640
        %v2551 = vpop.f32.mrf.mxu0
        %v2552 = vadd.f32 %v2391, %v2551
        %v2553 = vpop.f32.mrf.mxu0
        %v2554 = vpop.f32.mrf.mxu0
        %v2555 = vadd.f32 %v2394, %v2554
        %v2556 = vpop.f32.mrf.mxu0
        %2557 = vmatprep.mubr.bf16.mxu0 %v1514
        %2558 = vmatmul.mubr.bf16.gmra.mxu0 %v1641
        %v2559 = vpop.f32.mrf.mxu0
        %v2560 = vadd.f32 %v2399, %v2559
        %v2561 = vpop.f32.mrf.mxu0
        %v2562 = vpop.f32.mrf.mxu0
        %v2563 = vadd.f32 %v2402, %v2562
        %v2564 = vpop.f32.mrf.mxu0
        %2565 = vmatprep.mubr.bf16.mxu0 %v1515
        %2566 = vmatmul.mubr.bf16.gmra.mxu0 %v1642
        %v2567 = vpop.f32.mrf.mxu0
        %v2568 = vadd.f32 %v2407, %v2567
        %v2569 = vpop.f32.mrf.mxu0
        %v2570 = vpop.f32.mrf.mxu0
        %v2571 = vadd.f32 %v2410, %v2570
        %v2572 = vpop.f32.mrf.mxu0
        %2573 = vmatprep.mubr.bf16.mxu0 %v1662
        %2574 = vmatmul.mubr.bf16.gmra.mxu0 %v1643
        %v2575 = vpop.f32.mrf.mxu0
        %v2576 = vadd.f32 %v2415, %v2575
        %v2577 = vpop.f32.mrf.mxu0
        %v2578 = vpop.f32.mrf.mxu0
        %v2579 = vadd.f32 %v2418, %v2578
        %v2580 = vpop.f32.mrf.mxu0
        %2581 = vdwg.mxu0
        %2582 = vmatprep.subr.bf16.mxu0 0
        %2583 = vmatpush1.bf16.msra.mxu0 %v2155
        %2584 = vmatprep.subr.bf16.mxu0 0
        %2585 = vmatpush1.bf16.msra.mxu0 %v2154
        %2586 = vmatprep.subr.bf16.mxu0 0
        %2587 = vmatpush1.bf16.msra.mxu0 %v2153
        %2588 = vmatprep.subr.bf16.mxu0 0
        %2589 = vmatpush1.bf16.msra.mxu0 %v2152
        %2590 = vmatprep.subr.bf16.mxu0 0
        %2591 = vmatpush1.bf16.msra.mxu0 %v2151
        %2592 = vmatprep.subr.bf16.mxu0 0
        %2593 = vmatpush1.bf16.msra.mxu0 %v2150
        %2594 = vmatprep.subr.bf16.mxu0 0
        %2595 = vmatpush1.bf16.msra.mxu0 %v2149
        %2596 = vmatprep.subr.bf16.mxu0 0
        %2597 = vmatpush1.bf16.msra.mxu0 %v2148
        %2598 = vmatprep.subr.bf16.mxu0 0
        %2599 = vmatpush2.bf16.msra.mxu0 %v2163
        %2600 = vmatprep.subr.bf16.mxu0 0
        %2601 = vmatpush2.bf16.msra.mxu0 %v2162
        %2602 = vmatprep.subr.bf16.mxu0 0
        %2603 = vmatpush2.bf16.msra.mxu0 %v2161
        %2604 = vmatprep.subr.bf16.mxu0 0
        %2605 = vmatpush2.bf16.msra.mxu0 %v2160
        %2606 = vmatprep.subr.bf16.mxu0 0
        %2607 = vmatpush2.bf16.msra.mxu0 %v2159
        %2608 = vmatprep.subr.bf16.mxu0 0
        %2609 = vmatpush2.bf16.msra.mxu0 %v2158
        %2610 = vmatprep.subr.bf16.mxu0 0
        %2611 = vmatpush2.bf16.msra.mxu0 %v2157
        %2612 = vmatprep.subr.bf16.mxu0 0
        %2613 = vmatpush2.bf16.msra.mxu0 %v2156
        %2614 = vmatprep.mubr.bf16.mxu0 %v1629
        %2615 = vmatmul.mubr.bf16.gmra.mxu0 %v1565
        %v2616 = vpop.f32.mrf.mxu0
        %v2617 = vadd.f32 %v2456, %v2616
        %v2618 = vpop.f32.mrf.mxu0
        %v2619 = vpop.f32.mrf.mxu0
        %v2620 = vadd.f32 %v2459, %v2619
        %v2621 = vpop.f32.mrf.mxu0
        %2622 = vmatprep.mubr.bf16.mxu0 %v1630
        %2623 = vmatmul.mubr.bf16.gmra.mxu0 %v1566
        %v2624 = vpop.f32.mrf.mxu0
        %v2625 = vadd.f32 %v2464, %v2624
        %v2626 = vpop.f32.mrf.mxu0
        %v2627 = vpop.f32.mrf.mxu0
        %v2628 = vadd.f32 %v2467, %v2627
        %v2629 = vpop.f32.mrf.mxu0
        %2630 = vmatprep.mubr.bf16.mxu0 %v1631
        %2631 = vmatmul.mubr.bf16.gmra.mxu0 %v1567
        %v2632 = vpop.f32.mrf.mxu0
        %v2633 = vadd.f32 %v2472, %v2632
        %v2634 = vpop.f32.mrf.mxu0
        %v2635 = vpop.f32.mrf.mxu0
        %v2636 = vadd.f32 %v2475, %v2635
        %v2637 = vpop.f32.mrf.mxu0
        %2638 = vmatprep.mubr.bf16.mxu0 %v1632
        %2639 = vmatmul.mubr.bf16.gmra.mxu0 %v1568
        %v2640 = vpop.f32.mrf.mxu0
        %v2641 = vadd.f32 %v2480, %v2640
        %v2642 = vpop.f32.mrf.mxu0
        %v2643 = vpop.f32.mrf.mxu0
        %v2644 = vadd.f32 %v2483, %v2643
        %v2645 = vpop.f32.mrf.mxu0
        %2646 = vmatprep.mubr.bf16.mxu0 %v1633
        %2647 = vmatmul.mubr.bf16.gmra.mxu0 %v1569
        %v2648 = vpop.f32.mrf.mxu0
        %v2649 = vadd.f32 %v2488, %v2648
        %v2650 = vpop.f32.mrf.mxu0
        %v2651 = vpop.f32.mrf.mxu0
        %v2652 = vadd.f32 %v2491, %v2651
        %v2653 = vpop.f32.mrf.mxu0
        %2654 = vmatprep.mubr.bf16.mxu0 %v1634
        %2655 = vmatmul.mubr.bf16.gmra.mxu0 %v1570
        %v2656 = vpop.f32.mrf.mxu0
        %v2657 = vadd.f32 %v2496, %v2656
        %v2658 = vpop.f32.mrf.mxu0
        %v2659 = vpop.f32.mrf.mxu0
        %v2660 = vadd.f32 %v2499, %v2659
        %v2661 = vpop.f32.mrf.mxu0
        %2662 = vmatprep.mubr.bf16.mxu0 %v1635
        %2663 = vmatmul.mubr.bf16.gmra.mxu0 %v1571
        %v2664 = vpop.f32.mrf.mxu0
        %v2665 = vadd.f32 %v2504, %v2664
        %v2666 = vpop.f32.mrf.mxu0
        %v2667 = vpop.f32.mrf.mxu0
        %v2668 = vadd.f32 %v2507, %v2667
        %v2669 = vpop.f32.mrf.mxu0
        %2670 = vmatprep.mubr.bf16.mxu0 %v1636
        %2671 = vmatmul.mubr.bf16.gmra.mxu0 %v1572
        %v2672 = vpop.f32.mrf.mxu0
        %v2673 = vadd.f32 %v2512, %v2672
        %v2674 = vpop.f32.mrf.mxu0
        %v2675 = vpop.f32.mrf.mxu0
        %v2676 = vadd.f32 %v2515, %v2675
        %v2677 = vpop.f32.mrf.mxu0
        %2678 = vmatprep.mubr.bf16.mxu0 %v1637
        %2679 = vmatmul.mubr.bf16.gmra.mxu0 %v1573
        %v2680 = vpop.f32.mrf.mxu0
        %v2681 = vadd.f32 %v2520, %v2680
        %v2682 = vpop.f32.mrf.mxu0
        %v2683 = vpop.f32.mrf.mxu0
        %v2684 = vadd.f32 %v2523, %v2683
        %v2685 = vpop.f32.mrf.mxu0
        %2686 = vmatprep.mubr.bf16.mxu0 %v1638
        %2687 = vmatmul.mubr.bf16.gmra.mxu0 %v1574
        %v2688 = vpop.f32.mrf.mxu0
        %v2689 = vadd.f32 %v2528, %v2688
        %v2690 = vpop.f32.mrf.mxu0
        %v2691 = vpop.f32.mrf.mxu0
        %v2692 = vadd.f32 %v2531, %v2691
        %v2693 = vpop.f32.mrf.mxu0
        %2694 = vmatprep.mubr.bf16.mxu0 %v1639
        %2695 = vmatmul.mubr.bf16.gmra.mxu0 %v1575
        %v2696 = vpop.f32.mrf.mxu0
        %v2697 = vadd.f32 %v2536, %v2696
        %v2698 = vpop.f32.mrf.mxu0
        %v2699 = vpop.f32.mrf.mxu0
        %v2700 = vadd.f32 %v2539, %v2699
        %v2701 = vpop.f32.mrf.mxu0
        %2702 = vmatprep.mubr.bf16.mxu0 %v1640
        %2703 = vmatmul.mubr.bf16.gmra.mxu0 %v1576
        %v2704 = vpop.f32.mrf.mxu0
        %v2705 = vadd.f32 %v2544, %v2704
        %v2706 = vpop.f32.mrf.mxu0
        %v2707 = vpop.f32.mrf.mxu0
        %v2708 = vadd.f32 %v2547, %v2707
        %v2709 = vpop.f32.mrf.mxu0
        %2710 = vmatprep.mubr.bf16.mxu0 %v1641
        %2711 = vmatmul.mubr.bf16.gmra.mxu0 %v1577
        %v2712 = vpop.f32.mrf.mxu0
        %v2713 = vadd.f32 %v2552, %v2712
        %v2714 = vpop.f32.mrf.mxu0
        %v2715 = vpop.f32.mrf.mxu0
        %v2716 = vadd.f32 %v2555, %v2715
        %v2717 = vpop.f32.mrf.mxu0
        %2718 = vmatprep.mubr.bf16.mxu0 %v1642
        %2719 = vmatmul.mubr.bf16.gmra.mxu0 %v1578
        %v2720 = vpop.f32.mrf.mxu0
        %v2721 = vadd.f32 %v2560, %v2720
        %v2722 = vpop.f32.mrf.mxu0
        %v2723 = vpop.f32.mrf.mxu0
        %v2724 = vadd.f32 %v2563, %v2723
        %v2725 = vpop.f32.mrf.mxu0
        %2726 = vmatprep.mubr.bf16.mxu0 %v1643
        %2727 = vmatmul.mubr.bf16.gmra.mxu0 %v1579
        %v2728 = vpop.f32.mrf.mxu0
        %v2729 = vadd.f32 %v2568, %v2728
        %v2730 = vpop.f32.mrf.mxu0
        %v2731 = vpop.f32.mrf.mxu0
        %v2732 = vadd.f32 %v2571, %v2731
        %v2733 = vpop.f32.mrf.mxu0
        %2734 = vmatprep.mubr.bf16.mxu0 %v1670
        %2735 = vmatmul.mubr.bf16.gmra.mxu0 %v1666
        %v2736 = vpop.f32.mrf.mxu0
        %v2737 = vadd.f32 %v2576, %v2736
        %v2738 = vpop.f32.mrf.mxu0
        %v2739 = vpop.f32.mrf.mxu0
        %v2740 = vadd.f32 %v2579, %v2739
        %v2741 = vpop.f32.mrf.mxu0
        %2742 = vdwg.mxu0
        %2743 = vmatprep.subr.bf16.mxu0 0
        %2744 = vmatpush1.bf16.msra.mxu0 %v2171
        %2745 = vmatprep.subr.bf16.mxu0 0
        %2746 = vmatpush1.bf16.msra.mxu0 %v2170
        %2747 = vmatprep.subr.bf16.mxu0 0
        %2748 = vmatpush1.bf16.msra.mxu0 %v2169
        %2749 = vmatprep.subr.bf16.mxu0 0
        %2750 = vmatpush1.bf16.msra.mxu0 %v2168
        %2751 = vmatprep.subr.bf16.mxu0 0
        %2752 = vmatpush1.bf16.msra.mxu0 %v2167
        %2753 = vmatprep.subr.bf16.mxu0 0
        %2754 = vmatpush1.bf16.msra.mxu0 %v2166
        %2755 = vmatprep.subr.bf16.mxu0 0
        %2756 = vmatpush1.bf16.msra.mxu0 %v2165
        %2757 = vmatprep.subr.bf16.mxu0 0
        %2758 = vmatpush1.bf16.msra.mxu0 %v2164
        %2759 = vmatprep.subr.bf16.mxu0 0
        %2760 = vmatpush2.bf16.msra.mxu0 %v2179
        %2761 = vmatprep.subr.bf16.mxu0 0
        %2762 = vmatpush2.bf16.msra.mxu0 %v2178
        %2763 = vmatprep.subr.bf16.mxu0 0
        %2764 = vmatpush2.bf16.msra.mxu0 %v2177
        %2765 = vmatprep.subr.bf16.mxu0 0
        %2766 = vmatpush2.bf16.msra.mxu0 %v2176
        %2767 = vmatprep.subr.bf16.mxu0 0
        %2768 = vmatpush2.bf16.msra.mxu0 %v2175
        %2769 = vmatprep.subr.bf16.mxu0 0
        %2770 = vmatpush2.bf16.msra.mxu0 %v2174
        %2771 = vmatprep.subr.bf16.mxu0 0
        %2772 = vmatpush2.bf16.msra.mxu0 %v2173
        %2773 = vmatprep.subr.bf16.mxu0 0
        %2774 = vmatpush2.bf16.msra.mxu0 %v2172
        %2775 = vmatprep.mubr.bf16.mxu0 %v1566
        %2776 = vmatmul.mubr.bf16.gmra.mxu0 %v1502
        %v2777 = vpop.f32.mrf.mxu0
        %v2778 = vadd.f32 %v2617, %v2777
        %v2779 = vpop.f32.mrf.mxu0
        %v2780 = vpop.f32.mrf.mxu0
        %v2781 = vadd.f32 %v2620, %v2780
        %v2782 = vpop.f32.mrf.mxu0
        %2783 = vmatprep.mubr.bf16.mxu0 %v1567
        %2784 = vmatmul.mubr.bf16.gmra.mxu0 %v1503
        %v2785 = vpop.f32.mrf.mxu0
        %v2786 = vadd.f32 %v2625, %v2785
        %v2787 = vpop.f32.mrf.mxu0
        %v2788 = vpop.f32.mrf.mxu0
        %v2789 = vadd.f32 %v2628, %v2788
        %v2790 = vpop.f32.mrf.mxu0
        %2791 = vmatprep.mubr.bf16.mxu0 %v1568
        %2792 = vmatmul.mubr.bf16.gmra.mxu0 %v1504
        %v2793 = vpop.f32.mrf.mxu0
        %v2794 = vadd.f32 %v2633, %v2793
        %v2795 = vpop.f32.mrf.mxu0
        %v2796 = vpop.f32.mrf.mxu0
        %v2797 = vadd.f32 %v2636, %v2796
        %v2798 = vpop.f32.mrf.mxu0
        %2799 = vmatprep.mubr.bf16.mxu0 %v1569
        %2800 = vmatmul.mubr.bf16.gmra.mxu0 %v1505
        %v2801 = vpop.f32.mrf.mxu0
        %v2802 = vadd.f32 %v2641, %v2801
        %v2803 = vpop.f32.mrf.mxu0
        %v2804 = vpop.f32.mrf.mxu0
        %v2805 = vadd.f32 %v2644, %v2804
        %v2806 = vpop.f32.mrf.mxu0
        %2807 = vmatprep.mubr.bf16.mxu0 %v1570
        %2808 = vmatmul.mubr.bf16.gmra.mxu0 %v1506
        %v2809 = vpop.f32.mrf.mxu0
        %v2810 = vadd.f32 %v2649, %v2809
        %v2811 = vpop.f32.mrf.mxu0
        %v2812 = vpop.f32.mrf.mxu0
        %v2813 = vadd.f32 %v2652, %v2812
        %v2814 = vpop.f32.mrf.mxu0
        %2815 = vmatprep.mubr.bf16.mxu0 %v1571
        %2816 = vmatmul.mubr.bf16.gmra.mxu0 %v1507
        %v2817 = vpop.f32.mrf.mxu0
        %v2818 = vadd.f32 %v2657, %v2817
        %v2819 = vpop.f32.mrf.mxu0
        %v2820 = vpop.f32.mrf.mxu0
        %v2821 = vadd.f32 %v2660, %v2820
        %v2822 = vpop.f32.mrf.mxu0
        %2823 = vmatprep.mubr.bf16.mxu0 %v1572
        %2824 = vmatmul.mubr.bf16.gmra.mxu0 %v1508
        %v2825 = vpop.f32.mrf.mxu0
        %v2826 = vadd.f32 %v2665, %v2825
        %v2827 = vpop.f32.mrf.mxu0
        %v2828 = vpop.f32.mrf.mxu0
        %v2829 = vadd.f32 %v2668, %v2828
        %v2830 = vpop.f32.mrf.mxu0
        %2831 = vmatprep.mubr.bf16.mxu0 %v1573
        %2832 = vmatmul.mubr.bf16.gmra.mxu0 %v1509
        %v2833 = vpop.f32.mrf.mxu0
        %v2834 = vadd.f32 %v2673, %v2833
        %v2835 = vpop.f32.mrf.mxu0
        %v2836 = vpop.f32.mrf.mxu0
        %v2837 = vadd.f32 %v2676, %v2836
        %v2838 = vpop.f32.mrf.mxu0
        %2839 = vmatprep.mubr.bf16.mxu0 %v1574
        %2840 = vmatmul.mubr.bf16.gmra.mxu0 %v1510
        %v2841 = vpop.f32.mrf.mxu0
        %v2842 = vadd.f32 %v2681, %v2841
        %v2843 = vpop.f32.mrf.mxu0
        %v2844 = vpop.f32.mrf.mxu0
        %v2845 = vadd.f32 %v2684, %v2844
        %v2846 = vpop.f32.mrf.mxu0
        %2847 = vmatprep.mubr.bf16.mxu0 %v1575
        %2848 = vmatmul.mubr.bf16.gmra.mxu0 %v1511
        %v2849 = vpop.f32.mrf.mxu0
        %v2850 = vadd.f32 %v2689, %v2849
        %v2851 = vpop.f32.mrf.mxu0
        %v2852 = vpop.f32.mrf.mxu0
        %v2853 = vadd.f32 %v2692, %v2852
        %v2854 = vpop.f32.mrf.mxu0
        %2855 = vmatprep.mubr.bf16.mxu0 %v1576
        %2856 = vmatmul.mubr.bf16.gmra.mxu0 %v1512
        %v2857 = vpop.f32.mrf.mxu0
        %v2858 = vadd.f32 %v2697, %v2857
        %v2859 = vpop.f32.mrf.mxu0
        %v2860 = vpop.f32.mrf.mxu0
        %v2861 = vadd.f32 %v2700, %v2860
        %v2862 = vpop.f32.mrf.mxu0
        %2863 = vmatprep.mubr.bf16.mxu0 %v1577
        %2864 = vmatmul.mubr.bf16.gmra.mxu0 %v1513
        %v2865 = vpop.f32.mrf.mxu0
        %v2866 = vadd.f32 %v2705, %v2865
        %v2867 = vpop.f32.mrf.mxu0
        %v2868 = vpop.f32.mrf.mxu0
        %v2869 = vadd.f32 %v2708, %v2868
        %v2870 = vpop.f32.mrf.mxu0
        %2871 = vmatprep.mubr.bf16.mxu0 %v1578
        %2872 = vmatmul.mubr.bf16.gmra.mxu0 %v1514
        %v2873 = vpop.f32.mrf.mxu0
        %v2874 = vadd.f32 %v2713, %v2873
        %v2875 = vpop.f32.mrf.mxu0
        %v2876 = vpop.f32.mrf.mxu0
        %v2877 = vadd.f32 %v2716, %v2876
        %v2878 = vpop.f32.mrf.mxu0
        %2879 = vmatprep.mubr.bf16.mxu0 %v1579
        %2880 = vmatmul.mubr.bf16.gmra.mxu0 %v1515
        %v2881 = vpop.f32.mrf.mxu0
        %v2882 = vadd.f32 %v2721, %v2881
        %v2883 = vpop.f32.mrf.mxu0
        %v2884 = vpop.f32.mrf.mxu0
        %v2885 = vadd.f32 %v2724, %v2884
        %v2886 = vpop.f32.mrf.mxu0
        %2887 = vmatprep.mubr.bf16.mxu0 %v1666
        %2888 = vmatmul.mubr.bf16.gmra.mxu0 %v1662
        %v2889 = vpop.f32.mrf.mxu0
        %v2890 = vadd.f32 %v2729, %v2889
        %v2891 = vpop.f32.mrf.mxu0
        %v2892 = vpop.f32.mrf.mxu0
        %v2893 = vadd.f32 %v2732, %v2892
        %v2894 = vpop.f32.mrf.mxu0
        %2895 = vmatprep.mubr.bf16.mxu0 %v1678
        %2896 = vmatmul.mubr.bf16.gmra.mxu0 %v1674
        %v2897 = vpop.f32.mrf.mxu0
        %v2898 = vadd.f32 %v2737, %v2897
        %v2899 = vpop.f32.mrf.mxu0
        %v2900 = vpop.f32.mrf.mxu0
        %v2901 = vadd.f32 %v2740, %v2900
        %v2902 = vpop.f32.mrf.mxu0
        %2903 = vdwg.mxu0
        %2904 = vmatprep.subr.bf16.mxu0 0
        %2905 = vmatpush1.bf16.msra.mxu0 %v2187
        %2906 = vmatprep.subr.bf16.mxu0 0
        %2907 = vmatpush1.bf16.msra.mxu0 %v2186
        %2908 = vmatprep.subr.bf16.mxu0 0
        %2909 = vmatpush1.bf16.msra.mxu0 %v2185
        %2910 = vmatprep.subr.bf16.mxu0 0
        %2911 = vmatpush1.bf16.msra.mxu0 %v2184
        %2912 = vmatprep.subr.bf16.mxu0 0
        %2913 = vmatpush1.bf16.msra.mxu0 %v2183
        %2914 = vmatprep.subr.bf16.mxu0 0
        %2915 = vmatpush1.bf16.msra.mxu0 %v2182
        %2916 = vmatprep.subr.bf16.mxu0 0
        %2917 = vmatpush1.bf16.msra.mxu0 %v2181
        %2918 = vmatprep.subr.bf16.mxu0 0
        %2919 = vmatpush1.bf16.msra.mxu0 %v2180
        %2920 = vmatprep.subr.bf16.mxu0 0
        %2921 = vmatpush2.bf16.msra.mxu0 0
        %2922 = vmatprep.subr.bf16.mxu0 0
        %2923 = vmatpush2.bf16.msra.mxu0 0
        %2924 = vmatprep.subr.bf16.mxu0 0
        %2925 = vmatpush2.bf16.msra.mxu0 0
        %2926 = vmatprep.subr.bf16.mxu0 0
        %2927 = vmatpush2.bf16.msra.mxu0 0
        %2928 = vmatprep.subr.bf16.mxu0 0
        %2929 = vmatpush2.bf16.msra.mxu0 0
        %2930 = vmatprep.subr.bf16.mxu0 0
        %2931 = vmatpush2.bf16.msra.mxu0 0
        %2932 = vmatprep.subr.bf16.mxu0 0
        %2933 = vmatpush2.bf16.msra.mxu0 0
        %2934 = vmatprep.subr.bf16.mxu0 0
        %2935 = vmatpush2.bf16.msra.mxu0 0
        %2936 = vmatprep.mubr.bf16.mxu0 0
        %2937 = vmatmul.mubr.bf16.gmra.mxu0 %v1630
        %v2938 = vpop.f32.mrf.mxu0
        %v2939 = vadd.f32 %v2778, %v2938
        %v2940 = vpop.f32.mrf.mxu0
        %v2941 = vpop.f32.mrf.mxu0
        %v2942 = vadd.f32 %v2781, %v2941
        %v2943 = vpop.f32.mrf.mxu0
        %2944 = vmatprep.mubr.bf16.mxu0 0
        %2945 = vmatmul.mubr.bf16.gmra.mxu0 %v1631
        %v2946 = vpop.f32.mrf.mxu0
        %v2947 = vadd.f32 %v2786, %v2946
        %v2948 = vpop.f32.mrf.mxu0
        %v2949 = vpop.f32.mrf.mxu0
        %v2950 = vadd.f32 %v2789, %v2949
        %v2951 = vpop.f32.mrf.mxu0
        %2952 = vmatprep.mubr.bf16.mxu0 0
        %2953 = vmatmul.mubr.bf16.gmra.mxu0 %v1632
        %v2954 = vpop.f32.mrf.mxu0
        %v2955 = vadd.f32 %v2794, %v2954
        %v2956 = vpop.f32.mrf.mxu0
        %v2957 = vpop.f32.mrf.mxu0
        %v2958 = vadd.f32 %v2797, %v2957
        %v2959 = vpop.f32.mrf.mxu0
        %2960 = vmatprep.mubr.bf16.mxu0 0
        %2961 = vmatmul.mubr.bf16.gmra.mxu0 %v1633
        %v2962 = vpop.f32.mrf.mxu0
        %v2963 = vadd.f32 %v2802, %v2962
        %v2964 = vpop.f32.mrf.mxu0
        %v2965 = vpop.f32.mrf.mxu0
        %v2966 = vadd.f32 %v2805, %v2965
        %v2967 = vpop.f32.mrf.mxu0
        %2968 = vmatprep.mubr.bf16.mxu0 0
        %2969 = vmatmul.mubr.bf16.gmra.mxu0 %v1634
        %v2970 = vpop.f32.mrf.mxu0
        %v2971 = vadd.f32 %v2810, %v2970
        %v2972 = vpop.f32.mrf.mxu0
        %v2973 = vpop.f32.mrf.mxu0
        %v2974 = vadd.f32 %v2813, %v2973
        %v2975 = vpop.f32.mrf.mxu0
        %2976 = vmatprep.mubr.bf16.mxu0 0
        %2977 = vmatmul.mubr.bf16.gmra.mxu0 %v1635
        %v2978 = vpop.f32.mrf.mxu0
        %v2979 = vadd.f32 %v2818, %v2978
        %v2980 = vpop.f32.mrf.mxu0
        %v2981 = vpop.f32.mrf.mxu0
        %v2982 = vadd.f32 %v2821, %v2981
        %v2983 = vpop.f32.mrf.mxu0
        %2984 = vmatprep.mubr.bf16.mxu0 0
        %2985 = vmatmul.mubr.bf16.gmra.mxu0 %v1636
        %v2986 = vpop.f32.mrf.mxu0
        %v2987 = vadd.f32 %v2826, %v2986
        %v2988 = vpop.f32.mrf.mxu0
        %v2989 = vpop.f32.mrf.mxu0
        %v2990 = vadd.f32 %v2829, %v2989
        %v2991 = vpop.f32.mrf.mxu0
        %2992 = vmatprep.mubr.bf16.mxu0 0
        %2993 = vmatmul.mubr.bf16.gmra.mxu0 %v1637
        %v2994 = vpop.f32.mrf.mxu0
        %v2995 = vadd.f32 %v2834, %v2994
        %v2996 = vpop.f32.mrf.mxu0
        %v2997 = vpop.f32.mrf.mxu0
        %v2998 = vadd.f32 %v2837, %v2997
        %v2999 = vpop.f32.mrf.mxu0
        %3000 = vmatprep.mubr.bf16.mxu0 0
        %3001 = vmatmul.mubr.bf16.gmra.mxu0 %v1638
        %v3002 = vpop.f32.mrf.mxu0
        %v3003 = vadd.f32 %v2842, %v3002
        %v3004 = vpop.f32.mrf.mxu0
        %v3005 = vpop.f32.mrf.mxu0
        %v3006 = vadd.f32 %v2845, %v3005
        %v3007 = vpop.f32.mrf.mxu0
        %3008 = vmatprep.mubr.bf16.mxu0 0
        %3009 = vmatmul.mubr.bf16.gmra.mxu0 %v1639
        %v3010 = vpop.f32.mrf.mxu0
        %v3011 = vadd.f32 %v2850, %v3010
        %v3012 = vpop.f32.mrf.mxu0
        %v3013 = vpop.f32.mrf.mxu0
        %v3014 = vadd.f32 %v2853, %v3013
        %v3015 = vpop.f32.mrf.mxu0
        %3016 = vmatprep.mubr.bf16.mxu0 0
        %3017 = vmatmul.mubr.bf16.gmra.mxu0 %v1640
        %v3018 = vpop.f32.mrf.mxu0
        %v3019 = vadd.f32 %v2858, %v3018
        %v3020 = vpop.f32.mrf.mxu0
        %v3021 = vpop.f32.mrf.mxu0
        %v3022 = vadd.f32 %v2861, %v3021
        %v3023 = vpop.f32.mrf.mxu0
        %3024 = vmatprep.mubr.bf16.mxu0 0
        %3025 = vmatmul.mubr.bf16.gmra.mxu0 %v1641
        %v3026 = vpop.f32.mrf.mxu0
        %v3027 = vadd.f32 %v2866, %v3026
        %v3028 = vpop.f32.mrf.mxu0
        %v3029 = vpop.f32.mrf.mxu0
        %v3030 = vadd.f32 %v2869, %v3029
        %v3031 = vpop.f32.mrf.mxu0
        %3032 = vmatprep.mubr.bf16.mxu0 0
        %3033 = vmatmul.mubr.bf16.gmra.mxu0 %v1642
        %v3034 = vpop.f32.mrf.mxu0
        %v3035 = vadd.f32 %v2874, %v3034
        %v3036 = vpop.f32.mrf.mxu0
        %v3037 = vpop.f32.mrf.mxu0
        %v3038 = vadd.f32 %v2877, %v3037
        %v3039 = vpop.f32.mrf.mxu0
        %3040 = vmatprep.mubr.bf16.mxu0 0
        %3041 = vmatmul.mubr.bf16.gmra.mxu0 %v1643
        %v3042 = vpop.f32.mrf.mxu0
        %v3043 = vadd.f32 %v2882, %v3042
        %v3044 = vpop.f32.mrf.mxu0
        %v3045 = vpop.f32.mrf.mxu0
        %v3046 = vadd.f32 %v2885, %v3045
        %v3047 = vpop.f32.mrf.mxu0
        %3048 = vmatprep.mubr.bf16.mxu0 0
        %3049 = vmatmul.mubr.bf16.gmra.mxu0 %v1670
        %v3050 = vpop.f32.mrf.mxu0
        %v3051 = vadd.f32 %v2890, %v3050
        %v3052 = vpop.f32.mrf.mxu0
        %v3053 = vpop.f32.mrf.mxu0
        %v3054 = vadd.f32 %v2893, %v3053
        %v3055 = vpop.f32.mrf.mxu0
        %3056 = vmatprep.mubr.bf16.mxu0 0
        %3057 = vmatmul.mubr.bf16.gmra.mxu0 %v1682
        %v3058 = vpop.f32.mrf.mxu0
        %v3059 = vadd.f32 %v2898, %v3058
        %v3060 = vpop.f32.mrf.mxu0
        %v3061 = vpop.f32.mrf.mxu0
        %v3062 = vadd.f32 %v2901, %v3061
        %v3063 = vpop.f32.mrf.mxu0
        %3064 = vdwg.mxu0
        %v3065 = vld [vmem:[%s2] sm:$0x1]
        %v3067 = vlaneseq
        %v3068 = vshrl.u32 %v3067, 7
        %v3069 = vsub.s32 0, %v3068
        %v3070 = vrot.slane %v3065, %v3069
        %v3072 = vmul.f32 %v2939, %v3070
        %v3073 = vmul.f32 %v2942, %v3070
        %v3074 = vmul.f32 %v2947, %v3070
        %v3075 = vmul.f32 %v2950, %v3070
        %v3076 = vmul.f32 %v2955, %v3070
        %v3077 = vmul.f32 %v2958, %v3070
        %v3078 = vmul.f32 %v2963, %v3070
        %v3079 = vmul.f32 %v2966, %v3070
        %v3080 = vmul.f32 %v2971, %v3070
        %v3081 = vmul.f32 %v2974, %v3070
        %v3082 = vmul.f32 %v2979, %v3070
        %v3083 = vmul.f32 %v2982, %v3070
        %v3084 = vmul.f32 %v2987, %v3070
        %v3085 = vmul.f32 %v2990, %v3070
        %v3086 = vmul.f32 %v2995, %v3070
        %v3087 = vmul.f32 %v2998, %v3070
        %v3088 = vmul.f32 %v3003, %v3070
        %v3089 = vmul.f32 %v3006, %v3070
        %v3090 = vmul.f32 %v3011, %v3070
        %v3091 = vmul.f32 %v3014, %v3070
        %v3092 = vmul.f32 %v3019, %v3070
        %v3093 = vmul.f32 %v3022, %v3070
        %v3094 = vmul.f32 %v3027, %v3070
        %v3095 = vmul.f32 %v3030, %v3070
        %v3096 = vmul.f32 %v3035, %v3070
        %v3097 = vmul.f32 %v3038, %v3070
        %v3098 = vmul.f32 %v3043, %v3070
        %v3099 = vmul.f32 %v3046, %v3070
        %v3100 = vmul.f32 %v3051, %v3070
        %v3101 = vmul.f32 %v3054, %v3070
        %v3102 = vmul.f32 %v3059, %v3070
        %v3103 = vmul.f32 %v3062, %v3070
        %v3104 = vld [vmem:[%s3] sm:$0x1]
        %v3106 = vlaneseq
        %v3107 = vshrl.u32 %v3106, 7
        %v3108 = vsub.s32 0, %v3107
        %v3109 = vrot.slane %v3104, %v3108
        %v3111 = vadd.f32 %v3072, %v3109
        %v3112 = vadd.f32 %v3073, %v3109
        %v3113 = vadd.f32 %v3074, %v3109
        %v3114 = vadd.f32 %v3075, %v3109
        %v3115 = vadd.f32 %v3076, %v3109
        %v3116 = vadd.f32 %v3077, %v3109
        %v3117 = vadd.f32 %v3078, %v3109
        %v3118 = vadd.f32 %v3079, %v3109
        %v3119 = vadd.f32 %v3080, %v3109
        %v3120 = vadd.f32 %v3081, %v3109
        %v3121 = vadd.f32 %v3082, %v3109
        %v3122 = vadd.f32 %v3083, %v3109
        %v3123 = vadd.f32 %v3084, %v3109
        %v3124 = vadd.f32 %v3085, %v3109
        %v3125 = vadd.f32 %v3086, %v3109
        %v3126 = vadd.f32 %v3087, %v3109
        %v3127 = vadd.f32 %v3088, %v3109
        %v3128 = vadd.f32 %v3089, %v3109
        %v3129 = vadd.f32 %v3090, %v3109
        %v3130 = vadd.f32 %v3091, %v3109
        %v3131 = vadd.f32 %v3092, %v3109
        %v3132 = vadd.f32 %v3093, %v3109
        %v3133 = vadd.f32 %v3094, %v3109
        %v3134 = vadd.f32 %v3095, %v3109
        %v3135 = vadd.f32 %v3096, %v3109
        %v3136 = vadd.f32 %v3097, %v3109
        %v3137 = vadd.f32 %v3098, %v3109
        %v3138 = vadd.f32 %v3099, %v3109
        %v3139 = vadd.f32 %v3100, %v3109
        %v3140 = vadd.f32 %v3101, %v3109
        %v3141 = vadd.f32 %v3102, %v3109
        %v3142 = vadd.f32 %v3103, %v3109
        %v3143 = vmax.f32 %v3111, 0.0
        %v3144 = vmax.f32 %v3112, 0.0
        %v3145 = vmax.f32 %v3113, 0.0
        %v3146 = vmax.f32 %v3114, 0.0
        %v3147 = vmax.f32 %v3115, 0.0
        %v3148 = vmax.f32 %v3116, 0.0
        %v3149 = vmax.f32 %v3117, 0.0
        %v3150 = vmax.f32 %v3118, 0.0
        %v3151 = vmax.f32 %v3119, 0.0
        %v3152 = vmax.f32 %v3120, 0.0
        %v3153 = vmax.f32 %v3121, 0.0
        %v3154 = vmax.f32 %v3122, 0.0
        %v3155 = vmax.f32 %v3123, 0.0
        %v3156 = vmax.f32 %v3124, 0.0
        %v3157 = vmax.f32 %v3125, 0.0
        %v3158 = vmax.f32 %v3126, 0.0
        %v3159 = vmax.f32 %v3127, 0.0
        %v3160 = vmax.f32 %v3128, 0.0
        %v3161 = vmax.f32 %v3129, 0.0
        %v3162 = vmax.f32 %v3130, 0.0
        %v3163 = vmax.f32 %v3131, 0.0
        %v3164 = vmax.f32 %v3132, 0.0
        %v3165 = vmax.f32 %v3133, 0.0
        %v3166 = vmax.f32 %v3134, 0.0
        %v3167 = vmax.f32 %v3135, 0.0
        %v3168 = vmax.f32 %v3136, 0.0
        %v3169 = vmax.f32 %v3137, 0.0
        %v3170 = vmax.f32 %v3138, 0.0
        %v3171 = vmax.f32 %v3139, 0.0
        %v3172 = vmax.f32 %v3140, 0.0
        %v3173 = vmax.f32 %v3141, 0.0
        %v3174 = vmax.f32 %v3142, 0.0
        %v3175 = vpack.c.bf16 %v3144, %v3143
        %v3176 = vpack.c.bf16 %v3146, %v3145
        %v3177 = vpack.c.bf16 %v3148, %v3147
        %v3178 = vpack.c.bf16 %v3150, %v3149
        %v3179 = vpack.c.bf16 %v3152, %v3151
        %v3180 = vpack.c.bf16 %v3154, %v3153
        %v3181 = vpack.c.bf16 %v3156, %v3155
        %v3182 = vpack.c.bf16 %v3158, %v3157
        %v3183 = vpack.c.bf16 %v3160, %v3159
        %v3184 = vpack.c.bf16 %v3162, %v3161
        %v3185 = vpack.c.bf16 %v3164, %v3163
        %v3186 = vpack.c.bf16 %v3166, %v3165
        %v3187 = vpack.c.bf16 %v3168, %v3167
        %v3188 = vpack.c.bf16 %v3170, %v3169
        %v3189 = vpack.c.bf16 %v3172, %v3171
        %v3190 = vpack.c.bf16 %v3174, %v3173
        %v3192 = vshrl.u32 %v3175, 16
        %v3194 = vrot.slane %v3192, 7
        %v3195 = vshll.u32 %v3175, 16
        %v3197 = vor.u32 %v3194, %v3195
        %v3199 = vshrl.u32 %v3176, 16
        %v3201 = vrot.slane %v3199, 7
        %v3202 = vshll.u32 %v3176, 16
        %v3204 = vor.u32 %v3201, %v3202
        %v3206 = vshrl.u32 %v3177, 16
        %v3208 = vrot.slane %v3206, 7
        %v3209 = vshll.u32 %v3177, 16
        %v3211 = vor.u32 %v3208, %v3209
        %v3213 = vshrl.u32 %v3178, 16
        %v3215 = vrot.slane %v3213, 7
        %v3216 = vshll.u32 %v3178, 16
        %v3218 = vor.u32 %v3215, %v3216
        %v3220 = vshrl.u32 %v3179, 16
        %v3222 = vrot.slane %v3220, 7
        %v3223 = vshll.u32 %v3179, 16
        %v3225 = vor.u32 %v3222, %v3223
        %v3227 = vshrl.u32 %v3180, 16
        %v3229 = vrot.slane %v3227, 7
        %v3230 = vshll.u32 %v3180, 16
        %v3232 = vor.u32 %v3229, %v3230
        %v3234 = vshrl.u32 %v3181, 16
        %v3236 = vrot.slane %v3234, 7
        %v3237 = vshll.u32 %v3181, 16
        %v3239 = vor.u32 %v3236, %v3237
        %v3241 = vshrl.u32 %v3182, 16
        %v3243 = vrot.slane %v3241, 7
        %v3244 = vshll.u32 %v3182, 16
        %v3246 = vor.u32 %v3243, %v3244
        %v3248 = vshrl.u32 %v3183, 16
        %v3250 = vrot.slane %v3248, 7
        %v3251 = vshll.u32 %v3183, 16
        %v3253 = vor.u32 %v3250, %v3251
        %v3255 = vshrl.u32 %v3184, 16
        %v3257 = vrot.slane %v3255, 7
        %v3258 = vshll.u32 %v3184, 16
        %v3260 = vor.u32 %v3257, %v3258
        %v3262 = vshrl.u32 %v3185, 16
        %v3264 = vrot.slane %v3262, 7
        %v3265 = vshll.u32 %v3185, 16
        %v3267 = vor.u32 %v3264, %v3265
        %v3269 = vshrl.u32 %v3186, 16
        %v3271 = vrot.slane %v3269, 7
        %v3272 = vshll.u32 %v3186, 16
        %v3274 = vor.u32 %v3271, %v3272
        %v3276 = vshrl.u32 %v3187, 16
        %v3278 = vrot.slane %v3276, 7
        %v3279 = vshll.u32 %v3187, 16
        %v3281 = vor.u32 %v3278, %v3279
        %v3283 = vshrl.u32 %v3188, 16
        %v3285 = vrot.slane %v3283, 7
        %v3286 = vshll.u32 %v3188, 16
        %v3288 = vor.u32 %v3285, %v3286
        %v3290 = vshrl.u32 %v3189, 16
        %v3292 = vrot.slane %v3290, 7
        %v3293 = vshll.u32 %v3189, 16
        %v3295 = vor.u32 %v3292, %v3293
        %v3297 = vshrl.u32 %v3190, 16
        %v3299 = vrot.slane %v3297, 7
        %v3300 = vshll.u32 %v3190, 16
        %v3302 = vor.u32 %v3299, %v3300
        %v3335 = vsel %vm535, 0, %v3197
        %v3336 = vsel %vm535, 0, %v3204
        %v3337 = vsel %vm535, 0, %v3211
        %v3338 = vsel %vm535, 0, %v3218
        %v3339 = vsel %vm535, 0, %v3225
        %v3340 = vsel %vm535, 0, %v3232
        %v3341 = vsel %vm535, 0, %v3239
        %v3342 = vsel %vm535, 0, %v3246
        %v3343 = vsel %vm535, 0, %v3253
        %v3344 = vsel %vm535, 0, %v3260
        %v3345 = vsel %vm535, 0, %v3267
        %v3346 = vsel %vm535, 0, %v3274
        %v3347 = vsel %vm535, 0, %v3281
        %v3348 = vsel %vm535, 0, %v3288
        %v3349 = vsel %vm535, 0, %v3295
        %v3350 = vsel %vm535, 0, %v3302
        %v3351 = vsel %vm535, %v3194, 0
        %v3352 = vsel %vm535, %v3201, 0
        %v3353 = vsel %vm535, %v3208, 0
        %v3354 = vsel %vm535, %v3215, 0
        %v3355 = vsel %vm535, %v3222, 0
        %v3356 = vsel %vm535, %v3229, 0
        %v3357 = vsel %vm535, %v3236, 0
        %v3358 = vsel %vm535, %v3243, 0
        %v3359 = vsel %vm535, %v3250, 0
        %v3360 = vsel %vm535, %v3257, 0
        %v3361 = vsel %vm535, %v3264, 0
        %v3362 = vsel %vm535, %v3271, 0
        %v3363 = vsel %vm535, %v3278, 0
        %v3364 = vsel %vm535, %v3285, 0
        %v3365 = vsel %vm535, %v3292, 0
        %v3366 = vsel %vm535, %v3299, 0
        %s3367 = sadd.s32 0, 1
        %v3400 = vunpack.c.l.b16 %v3335
        %v3401 = vunpack.c.h.b16 %v3335
        %v3402 = vunpack.c.l.b16 %v3351
        %v3403 = vunpack.c.l.b16 %v3336
        %v3404 = vunpack.c.h.b16 %v3336
        %v3405 = vunpack.c.l.b16 %v3352
        %v3406 = vunpack.c.l.b16 %v3337
        %v3407 = vunpack.c.h.b16 %v3337
        %v3408 = vunpack.c.l.b16 %v3353
        %v3409 = vunpack.c.l.b16 %v3338
        %v3410 = vunpack.c.h.b16 %v3338
        %v3411 = vunpack.c.l.b16 %v3354
        %v3412 = vunpack.c.l.b16 %v3339
        %v3413 = vunpack.c.h.b16 %v3339
        %v3414 = vunpack.c.l.b16 %v3355
        %v3415 = vunpack.c.l.b16 %v3340
        %v3416 = vunpack.c.h.b16 %v3340
        %v3417 = vunpack.c.l.b16 %v3356
        %v3418 = vunpack.c.l.b16 %v3341
        %v3419 = vunpack.c.h.b16 %v3341
        %v3420 = vunpack.c.l.b16 %v3357
        %v3421 = vunpack.c.l.b16 %v3342
        %v3422 = vunpack.c.h.b16 %v3342
        %v3423 = vunpack.c.l.b16 %v3358
        %v3424 = vunpack.c.l.b16 %v3343
        %v3425 = vunpack.c.h.b16 %v3343
        %v3426 = vunpack.c.l.b16 %v3359
        %v3427 = vunpack.c.l.b16 %v3344
        %v3428 = vunpack.c.h.b16 %v3344
        %v3429 = vunpack.c.l.b16 %v3360
        %v3430 = vunpack.c.l.b16 %v3345
        %v3431 = vunpack.c.h.b16 %v3345
        %v3432 = vunpack.c.l.b16 %v3361
        %v3433 = vunpack.c.l.b16 %v3346
        %v3434 = vunpack.c.h.b16 %v3346
        %v3435 = vunpack.c.l.b16 %v3362
        %v3436 = vunpack.c.l.b16 %v3347
        %v3437 = vunpack.c.h.b16 %v3347
        %v3438 = vunpack.c.l.b16 %v3363
        %v3439 = vunpack.c.l.b16 %v3348
        %v3440 = vunpack.c.h.b16 %v3348
        %v3441 = vunpack.c.l.b16 %v3364
        %v3442 = vunpack.c.l.b16 %v3349
        %v3443 = vunpack.c.h.b16 %v3349
        %v3444 = vunpack.c.l.b16 %v3365
        %v3445 = vunpack.c.l.b16 %v3350
        %v3446 = vunpack.c.h.b16 %v3350
        %v3447 = vunpack.c.l.b16 %v3366
        %v3448 = vpack.c.b16 %v3400, %v3400
        %v3449 = vpack.c.b16 %v3401, %v3401
        %v3450 = vpack.c.b16 %v3402, %v3402
        %v3451 = vpack.c.b16 %v3403, %v3403
        %v3452 = vpack.c.b16 %v3404, %v3404
        %v3453 = vpack.c.b16 %v3405, %v3405
        %v3454 = vpack.c.b16 %v3406, %v3406
        %v3455 = vpack.c.b16 %v3407, %v3407
        %v3456 = vpack.c.b16 %v3408, %v3408
        %v3457 = vpack.c.b16 %v3409, %v3409
        %v3458 = vpack.c.b16 %v3410, %v3410
        %v3459 = vpack.c.b16 %v3411, %v3411
        %v3460 = vpack.c.b16 %v3412, %v3412
        %v3461 = vpack.c.b16 %v3413, %v3413
        %v3462 = vpack.c.b16 %v3414, %v3414
        %v3463 = vpack.c.b16 %v3415, %v3415
        %v3464 = vpack.c.b16 %v3416, %v3416
        %v3465 = vpack.c.b16 %v3417, %v3417
        %v3466 = vpack.c.b16 %v3418, %v3418
        %v3467 = vpack.c.b16 %v3419, %v3419
        %v3468 = vpack.c.b16 %v3420, %v3420
        %v3469 = vpack.c.b16 %v3421, %v3421
        %v3470 = vpack.c.b16 %v3422, %v3422
        %v3471 = vpack.c.b16 %v3423, %v3423
        %v3472 = vpack.c.b16 %v3424, %v3424
        %v3473 = vpack.c.b16 %v3425, %v3425
        %v3474 = vpack.c.b16 %v3426, %v3426
        %v3475 = vpack.c.b16 %v3427, %v3427
        %v3476 = vpack.c.b16 %v3428, %v3428
        %v3477 = vpack.c.b16 %v3429, %v3429
        %v3478 = vpack.c.b16 %v3430, %v3430
        %v3479 = vpack.c.b16 %v3431, %v3431
        %v3480 = vpack.c.b16 %v3432, %v3432
        %v3481 = vpack.c.b16 %v3433, %v3433
        %v3482 = vpack.c.b16 %v3434, %v3434
        %v3483 = vpack.c.b16 %v3435, %v3435
        %v3484 = vpack.c.b16 %v3436, %v3436
        %v3485 = vpack.c.b16 %v3437, %v3437
        %v3486 = vpack.c.b16 %v3438, %v3438
        %v3487 = vpack.c.b16 %v3439, %v3439
        %v3488 = vpack.c.b16 %v3440, %v3440
        %v3489 = vpack.c.b16 %v3441, %v3441
        %v3490 = vpack.c.b16 %v3442, %v3442
        %v3491 = vpack.c.b16 %v3443, %v3443
        %v3492 = vpack.c.b16 %v3444, %v3444
        %v3493 = vpack.c.b16 %v3445, %v3445
        %v3494 = vpack.c.b16 %v3446, %v3446
        %v3495 = vpack.c.b16 %v3447, %v3447
        %s3544 = smul.u32 %s3367, 3
        %s3545 = smul.addr %s3544, 4
        %s3546 = scalar_lea.vmem [#allocation3], %s3545
        %3547 = vst [vmem:[%s3546] sm:$0xf] %v3448
        %3548 = vst [vmem:[%s3546 + $0x4] sm:$0xf] %v3449
        %3549 = vst [vmem:[%s3546 + $0x8] sm:$0x1] %v3450
        %3550 = vst [vmem:[%s3546 + $0xc] sm:$0xf] %v3451
        %3551 = vst [vmem:[%s3546 + $0x10] sm:$0xf] %v3452
        %3552 = vst [vmem:[%s3546 + $0x14] sm:$0x1] %v3453
        %3553 = vst [vmem:[%s3546 + $0x18] sm:$0xf] %v3454
        %3554 = vst [vmem:[%s3546 + $0x1c] sm:$0xf] %v3455
        %3555 = vst [vmem:[%s3546 + $0x20] sm:$0x1] %v3456
        %3556 = vst [vmem:[%s3546 + $0x24] sm:$0xf] %v3457
        %3557 = vst [vmem:[%s3546 + $0x28] sm:$0xf] %v3458
        %3558 = vst [vmem:[%s3546 + $0x2c] sm:$0x1] %v3459
        %3559 = vst [vmem:[%s3546 + $0x30] sm:$0xf] %v3460
        %3560 = vst [vmem:[%s3546 + $0x34] sm:$0xf] %v3461
        %3561 = vst [vmem:[%s3546 + $0x38] sm:$0x1] %v3462
        %3562 = vst [vmem:[%s3546 + $0x3c] sm:$0xf] %v3463
        %3563 = vst [vmem:[%s3546 + $0x40] sm:$0xf] %v3464
        %3564 = vst [vmem:[%s3546 + $0x44] sm:$0x1] %v3465
        %3565 = vst [vmem:[%s3546 + $0x48] sm:$0xf] %v3466
        %3566 = vst [vmem:[%s3546 + $0x4c] sm:$0xf] %v3467
        %3567 = vst [vmem:[%s3546 + $0x50] sm:$0x1] %v3468
        %3568 = vst [vmem:[%s3546 + $0x54] sm:$0xf] %v3469
        %3569 = vst [vmem:[%s3546 + $0x58] sm:$0xf] %v3470
        %3570 = vst [vmem:[%s3546 + $0x5c] sm:$0x1] %v3471
        %3571 = vst [vmem:[%s3546 + $0x60] sm:$0xf] %v3472
        %3572 = vst [vmem:[%s3546 + $0x64] sm:$0xf] %v3473
        %3573 = vst [vmem:[%s3546 + $0x68] sm:$0x1] %v3474
        %3574 = vst [vmem:[%s3546 + $0x6c] sm:$0xf] %v3475
        %3575 = vst [vmem:[%s3546 + $0x70] sm:$0xf] %v3476
        %3576 = vst [vmem:[%s3546 + $0x74] sm:$0x1] %v3477
        %3577 = vst [vmem:[%s3546 + $0x78] sm:$0xf] %v3478
        %3578 = vst [vmem:[%s3546 + $0x7c] sm:$0xf] %v3479
        %3579 = vst [vmem:[%s3546 + $0x80] sm:$0x1] %v3480
        %3580 = vst [vmem:[%s3546 + $0x84] sm:$0xf] %v3481
        %3581 = vst [vmem:[%s3546 + $0x88] sm:$0xf] %v3482
        %3582 = vst [vmem:[%s3546 + $0x8c] sm:$0x1] %v3483
        %3583 = vst [vmem:[%s3546 + $0x90] sm:$0xf] %v3484
        %3584 = vst [vmem:[%s3546 + $0x94] sm:$0xf] %v3485
        %3585 = vst [vmem:[%s3546 + $0x98] sm:$0x1] %v3486
        %3586 = vst [vmem:[%s3546 + $0x9c] sm:$0xf] %v3487
        %3587 = vst [vmem:[%s3546 + $0xa0] sm:$0xf] %v3488
        %3588 = vst [vmem:[%s3546 + $0xa4] sm:$0x1] %v3489
        %3589 = vst [vmem:[%s3546 + $0xa8] sm:$0xf] %v3490
        %3590 = vst [vmem:[%s3546 + $0xac] sm:$0xf] %v3491
        %3591 = vst [vmem:[%s3546 + $0xb0] sm:$0x1] %v3492
        %3592 = vst [vmem:[%s3546 + $0xb4] sm:$0xf] %v3493
        %3593 = vst [vmem:[%s3546 + $0xb8] sm:$0xf] %v3494
        %3594 = vst [vmem:[%s3546 + $0xbc] sm:$0x1] %v3495
        %s3595 = smul.addr %s793, 4
        %s3596 = scalar_lea.vmem [#allocation3], %s3595
        %v3597 = vld [vmem:[%s3596] sm:$0xf]
        %v3598 = vld [vmem:[%s3596 + $0x4] sm:$0xf]
        %v3599 = vld [vmem:[%s3596 + $0x8] sm:$0x1]
        %v3600 = vld [vmem:[%s3596 + $0xc] sm:$0xf]
        %v3601 = vld [vmem:[%s3596 + $0x10] sm:$0xf]
        %v3602 = vld [vmem:[%s3596 + $0x14] sm:$0x1]
        %v3603 = vld [vmem:[%s3596 + $0x18] sm:$0xf]
        %v3604 = vld [vmem:[%s3596 + $0x1c] sm:$0xf]
        %v3605 = vld [vmem:[%s3596 + $0x20] sm:$0x1]
        %v3606 = vld [vmem:[%s3596 + $0x24] sm:$0xf]
        %v3607 = vld [vmem:[%s3596 + $0x28] sm:$0xf]
        %v3608 = vld [vmem:[%s3596 + $0x2c] sm:$0x1]
        %v3609 = vld [vmem:[%s3596 + $0x30] sm:$0xf]
        %v3610 = vld [vmem:[%s3596 + $0x34] sm:$0xf]
        %v3611 = vld [vmem:[%s3596 + $0x38] sm:$0x1]
        %v3612 = vld [vmem:[%s3596 + $0x3c] sm:$0xf]
        %v3613 = vld [vmem:[%s3596 + $0x40] sm:$0xf]
        %v3614 = vld [vmem:[%s3596 + $0x44] sm:$0x1]
        %v3615 = vld [vmem:[%s3596 + $0x48] sm:$0xf]
        %v3616 = vld [vmem:[%s3596 + $0x4c] sm:$0xf]
        %v3617 = vld [vmem:[%s3596 + $0x50] sm:$0x1]
        %v3618 = vld [vmem:[%s3596 + $0x54] sm:$0xf]
        %v3619 = vld [vmem:[%s3596 + $0x58] sm:$0xf]
        %v3620 = vld [vmem:[%s3596 + $0x5c] sm:$0x1]
        %v3621 = vld [vmem:[%s3596 + $0x60] sm:$0xf]
        %v3622 = vld [vmem:[%s3596 + $0x64] sm:$0xf]
        %v3623 = vld [vmem:[%s3596 + $0x68] sm:$0x1]
        %v3624 = vld [vmem:[%s3596 + $0x6c] sm:$0xf]
        %v3625 = vld [vmem:[%s3596 + $0x70] sm:$0xf]
        %v3626 = vld [vmem:[%s3596 + $0x74] sm:$0x1]
        %v3627 = vld [vmem:[%s3596 + $0x78] sm:$0xf]
        %v3628 = vld [vmem:[%s3596 + $0x7c] sm:$0xf]
        %v3629 = vld [vmem:[%s3596 + $0x80] sm:$0x1]
        %v3630 = vld [vmem:[%s3596 + $0x84] sm:$0xf]
        %v3631 = vld [vmem:[%s3596 + $0x88] sm:$0xf]
        %v3632 = vld [vmem:[%s3596 + $0x8c] sm:$0x1]
        %v3633 = vld [vmem:[%s3596 + $0x90] sm:$0xf]
        %v3634 = vld [vmem:[%s3596 + $0x94] sm:$0xf]
        %v3635 = vld [vmem:[%s3596 + $0x98] sm:$0x1]
        %v3636 = vld [vmem:[%s3596 + $0x9c] sm:$0xf]
        %v3637 = vld [vmem:[%s3596 + $0xa0] sm:$0xf]
        %v3638 = vld [vmem:[%s3596 + $0xa4] sm:$0x1]
        %v3639 = vld [vmem:[%s3596 + $0xa8] sm:$0xf]
        %v3640 = vld [vmem:[%s3596 + $0xac] sm:$0xf]
        %v3641 = vld [vmem:[%s3596 + $0xb0] sm:$0x1]
        %v3642 = vld [vmem:[%s3596 + $0xb4] sm:$0xf]
        %v3643 = vld [vmem:[%s3596 + $0xb8] sm:$0xf]
        %v3644 = vld [vmem:[%s3596 + $0xbc] sm:$0x1]
        %v3645 = vld [vmem:[%s3596 + $0xc0] sm:$0xf]
        %v3646 = vld [vmem:[%s3596 + $0xc4] sm:$0xf]
        %v3647 = vld [vmem:[%s3596 + $0xc8] sm:$0x1]
        %v3648 = vld [vmem:[%s3596 + $0xcc] sm:$0xf]
        %v3649 = vld [vmem:[%s3596 + $0xd0] sm:$0xf]
        %v3650 = vld [vmem:[%s3596 + $0xd4] sm:$0x1]
        %v3652 = vshrl.u32 %v3597, 16
        %v3654 = vrot.slane %v3652, 4
        %v3655 = vshll.u32 %v3597, 16
        %v3657 = vrot.slane %v3655, 5
        %v3658 = vor.u32 %v3654, %v3657
        %v3659 = vrot.slane %v3658, 4
        %v3661 = vshll.u32 %v3598, 16
        %v3663 = vrot.slane %v3661, 5
        %v3664 = vsel %vm852, %v3659, %v3663
        %v3665 = vshrl.u32 %v3598, 16
        %v3667 = vrot.slane %v3665, 4
        %v3668 = vor.u32 %v3667, %v3663
        %v3669 = vrot.slane %v3668, 4
        %v3671 = vshll.u32 %v3599, 16
        %v3673 = vrot.slane %v3671, 5
        %v3674 = vsel %vm852, %v3669, %v3673
        %v3676 = vshrl.u32 %v3600, 16
        %v3678 = vrot.slane %v3676, 4
        %v3679 = vshll.u32 %v3600, 16
        %v3681 = vrot.slane %v3679, 5
        %v3682 = vor.u32 %v3678, %v3681
        %v3683 = vrot.slane %v3682, 4
        %v3685 = vshll.u32 %v3601, 16
        %v3687 = vrot.slane %v3685, 5
        %v3688 = vsel %vm852, %v3683, %v3687
        %v3689 = vshrl.u32 %v3601, 16
        %v3691 = vrot.slane %v3689, 4
        %v3692 = vor.u32 %v3691, %v3687
        %v3693 = vrot.slane %v3692, 4
        %v3695 = vshll.u32 %v3602, 16
        %v3697 = vrot.slane %v3695, 5
        %v3698 = vsel %vm852, %v3693, %v3697
        %v3700 = vshrl.u32 %v3603, 16
        %v3702 = vrot.slane %v3700, 4
        %v3703 = vshll.u32 %v3603, 16
        %v3705 = vrot.slane %v3703, 5
        %v3706 = vor.u32 %v3702, %v3705
        %v3707 = vrot.slane %v3706, 4
        %v3709 = vshll.u32 %v3604, 16
        %v3711 = vrot.slane %v3709, 5
        %v3712 = vsel %vm852, %v3707, %v3711
        %v3713 = vshrl.u32 %v3604, 16
        %v3715 = vrot.slane %v3713, 4
        %v3716 = vor.u32 %v3715, %v3711
        %v3717 = vrot.slane %v3716, 4
        %v3719 = vshll.u32 %v3605, 16
        %v3721 = vrot.slane %v3719, 5
        %v3722 = vsel %vm852, %v3717, %v3721
        %v3724 = vshrl.u32 %v3606, 16
        %v3726 = vrot.slane %v3724, 4
        %v3727 = vshll.u32 %v3606, 16
        %v3729 = vrot.slane %v3727, 5
        %v3730 = vor.u32 %v3726, %v3729
        %v3731 = vrot.slane %v3730, 4
        %v3733 = vshll.u32 %v3607, 16
        %v3735 = vrot.slane %v3733, 5
        %v3736 = vsel %vm852, %v3731, %v3735
        %v3737 = vshrl.u32 %v3607, 16
        %v3739 = vrot.slane %v3737, 4
        %v3740 = vor.u32 %v3739, %v3735
        %v3741 = vrot.slane %v3740, 4
        %v3743 = vshll.u32 %v3608, 16
        %v3745 = vrot.slane %v3743, 5
        %v3746 = vsel %vm852, %v3741, %v3745
        %v3748 = vshrl.u32 %v3609, 16
        %v3750 = vrot.slane %v3748, 4
        %v3751 = vshll.u32 %v3609, 16
        %v3753 = vrot.slane %v3751, 5
        %v3754 = vor.u32 %v3750, %v3753
        %v3755 = vrot.slane %v3754, 4
        %v3757 = vshll.u32 %v3610, 16
        %v3759 = vrot.slane %v3757, 5
        %v3760 = vsel %vm852, %v3755, %v3759
        %v3761 = vshrl.u32 %v3610, 16
        %v3763 = vrot.slane %v3761, 4
        %v3764 = vor.u32 %v3763, %v3759
        %v3765 = vrot.slane %v3764, 4
        %v3767 = vshll.u32 %v3611, 16
        %v3769 = vrot.slane %v3767, 5
        %v3770 = vsel %vm852, %v3765, %v3769
        %v3772 = vshrl.u32 %v3612, 16
        %v3774 = vrot.slane %v3772, 4
        %v3775 = vshll.u32 %v3612, 16
        %v3777 = vrot.slane %v3775, 5
        %v3778 = vor.u32 %v3774, %v3777
        %v3779 = vrot.slane %v3778, 4
        %v3781 = vshll.u32 %v3613, 16
        %v3783 = vrot.slane %v3781, 5
        %v3784 = vsel %vm852, %v3779, %v3783
        %v3785 = vshrl.u32 %v3613, 16
        %v3787 = vrot.slane %v3785, 4
        %v3788 = vor.u32 %v3787, %v3783
        %v3789 = vrot.slane %v3788, 4
        %v3791 = vshll.u32 %v3614, 16
        %v3793 = vrot.slane %v3791, 5
        %v3794 = vsel %vm852, %v3789, %v3793
        %v3796 = vshrl.u32 %v3615, 16
        %v3798 = vrot.slane %v3796, 4
        %v3799 = vshll.u32 %v3615, 16
        %v3801 = vrot.slane %v3799, 5
        %v3802 = vor.u32 %v3798, %v3801
        %v3803 = vrot.slane %v3802, 4
        %v3805 = vshll.u32 %v3616, 16
        %v3807 = vrot.slane %v3805, 5
        %v3808 = vsel %vm852, %v3803, %v3807
        %v3809 = vshrl.u32 %v3616, 16
        %v3811 = vrot.slane %v3809, 4
        %v3812 = vor.u32 %v3811, %v3807
        %v3813 = vrot.slane %v3812, 4
        %v3815 = vshll.u32 %v3617, 16
        %v3817 = vrot.slane %v3815, 5
        %v3818 = vsel %vm852, %v3813, %v3817
        %v3820 = vshrl.u32 %v3618, 16
        %v3822 = vrot.slane %v3820, 4
        %v3823 = vshll.u32 %v3618, 16
        %v3825 = vrot.slane %v3823, 5
        %v3826 = vor.u32 %v3822, %v3825
        %v3827 = vrot.slane %v3826, 4
        %v3829 = vshll.u32 %v3619, 16
        %v3831 = vrot.slane %v3829, 5
        %v3832 = vsel %vm852, %v3827, %v3831
        %v3833 = vshrl.u32 %v3619, 16
        %v3835 = vrot.slane %v3833, 4
        %v3836 = vor.u32 %v3835, %v3831
        %v3837 = vrot.slane %v3836, 4
        %v3839 = vshll.u32 %v3620, 16
        %v3841 = vrot.slane %v3839, 5
        %v3842 = vsel %vm852, %v3837, %v3841
        %v3844 = vshrl.u32 %v3621, 16
        %v3846 = vrot.slane %v3844, 4
        %v3847 = vshll.u32 %v3621, 16
        %v3849 = vrot.slane %v3847, 5
        %v3850 = vor.u32 %v3846, %v3849
        %v3851 = vrot.slane %v3850, 4
        %v3853 = vshll.u32 %v3622, 16
        %v3855 = vrot.slane %v3853, 5
        %v3856 = vsel %vm852, %v3851, %v3855
        %v3857 = vshrl.u32 %v3622, 16
        %v3859 = vrot.slane %v3857, 4
        %v3860 = vor.u32 %v3859, %v3855
        %v3861 = vrot.slane %v3860, 4
        %v3863 = vshll.u32 %v3623, 16
        %v3865 = vrot.slane %v3863, 5
        %v3866 = vsel %vm852, %v3861, %v3865
        %v3868 = vshrl.u32 %v3624, 16
        %v3870 = vrot.slane %v3868, 4
        %v3871 = vshll.u32 %v3624, 16
        %v3873 = vrot.slane %v3871, 5
        %v3874 = vor.u32 %v3870, %v3873
        %v3875 = vrot.slane %v3874, 4
        %v3877 = vshll.u32 %v3625, 16
        %v3879 = vrot.slane %v3877, 5
        %v3880 = vsel %vm852, %v3875, %v3879
        %v3881 = vshrl.u32 %v3625, 16
        %v3883 = vrot.slane %v3881, 4
        %v3884 = vor.u32 %v3883, %v3879
        %v3885 = vrot.slane %v3884, 4
        %v3887 = vshll.u32 %v3626, 16
        %v3889 = vrot.slane %v3887, 5
        %v3890 = vsel %vm852, %v3885, %v3889
        %v3892 = vshrl.u32 %v3627, 16
        %v3894 = vrot.slane %v3892, 4
        %v3895 = vshll.u32 %v3627, 16
        %v3897 = vrot.slane %v3895, 5
        %v3898 = vor.u32 %v3894, %v3897
        %v3899 = vrot.slane %v3898, 4
        %v3901 = vshll.u32 %v3628, 16
        %v3903 = vrot.slane %v3901, 5
        %v3904 = vsel %vm852, %v3899, %v3903
        %v3905 = vshrl.u32 %v3628, 16
        %v3907 = vrot.slane %v3905, 4
        %v3908 = vor.u32 %v3907, %v3903
        %v3909 = vrot.slane %v3908, 4
        %v3911 = vshll.u32 %v3629, 16
        %v3913 = vrot.slane %v3911, 5
        %v3914 = vsel %vm852, %v3909, %v3913
        %v3916 = vshrl.u32 %v3630, 16
        %v3918 = vrot.slane %v3916, 4
        %v3919 = vshll.u32 %v3630, 16
        %v3921 = vrot.slane %v3919, 5
        %v3922 = vor.u32 %v3918, %v3921
        %v3923 = vrot.slane %v3922, 4
        %v3925 = vshll.u32 %v3631, 16
        %v3927 = vrot.slane %v3925, 5
        %v3928 = vsel %vm852, %v3923, %v3927
        %v3929 = vshrl.u32 %v3631, 16
        %v3931 = vrot.slane %v3929, 4
        %v3932 = vor.u32 %v3931, %v3927
        %v3933 = vrot.slane %v3932, 4
        %v3935 = vshll.u32 %v3632, 16
        %v3937 = vrot.slane %v3935, 5
        %v3938 = vsel %vm852, %v3933, %v3937
        %v3940 = vshrl.u32 %v3633, 16
        %v3942 = vrot.slane %v3940, 4
        %v3943 = vshll.u32 %v3633, 16
        %v3945 = vrot.slane %v3943, 5
        %v3946 = vor.u32 %v3942, %v3945
        %v3947 = vrot.slane %v3946, 4
        %v3949 = vshll.u32 %v3634, 16
        %v3951 = vrot.slane %v3949, 5
        %v3952 = vsel %vm852, %v3947, %v3951
        %v3953 = vshrl.u32 %v3634, 16
        %v3955 = vrot.slane %v3953, 4
        %v3956 = vor.u32 %v3955, %v3951
        %v3957 = vrot.slane %v3956, 4
        %v3959 = vshll.u32 %v3635, 16
        %v3961 = vrot.slane %v3959, 5
        %v3962 = vsel %vm852, %v3957, %v3961
        %v3964 = vshrl.u32 %v3636, 16
        %v3966 = vrot.slane %v3964, 4
        %v3967 = vshll.u32 %v3636, 16
        %v3969 = vrot.slane %v3967, 5
        %v3970 = vor.u32 %v3966, %v3969
        %v3971 = vrot.slane %v3970, 4
        %v3973 = vshll.u32 %v3637, 16
        %v3975 = vrot.slane %v3973, 5
        %v3976 = vsel %vm852, %v3971, %v3975
        %v3977 = vshrl.u32 %v3637, 16
        %v3979 = vrot.slane %v3977, 4
        %v3980 = vor.u32 %v3979, %v3975
        %v3981 = vrot.slane %v3980, 4
        %v3983 = vshll.u32 %v3638, 16
        %v3985 = vrot.slane %v3983, 5
        %v3986 = vsel %vm852, %v3981, %v3985
        %v3988 = vshrl.u32 %v3639, 16
        %v3990 = vrot.slane %v3988, 4
        %v3991 = vshll.u32 %v3639, 16
        %v3993 = vrot.slane %v3991, 5
        %v3994 = vor.u32 %v3990, %v3993
        %v3995 = vrot.slane %v3994, 4
        %v3997 = vshll.u32 %v3640, 16
        %v3999 = vrot.slane %v3997, 5
        %v4000 = vsel %vm852, %v3995, %v3999
        %v4001 = vshrl.u32 %v3640, 16
        %v4003 = vrot.slane %v4001, 4
        %v4004 = vor.u32 %v4003, %v3999
        %v4005 = vrot.slane %v4004, 4
        %v4007 = vshll.u32 %v3641, 16
        %v4009 = vrot.slane %v4007, 5
        %v4010 = vsel %vm852, %v4005, %v4009
        %v4012 = vshrl.u32 %v3642, 16
        %v4014 = vrot.slane %v4012, 4
        %v4015 = vshll.u32 %v3642, 16
        %v4017 = vrot.slane %v4015, 5
        %v4018 = vor.u32 %v4014, %v4017
        %v4019 = vrot.slane %v4018, 4
        %v4021 = vshll.u32 %v3643, 16
        %v4023 = vrot.slane %v4021, 5
        %v4024 = vsel %vm852, %v4019, %v4023
        %v4025 = vshrl.u32 %v3643, 16
        %v4027 = vrot.slane %v4025, 4
        %v4028 = vor.u32 %v4027, %v4023
        %v4029 = vrot.slane %v4028, 4
        %v4031 = vshll.u32 %v3644, 16
        %v4033 = vrot.slane %v4031, 5
        %v4034 = vsel %vm852, %v4029, %v4033
        %v4083 = vrot.slane %v3597, 5
        %v4084 = vrot.slane %v4083, 4
        %v4085 = vrot.slane %v3598, 5
        %v4086 = vsel %vm1287, %v4084, %v4085
        %v4087 = vrot.slane %v4085, 4
        %v4088 = vrot.slane %v3599, 5
        %v4089 = vsel %vm1287, %v4087, %v4088
        %v4090 = vrot.slane %v3600, 5
        %v4091 = vrot.slane %v4090, 4
        %v4092 = vrot.slane %v3601, 5
        %v4093 = vsel %vm1287, %v4091, %v4092
        %v4094 = vrot.slane %v4092, 4
        %v4095 = vrot.slane %v3602, 5
        %v4096 = vsel %vm1287, %v4094, %v4095
        %v4097 = vrot.slane %v3603, 5
        %v4098 = vrot.slane %v4097, 4
        %v4099 = vrot.slane %v3604, 5
        %v4100 = vsel %vm1287, %v4098, %v4099
        %v4101 = vrot.slane %v4099, 4
        %v4102 = vrot.slane %v3605, 5
        %v4103 = vsel %vm1287, %v4101, %v4102
        %v4104 = vrot.slane %v3606, 5
        %v4105 = vrot.slane %v4104, 4
        %v4106 = vrot.slane %v3607, 5
        %v4107 = vsel %vm1287, %v4105, %v4106
        %v4108 = vrot.slane %v4106, 4
        %v4109 = vrot.slane %v3608, 5
        %v4110 = vsel %vm1287, %v4108, %v4109
        %v4111 = vrot.slane %v3609, 5
        %v4112 = vrot.slane %v4111, 4
        %v4113 = vrot.slane %v3610, 5
        %v4114 = vsel %vm1287, %v4112, %v4113
        %v4115 = vrot.slane %v4113, 4
        %v4116 = vrot.slane %v3611, 5
        %v4117 = vsel %vm1287, %v4115, %v4116
        %v4118 = vrot.slane %v3612, 5
        %v4119 = vrot.slane %v4118, 4
        %v4120 = vrot.slane %v3613, 5
        %v4121 = vsel %vm1287, %v4119, %v4120
        %v4122 = vrot.slane %v4120, 4
        %v4123 = vrot.slane %v3614, 5
        %v4124 = vsel %vm1287, %v4122, %v4123
        %v4125 = vrot.slane %v3615, 5
        %v4126 = vrot.slane %v4125, 4
        %v4127 = vrot.slane %v3616, 5
        %v4128 = vsel %vm1287, %v4126, %v4127
        %v4129 = vrot.slane %v4127, 4
        %v4130 = vrot.slane %v3617, 5
        %v4131 = vsel %vm1287, %v4129, %v4130
        %v4132 = vrot.slane %v3618, 5
        %v4133 = vrot.slane %v4132, 4
        %v4134 = vrot.slane %v3619, 5
        %v4135 = vsel %vm1287, %v4133, %v4134
        %v4136 = vrot.slane %v4134, 4
        %v4137 = vrot.slane %v3620, 5
        %v4138 = vsel %vm1287, %v4136, %v4137
        %v4139 = vrot.slane %v3621, 5
        %v4140 = vrot.slane %v4139, 4
        %v4141 = vrot.slane %v3622, 5
        %v4142 = vsel %vm1287, %v4140, %v4141
        %v4143 = vrot.slane %v4141, 4
        %v4144 = vrot.slane %v3623, 5
        %v4145 = vsel %vm1287, %v4143, %v4144
        %v4146 = vrot.slane %v3624, 5
        %v4147 = vrot.slane %v4146, 4
        %v4148 = vrot.slane %v3625, 5
        %v4149 = vsel %vm1287, %v4147, %v4148
        %v4150 = vrot.slane %v4148, 4
        %v4151 = vrot.slane %v3626, 5
        %v4152 = vsel %vm1287, %v4150, %v4151
        %v4153 = vrot.slane %v3627, 5
        %v4154 = vrot.slane %v4153, 4
        %v4155 = vrot.slane %v3628, 5
        %v4156 = vsel %vm1287, %v4154, %v4155
        %v4157 = vrot.slane %v4155, 4
        %v4158 = vrot.slane %v3629, 5
        %v4159 = vsel %vm1287, %v4157, %v4158
        %v4160 = vrot.slane %v3630, 5
        %v4161 = vrot.slane %v4160, 4
        %v4162 = vrot.slane %v3631, 5
        %v4163 = vsel %vm1287, %v4161, %v4162
        %v4164 = vrot.slane %v4162, 4
        %v4165 = vrot.slane %v3632, 5
        %v4166 = vsel %vm1287, %v4164, %v4165
        %v4167 = vrot.slane %v3633, 5
        %v4168 = vrot.slane %v4167, 4
        %v4169 = vrot.slane %v3634, 5
        %v4170 = vsel %vm1287, %v4168, %v4169
        %v4171 = vrot.slane %v4169, 4
        %v4172 = vrot.slane %v3635, 5
        %v4173 = vsel %vm1287, %v4171, %v4172
        %v4174 = vrot.slane %v3636, 5
        %v4175 = vrot.slane %v4174, 4
        %v4176 = vrot.slane %v3637, 5
        %v4177 = vsel %vm1287, %v4175, %v4176
        %v4178 = vrot.slane %v4176, 4
        %v4179 = vrot.slane %v3638, 5
        %v4180 = vsel %vm1287, %v4178, %v4179
        %v4181 = vrot.slane %v3639, 5
        %v4182 = vrot.slane %v4181, 4
        %v4183 = vrot.slane %v3640, 5
        %v4184 = vsel %vm1287, %v4182, %v4183
        %v4185 = vrot.slane %v4183, 4
        %v4186 = vrot.slane %v3641, 5
        %v4187 = vsel %vm1287, %v4185, %v4186
        %v4188 = vrot.slane %v3642, 5
        %v4189 = vrot.slane %v4188, 4
        %v4190 = vrot.slane %v3643, 5
        %v4191 = vsel %vm1287, %v4189, %v4190
        %v4192 = vrot.slane %v4190, 4
        %v4193 = vrot.slane %v3644, 5
        %v4194 = vsel %vm1287, %v4192, %v4193
        %v4196 = vshrl.u32 %v3645, 16
        %v4198 = vrot.slane %v4196, 4
        %v4199 = vshll.u32 %v3645, 16
        %v4201 = vrot.slane %v4199, 5
        %v4202 = vor.u32 %v4198, %v4201
        %v4203 = vrot.slane %v4202, 4
        %v4205 = vshll.u32 %v3646, 16
        %v4207 = vrot.slane %v4205, 5
        %v4208 = vsel %vm852, %v4203, %v4207
        %v4209 = vshrl.u32 %v3646, 16
        %v4211 = vrot.slane %v4209, 4
        %v4212 = vor.u32 %v4211, %v4207
        %v4213 = vrot.slane %v4212, 4
        %v4215 = vshll.u32 %v3647, 16
        %v4217 = vrot.slane %v4215, 5
        %v4218 = vsel %vm852, %v4213, %v4217
        %v4222 = vrot.slane %v3645, 5
        %v4223 = vrot.slane %v4222, 4
        %v4224 = vrot.slane %v3646, 5
        %v4225 = vsel %vm1287, %v4223, %v4224
        %v4226 = vrot.slane %v4224, 4
        %v4227 = vrot.slane %v3647, 5
        %v4228 = vsel %vm1287, %v4226, %v4227
        %v4230 = vshrl.u32 %v3648, 16
        %v4232 = vrot.slane %v4230, 4
        %v4233 = vshll.u32 %v3648, 16
        %v4235 = vrot.slane %v4233, 5
        %v4236 = vor.u32 %v4232, %v4235
        %v4237 = vrot.slane %v4236, 4
        %v4239 = vshll.u32 %v3649, 16
        %v4241 = vrot.slane %v4239, 5
        %v4242 = vsel %vm852, %v4237, %v4241
        %v4243 = vshrl.u32 %v3649, 16
        %v4245 = vrot.slane %v4243, 4
        %v4246 = vor.u32 %v4245, %v4241
        %v4247 = vrot.slane %v4246, 4
        %v4249 = vshll.u32 %v3650, 16
        %v4251 = vrot.slane %v4249, 5
        %v4252 = vsel %vm852, %v4247, %v4251
        %v4256 = vrot.slane %v3648, 5
        %v4257 = vrot.slane %v4256, 4
        %v4258 = vrot.slane %v3649, 5
        %v4259 = vsel %vm1287, %v4257, %v4258
        %v4260 = vrot.slane %v4258, 4
        %v4261 = vrot.slane %v3650, 5
        %v4262 = vsel %vm1287, %v4260, %v4261
        %v4263 = vunpack.c.l.b16 %v3597
        %v4264 = vunpack.c.l.b16 %v3598
        %v4265 = vunpack.c.l.b16 %v3600
        %v4266 = vunpack.c.l.b16 %v3601
        %v4267 = vunpack.c.l.b16 %v3603
        %v4268 = vunpack.c.l.b16 %v3604
        %v4269 = vunpack.c.l.b16 %v3606
        %v4270 = vunpack.c.l.b16 %v3607
        %v4271 = vunpack.c.l.b16 %v3609
        %v4272 = vunpack.c.l.b16 %v3610
        %v4273 = vunpack.c.l.b16 %v3612
        %v4274 = vunpack.c.l.b16 %v3613
        %v4275 = vunpack.c.l.b16 %v3615
        %v4276 = vunpack.c.l.b16 %v3616
        %v4277 = vunpack.c.l.b16 %v3618
        %v4278 = vunpack.c.l.b16 %v3619
        %v4279 = vunpack.c.l.b16 %v3621
        %v4280 = vunpack.c.l.b16 %v3622
        %v4281 = vunpack.c.l.b16 %v3624
        %v4282 = vunpack.c.l.b16 %v3625
        %v4283 = vunpack.c.l.b16 %v3627
        %v4284 = vunpack.c.l.b16 %v3628
        %v4285 = vunpack.c.l.b16 %v3630
        %v4286 = vunpack.c.l.b16 %v3631
        %v4287 = vunpack.c.l.b16 %v3633
        %v4288 = vunpack.c.l.b16 %v3634
        %v4289 = vunpack.c.l.b16 %v3636
        %v4290 = vunpack.c.l.b16 %v3637
        %v4291 = vunpack.c.l.b16 %v3639
        %v4292 = vunpack.c.l.b16 %v3640
        %v4293 = vunpack.c.l.b16 %v3642
        %v4294 = vunpack.c.l.b16 %v3643
        %v4295 = vpack.c.b16 %v4264, %v4263
        %v4296 = vpack.c.b16 %v4266, %v4265
        %v4297 = vpack.c.b16 %v4268, %v4267
        %v4298 = vpack.c.b16 %v4270, %v4269
        %v4299 = vpack.c.b16 %v4272, %v4271
        %v4300 = vpack.c.b16 %v4274, %v4273
        %v4301 = vpack.c.b16 %v4276, %v4275
        %v4302 = vpack.c.b16 %v4278, %v4277
        %v4303 = vpack.c.b16 %v4280, %v4279
        %v4304 = vpack.c.b16 %v4282, %v4281
        %v4305 = vpack.c.b16 %v4284, %v4283
        %v4306 = vpack.c.b16 %v4286, %v4285
        %v4307 = vpack.c.b16 %v4288, %v4287
        %v4308 = vpack.c.b16 %v4290, %v4289
        %v4309 = vpack.c.b16 %v4292, %v4291
        %v4310 = vpack.c.b16 %v4294, %v4293
        %v4327 = vunpack.c.l.b16 %v3664
        %v4328 = vunpack.c.l.b16 %v3674
        %v4329 = vunpack.c.l.b16 %v3688
        %v4330 = vunpack.c.l.b16 %v3698
        %v4331 = vunpack.c.l.b16 %v3712
        %v4332 = vunpack.c.l.b16 %v3722
        %v4333 = vunpack.c.l.b16 %v3736
        %v4334 = vunpack.c.l.b16 %v3746
        %v4335 = vunpack.c.l.b16 %v3760
        %v4336 = vunpack.c.l.b16 %v3770
        %v4337 = vunpack.c.l.b16 %v3784
        %v4338 = vunpack.c.l.b16 %v3794
        %v4339 = vunpack.c.l.b16 %v3808
        %v4340 = vunpack.c.l.b16 %v3818
        %v4341 = vunpack.c.l.b16 %v3832
        %v4342 = vunpack.c.l.b16 %v3842
        %v4343 = vunpack.c.l.b16 %v3856
        %v4344 = vunpack.c.l.b16 %v3866
        %v4345 = vunpack.c.l.b16 %v3880
        %v4346 = vunpack.c.l.b16 %v3890
        %v4347 = vunpack.c.l.b16 %v3904
        %v4348 = vunpack.c.l.b16 %v3914
        %v4349 = vunpack.c.l.b16 %v3928
        %v4350 = vunpack.c.l.b16 %v3938
        %v4351 = vunpack.c.l.b16 %v3952
        %v4352 = vunpack.c.l.b16 %v3962
        %v4353 = vunpack.c.l.b16 %v3976
        %v4354 = vunpack.c.l.b16 %v3986
        %v4355 = vunpack.c.l.b16 %v4000
        %v4356 = vunpack.c.l.b16 %v4010
        %v4357 = vunpack.c.l.b16 %v4024
        %v4358 = vunpack.c.l.b16 %v4034
        %v4359 = vpack.c.b16 %v4328, %v4327
        %v4360 = vpack.c.b16 %v4330, %v4329
        %v4361 = vpack.c.b16 %v4332, %v4331
        %v4362 = vpack.c.b16 %v4334, %v4333
        %v4363 = vpack.c.b16 %v4336, %v4335
        %v4364 = vpack.c.b16 %v4338, %v4337
        %v4365 = vpack.c.b16 %v4340, %v4339
        %v4366 = vpack.c.b16 %v4342, %v4341
        %v4367 = vpack.c.b16 %v4344, %v4343
        %v4368 = vpack.c.b16 %v4346, %v4345
        %v4369 = vpack.c.b16 %v4348, %v4347
        %v4370 = vpack.c.b16 %v4350, %v4349
        %v4371 = vpack.c.b16 %v4352, %v4351
        %v4372 = vpack.c.b16 %v4354, %v4353
        %v4373 = vpack.c.b16 %v4356, %v4355
        %v4374 = vpack.c.b16 %v4358, %v4357
        %v4391 = vunpack.c.l.b16 %v4086
        %v4392 = vunpack.c.l.b16 %v4089
        %v4393 = vunpack.c.l.b16 %v4093
        %v4394 = vunpack.c.l.b16 %v4096
        %v4395 = vunpack.c.l.b16 %v4100
        %v4396 = vunpack.c.l.b16 %v4103
        %v4397 = vunpack.c.l.b16 %v4107
        %v4398 = vunpack.c.l.b16 %v4110
        %v4399 = vunpack.c.l.b16 %v4114
        %v4400 = vunpack.c.l.b16 %v4117
        %v4401 = vunpack.c.l.b16 %v4121
        %v4402 = vunpack.c.l.b16 %v4124
        %v4403 = vunpack.c.l.b16 %v4128
        %v4404 = vunpack.c.l.b16 %v4131
        %v4405 = vunpack.c.l.b16 %v4135
        %v4406 = vunpack.c.l.b16 %v4138
        %v4407 = vunpack.c.l.b16 %v4142
        %v4408 = vunpack.c.l.b16 %v4145
        %v4409 = vunpack.c.l.b16 %v4149
        %v4410 = vunpack.c.l.b16 %v4152
        %v4411 = vunpack.c.l.b16 %v4156
        %v4412 = vunpack.c.l.b16 %v4159
        %v4413 = vunpack.c.l.b16 %v4163
        %v4414 = vunpack.c.l.b16 %v4166
        %v4415 = vunpack.c.l.b16 %v4170
        %v4416 = vunpack.c.l.b16 %v4173
        %v4417 = vunpack.c.l.b16 %v4177
        %v4418 = vunpack.c.l.b16 %v4180
        %v4419 = vunpack.c.l.b16 %v4184
        %v4420 = vunpack.c.l.b16 %v4187
        %v4421 = vunpack.c.l.b16 %v4191
        %v4422 = vunpack.c.l.b16 %v4194
        %v4423 = vpack.c.b16 %v4392, %v4391
        %v4424 = vpack.c.b16 %v4394, %v4393
        %v4425 = vpack.c.b16 %v4396, %v4395
        %v4426 = vpack.c.b16 %v4398, %v4397
        %v4427 = vpack.c.b16 %v4400, %v4399
        %v4428 = vpack.c.b16 %v4402, %v4401
        %v4429 = vpack.c.b16 %v4404, %v4403
        %v4430 = vpack.c.b16 %v4406, %v4405
        %v4431 = vpack.c.b16 %v4408, %v4407
        %v4432 = vpack.c.b16 %v4410, %v4409
        %v4433 = vpack.c.b16 %v4412, %v4411
        %v4434 = vpack.c.b16 %v4414, %v4413
        %v4435 = vpack.c.b16 %v4416, %v4415
        %v4436 = vpack.c.b16 %v4418, %v4417
        %v4437 = vpack.c.b16 %v4420, %v4419
        %v4438 = vpack.c.b16 %v4422, %v4421
        %v4455 = vunpack.c.l.b16 %v3645
        %v4456 = vunpack.c.l.b16 %v3646
        %v4457 = vpack.c.b16 %v4456, %v4455
        %v4459 = vunpack.c.l.b16 %v4208
        %v4460 = vunpack.c.l.b16 %v4218
        %v4461 = vpack.c.b16 %v4460, %v4459
        %v4463 = vunpack.c.l.b16 %v4225
        %v4464 = vunpack.c.l.b16 %v4228
        %v4465 = vpack.c.b16 %v4464, %v4463
        %v4467 = vunpack.c.l.b16 %v3648
        %v4468 = vunpack.c.l.b16 %v3649
        %v4469 = vpack.c.b16 %v4468, %v4467
        %v4471 = vunpack.c.l.b16 %v4242
        %v4472 = vunpack.c.l.b16 %v4252
        %v4473 = vpack.c.b16 %v4472, %v4471
        %v4475 = vunpack.c.l.b16 %v4259
        %v4476 = vunpack.c.l.b16 %v4262
        %v4477 = vpack.c.b16 %v4476, %v4475
        %v4479 = vld [vmem:[#allocation9] sm:$0xf]
        %v4480 = vld [vmem:[#allocation9 + $0x4] sm:$0xf]
        %v4481 = vld [vmem:[#allocation9 + $0x8] sm:$0xf]
        %v4482 = vld [vmem:[#allocation9 + $0xc] sm:$0xf]
        %v4483 = vld [vmem:[#allocation9 + $0x10] sm:$0xf]
        %v4484 = vld [vmem:[#allocation9 + $0x14] sm:$0xf]
        %v4485 = vld [vmem:[#allocation9 + $0x18] sm:$0xf]
        %v4486 = vld [vmem:[#allocation9 + $0x1c] sm:$0xf]
        %v4487 = vld [vmem:[#allocation9 + $0x20] sm:$0xf]
        %v4488 = vld [vmem:[#allocation9 + $0x24] sm:$0xf]
        %v4489 = vld [vmem:[#allocation9 + $0x28] sm:$0xf]
        %v4490 = vld [vmem:[#allocation9 + $0x2c] sm:$0xf]
        %v4491 = vld [vmem:[#allocation9 + $0x30] sm:$0xf]
        %v4492 = vld [vmem:[#allocation9 + $0x34] sm:$0xf]
        %v4493 = vld [vmem:[#allocation9 + $0x38] sm:$0xf]
        %v4494 = vld [vmem:[#allocation9 + $0x3c] sm:$0xf]
        %v4495 = vld [vmem:[#allocation9 + $0x40] sm:$0xf]
        %v4496 = vld [vmem:[#allocation9 + $0x44] sm:$0xf]
        %v4497 = vld [vmem:[#allocation9 + $0x48] sm:$0xf]
        %v4498 = vld [vmem:[#allocation9 + $0x4c] sm:$0xf]
        %v4499 = vld [vmem:[#allocation9 + $0x50] sm:$0xf]
        %v4500 = vld [vmem:[#allocation9 + $0x54] sm:$0xf]
        %v4501 = vld [vmem:[#allocation9 + $0x58] sm:$0xf]
        %v4502 = vld [vmem:[#allocation9 + $0x5c] sm:$0xf]
        %v4503 = vld [vmem:[#allocation9 + $0x60] sm:$0xf]
        %v4504 = vld [vmem:[#allocation9 + $0x64] sm:$0xf]
        %v4505 = vld [vmem:[#allocation9 + $0x68] sm:$0xf]
        %v4506 = vld [vmem:[#allocation9 + $0x6c] sm:$0xf]
        %v4507 = vld [vmem:[#allocation9 + $0x70] sm:$0xf]
        %v4508 = vld [vmem:[#allocation9 + $0x74] sm:$0xf]
        %v4509 = vld [vmem:[#allocation9 + $0x78] sm:$0xf]
        %v4510 = vld [vmem:[#allocation9 + $0x7c] sm:$0xf]
        %v4511 = vld [vmem:[#allocation9 + $0x80] sm:$0xf]
        %v4512 = vld [vmem:[#allocation9 + $0x84] sm:$0xf]
        %v4513 = vld [vmem:[#allocation9 + $0x88] sm:$0xf]
        %v4514 = vld [vmem:[#allocation9 + $0x8c] sm:$0xf]
        %v4515 = vld [vmem:[#allocation9 + $0x90] sm:$0xf]
        %v4516 = vld [vmem:[#allocation9 + $0x94] sm:$0xf]
        %v4517 = vld [vmem:[#allocation9 + $0x98] sm:$0xf]
        %v4518 = vld [vmem:[#allocation9 + $0x9c] sm:$0xf]
        %v4519 = vld [vmem:[#allocation9 + $0xa0] sm:$0xf]
        %v4520 = vld [vmem:[#allocation9 + $0xa4] sm:$0xf]
        %v4521 = vld [vmem:[#allocation9 + $0xa8] sm:$0xf]
        %v4522 = vld [vmem:[#allocation9 + $0xac] sm:$0xf]
        %v4523 = vld [vmem:[#allocation9 + $0xb0] sm:$0xf]
        %v4524 = vld [vmem:[#allocation9 + $0xb4] sm:$0xf]
        %v4525 = vld [vmem:[#allocation9 + $0xb8] sm:$0xf]
        %v4526 = vld [vmem:[#allocation9 + $0xbc] sm:$0xf]
        %v4527 = vld [vmem:[#allocation9 + $0xc0] sm:$0xf]
        %v4528 = vld [vmem:[#allocation9 + $0xc4] sm:$0xf]
        %v4529 = vld [vmem:[#allocation9 + $0xc8] sm:$0xf]
        %v4530 = vld [vmem:[#allocation9 + $0xcc] sm:$0xf]
        %v4531 = vld [vmem:[#allocation9 + $0xd0] sm:$0xf]
        %v4532 = vld [vmem:[#allocation9 + $0xd4] sm:$0xf]
        %v4533 = vld [vmem:[#allocation9 + $0xd8] sm:$0xf]
        %v4534 = vld [vmem:[#allocation9 + $0xdc] sm:$0xf]
        %v4535 = vld [vmem:[#allocation9 + $0xe0] sm:$0xf]
        %v4536 = vld [vmem:[#allocation9 + $0xe4] sm:$0xf]
        %v4537 = vld [vmem:[#allocation9 + $0xe8] sm:$0xf]
        %v4538 = vld [vmem:[#allocation9 + $0xec] sm:$0xf]
        %v4539 = vld [vmem:[#allocation9 + $0xf0] sm:$0xf]
        %v4540 = vld [vmem:[#allocation9 + $0xf4] sm:$0xf]
        %v4541 = vld [vmem:[#allocation9 + $0xf8] sm:$0xf]
        %v4542 = vld [vmem:[#allocation9 + $0xfc] sm:$0xf]
        %v4543 = vld [vmem:[#allocation9 + $0x100] sm:$0xf]
        %v4544 = vld [vmem:[#allocation9 + $0x104] sm:$0xf]
        %v4545 = vld [vmem:[#allocation9 + $0x108] sm:$0xf]
        %v4546 = vld [vmem:[#allocation9 + $0x10c] sm:$0xf]
        %v4547 = vld [vmem:[#allocation9 + $0x110] sm:$0xf]
        %v4548 = vld [vmem:[#allocation9 + $0x114] sm:$0xf]
        %v4549 = vld [vmem:[#allocation9 + $0x118] sm:$0xf]
        %v4550 = vld [vmem:[#allocation9 + $0x11c] sm:$0xf]
        %v4551 = vld [vmem:[#allocation9 + $0x120] sm:$0xf]
        %v4552 = vld [vmem:[#allocation9 + $0x124] sm:$0xf]
        %v4553 = vld [vmem:[#allocation9 + $0x128] sm:$0xf]
        %v4554 = vld [vmem:[#allocation9 + $0x12c] sm:$0xf]
        %v4555 = vld [vmem:[#allocation9 + $0x130] sm:$0xf]
        %v4556 = vld [vmem:[#allocation9 + $0x134] sm:$0xf]
        %v4557 = vld [vmem:[#allocation9 + $0x138] sm:$0xf]
        %v4558 = vld [vmem:[#allocation9 + $0x13c] sm:$0xf]
        %v4559 = vld [vmem:[#allocation9 + $0x140] sm:$0xf]
        %v4560 = vld [vmem:[#allocation9 + $0x144] sm:$0xf]
        %v4561 = vld [vmem:[#allocation9 + $0x148] sm:$0xf]
        %v4562 = vld [vmem:[#allocation9 + $0x14c] sm:$0xf]
        %v4563 = vld [vmem:[#allocation9 + $0x150] sm:$0xf]
        %v4564 = vld [vmem:[#allocation9 + $0x154] sm:$0xf]
        %v4565 = vld [vmem:[#allocation9 + $0x158] sm:$0xf]
        %v4566 = vld [vmem:[#allocation9 + $0x15c] sm:$0xf]
        %v4567 = vld [vmem:[#allocation9 + $0x160] sm:$0xf]
        %v4568 = vld [vmem:[#allocation9 + $0x164] sm:$0xf]
        %v4569 = vld [vmem:[#allocation9 + $0x168] sm:$0xf]
        %v4570 = vld [vmem:[#allocation9 + $0x16c] sm:$0xf]
        %v4571 = vld [vmem:[#allocation9 + $0x170] sm:$0xf]
        %v4572 = vld [vmem:[#allocation9 + $0x174] sm:$0xf]
        %v4573 = vld [vmem:[#allocation9 + $0x178] sm:$0xf]
        %v4574 = vld [vmem:[#allocation9 + $0x17c] sm:$0xf]
        %v4575 = vld [vmem:[#allocation9 + $0x180] sm:$0xf]
        %v4576 = vld [vmem:[#allocation9 + $0x184] sm:$0xf]
        %v4577 = vld [vmem:[#allocation9 + $0x188] sm:$0xf]
        %v4578 = vld [vmem:[#allocation9 + $0x18c] sm:$0xf]
        %v4579 = vld [vmem:[#allocation9 + $0x190] sm:$0xf]
        %v4580 = vld [vmem:[#allocation9 + $0x194] sm:$0xf]
        %v4581 = vld [vmem:[#allocation9 + $0x198] sm:$0xf]
        %v4582 = vld [vmem:[#allocation9 + $0x19c] sm:$0xf]
        %v4583 = vld [vmem:[#allocation9 + $0x1a0] sm:$0xf]
        %v4584 = vld [vmem:[#allocation9 + $0x1a4] sm:$0xf]
        %v4585 = vld [vmem:[#allocation9 + $0x1a8] sm:$0xf]
        %v4586 = vld [vmem:[#allocation9 + $0x1ac] sm:$0xf]
        %v4587 = vld [vmem:[#allocation9 + $0x1b0] sm:$0xf]
        %v4588 = vld [vmem:[#allocation9 + $0x1b4] sm:$0xf]
        %v4589 = vld [vmem:[#allocation9 + $0x1b8] sm:$0xf]
        %v4590 = vld [vmem:[#allocation9 + $0x1bc] sm:$0xf]
        %v4591 = vld [vmem:[#allocation9 + $0x1c0] sm:$0xf]
        %v4592 = vld [vmem:[#allocation9 + $0x1c4] sm:$0xf]
        %v4593 = vld [vmem:[#allocation9 + $0x1c8] sm:$0xf]
        %v4594 = vld [vmem:[#allocation9 + $0x1cc] sm:$0xf]
        %v4595 = vld [vmem:[#allocation9 + $0x1d0] sm:$0xf]
        %v4596 = vld [vmem:[#allocation9 + $0x1d4] sm:$0xf]
        %v4597 = vld [vmem:[#allocation9 + $0x1d8] sm:$0xf]
        %v4598 = vld [vmem:[#allocation9 + $0x1dc] sm:$0xf]
        %v4599 = vld [vmem:[#allocation9 + $0x1e0] sm:$0xf]
        %v4600 = vld [vmem:[#allocation9 + $0x1e4] sm:$0xf]
        %v4601 = vld [vmem:[#allocation9 + $0x1e8] sm:$0xf]
        %v4602 = vld [vmem:[#allocation9 + $0x1ec] sm:$0xf]
        %v4603 = vld [vmem:[#allocation9 + $0x1f0] sm:$0xf]
        %v4604 = vld [vmem:[#allocation9 + $0x1f4] sm:$0xf]
        %v4605 = vld [vmem:[#allocation9 + $0x1f8] sm:$0xf]
        %v4606 = vld [vmem:[#allocation9 + $0x1fc] sm:$0xf]
        %v4607 = vld [vmem:[#allocation9 + $0x200] sm:$0xf]
        %v4608 = vld [vmem:[#allocation9 + $0x204] sm:$0xf]
        %v4609 = vld [vmem:[#allocation9 + $0x208] sm:$0xf]
        %v4610 = vld [vmem:[#allocation9 + $0x20c] sm:$0xf]
        %v4611 = vld [vmem:[#allocation9 + $0x210] sm:$0xf]
        %v4612 = vld [vmem:[#allocation9 + $0x214] sm:$0xf]
        %v4613 = vld [vmem:[#allocation9 + $0x218] sm:$0xf]
        %v4614 = vld [vmem:[#allocation9 + $0x21c] sm:$0xf]
        %v4615 = vld [vmem:[#allocation9 + $0x220] sm:$0xf]
        %v4616 = vld [vmem:[#allocation9 + $0x224] sm:$0xf]
        %v4617 = vld [vmem:[#allocation9 + $0x228] sm:$0xf]
        %v4618 = vld [vmem:[#allocation9 + $0x22c] sm:$0xf]
        %v4619 = vld [vmem:[#allocation9 + $0x230] sm:$0xf]
        %v4620 = vld [vmem:[#allocation9 + $0x234] sm:$0xf]
        %v4621 = vld [vmem:[#allocation9 + $0x238] sm:$0xf]
        %v4622 = vld [vmem:[#allocation9 + $0x23c] sm:$0xf]
        %v4767 = vunpack.c.l.b16 %v4479
        %v4768 = vunpack.c.l.b16 %v4480
        %v4769 = vunpack.c.l.b16 %v4481
        %v4770 = vunpack.c.l.b16 %v4482
        %v4771 = vunpack.c.l.b16 %v4483
        %v4772 = vunpack.c.l.b16 %v4484
        %v4773 = vunpack.c.l.b16 %v4485
        %v4774 = vunpack.c.l.b16 %v4486
        %v4775 = vunpack.c.l.b16 %v4487
        %v4776 = vunpack.c.l.b16 %v4488
        %v4777 = vunpack.c.l.b16 %v4489
        %v4778 = vunpack.c.l.b16 %v4490
        %v4779 = vunpack.c.l.b16 %v4491
        %v4780 = vunpack.c.l.b16 %v4492
        %v4781 = vunpack.c.l.b16 %v4493
        %v4782 = vunpack.c.l.b16 %v4494
        %v4783 = vunpack.c.l.b16 %v4495
        %v4784 = vunpack.c.l.b16 %v4496
        %v4785 = vunpack.c.l.b16 %v4497
        %v4786 = vunpack.c.l.b16 %v4498
        %v4787 = vunpack.c.l.b16 %v4499
        %v4788 = vunpack.c.l.b16 %v4500
        %v4789 = vunpack.c.l.b16 %v4501
        %v4790 = vunpack.c.l.b16 %v4502
        %v4791 = vunpack.c.l.b16 %v4503
        %v4792 = vunpack.c.l.b16 %v4504
        %v4793 = vunpack.c.l.b16 %v4505
        %v4794 = vunpack.c.l.b16 %v4506
        %v4795 = vunpack.c.l.b16 %v4507
        %v4796 = vunpack.c.l.b16 %v4508
        %v4797 = vunpack.c.l.b16 %v4509
        %v4798 = vunpack.c.l.b16 %v4510
        %v4799 = vunpack.c.l.b16 %v4511
        %v4800 = vunpack.c.l.b16 %v4512
        %v4801 = vunpack.c.l.b16 %v4513
        %v4802 = vunpack.c.l.b16 %v4514
        %v4803 = vunpack.c.l.b16 %v4515
        %v4804 = vunpack.c.l.b16 %v4516
        %v4805 = vunpack.c.l.b16 %v4517
        %v4806 = vunpack.c.l.b16 %v4518
        %v4807 = vunpack.c.l.b16 %v4519
        %v4808 = vunpack.c.l.b16 %v4520
        %v4809 = vunpack.c.l.b16 %v4521
        %v4810 = vunpack.c.l.b16 %v4522
        %v4811 = vunpack.c.l.b16 %v4523
        %v4812 = vunpack.c.l.b16 %v4524
        %v4813 = vunpack.c.l.b16 %v4525
        %v4814 = vunpack.c.l.b16 %v4526
        %v4815 = vunpack.c.l.b16 %v4527
        %v4816 = vunpack.c.l.b16 %v4528
        %v4817 = vunpack.c.l.b16 %v4529
        %v4818 = vunpack.c.l.b16 %v4530
        %v4819 = vunpack.c.l.b16 %v4531
        %v4820 = vunpack.c.l.b16 %v4532
        %v4821 = vunpack.c.l.b16 %v4533
        %v4822 = vunpack.c.l.b16 %v4534
        %v4823 = vunpack.c.l.b16 %v4535
        %v4824 = vunpack.c.l.b16 %v4536
        %v4825 = vunpack.c.l.b16 %v4537
        %v4826 = vunpack.c.l.b16 %v4538
        %v4827 = vunpack.c.l.b16 %v4539
        %v4828 = vunpack.c.l.b16 %v4540
        %v4829 = vunpack.c.l.b16 %v4541
        %v4830 = vunpack.c.l.b16 %v4542
        %v4831 = vunpack.c.l.b16 %v4543
        %v4832 = vunpack.c.l.b16 %v4544
        %v4833 = vunpack.c.l.b16 %v4545
        %v4834 = vunpack.c.l.b16 %v4546
        %v4835 = vunpack.c.l.b16 %v4547
        %v4836 = vunpack.c.l.b16 %v4548
        %v4837 = vunpack.c.l.b16 %v4549
        %v4838 = vunpack.c.l.b16 %v4550
        %v4839 = vunpack.c.l.b16 %v4551
        %v4840 = vunpack.c.l.b16 %v4552
        %v4841 = vunpack.c.l.b16 %v4553
        %v4842 = vunpack.c.l.b16 %v4554
        %v4843 = vunpack.c.l.b16 %v4555
        %v4844 = vunpack.c.l.b16 %v4556
        %v4845 = vunpack.c.l.b16 %v4557
        %v4846 = vunpack.c.l.b16 %v4558
        %v4847 = vunpack.c.l.b16 %v4559
        %v4848 = vunpack.c.l.b16 %v4560
        %v4849 = vunpack.c.l.b16 %v4561
        %v4850 = vunpack.c.l.b16 %v4562
        %v4851 = vunpack.c.l.b16 %v4563
        %v4852 = vunpack.c.l.b16 %v4564
        %v4853 = vunpack.c.l.b16 %v4565
        %v4854 = vunpack.c.l.b16 %v4566
        %v4855 = vunpack.c.l.b16 %v4567
        %v4856 = vunpack.c.l.b16 %v4568
        %v4857 = vunpack.c.l.b16 %v4569
        %v4858 = vunpack.c.l.b16 %v4570
        %v4859 = vunpack.c.l.b16 %v4571
        %v4860 = vunpack.c.l.b16 %v4572
        %v4861 = vunpack.c.l.b16 %v4573
        %v4862 = vunpack.c.l.b16 %v4574
        %v4863 = vunpack.c.l.b16 %v4575
        %v4864 = vunpack.c.l.b16 %v4576
        %v4865 = vunpack.c.l.b16 %v4577
        %v4866 = vunpack.c.l.b16 %v4578
        %v4867 = vunpack.c.l.b16 %v4579
        %v4868 = vunpack.c.l.b16 %v4580
        %v4869 = vunpack.c.l.b16 %v4581
        %v4870 = vunpack.c.l.b16 %v4582
        %v4871 = vunpack.c.l.b16 %v4583
        %v4872 = vunpack.c.l.b16 %v4584
        %v4873 = vunpack.c.l.b16 %v4585
        %v4874 = vunpack.c.l.b16 %v4586
        %v4875 = vunpack.c.l.b16 %v4587
        %v4876 = vunpack.c.l.b16 %v4588
        %v4877 = vunpack.c.l.b16 %v4589
        %v4878 = vunpack.c.l.b16 %v4590
        %v4879 = vunpack.c.l.b16 %v4591
        %v4880 = vunpack.c.l.b16 %v4592
        %v4881 = vunpack.c.l.b16 %v4593
        %v4882 = vunpack.c.l.b16 %v4594
        %v4883 = vunpack.c.l.b16 %v4595
        %v4884 = vunpack.c.l.b16 %v4596
        %v4885 = vunpack.c.l.b16 %v4597
        %v4886 = vunpack.c.l.b16 %v4598
        %v4887 = vunpack.c.l.b16 %v4599
        %v4888 = vunpack.c.l.b16 %v4600
        %v4889 = vunpack.c.l.b16 %v4601
        %v4890 = vunpack.c.l.b16 %v4602
        %v4891 = vunpack.c.l.b16 %v4603
        %v4892 = vunpack.c.l.b16 %v4604
        %v4893 = vunpack.c.l.b16 %v4605
        %v4894 = vunpack.c.l.b16 %v4606
        %v4895 = vunpack.c.l.b16 %v4607
        %v4896 = vunpack.c.l.b16 %v4608
        %v4897 = vunpack.c.l.b16 %v4609
        %v4898 = vunpack.c.l.b16 %v4610
        %v4899 = vunpack.c.l.b16 %v4611
        %v4900 = vunpack.c.l.b16 %v4612
        %v4901 = vunpack.c.l.b16 %v4613
        %v4902 = vunpack.c.l.b16 %v4614
        %v4903 = vunpack.c.l.b16 %v4615
        %v4904 = vunpack.c.l.b16 %v4616
        %v4905 = vunpack.c.l.b16 %v4617
        %v4906 = vunpack.c.l.b16 %v4618
        %v4907 = vunpack.c.l.b16 %v4619
        %v4908 = vunpack.c.l.b16 %v4620
        %v4909 = vunpack.c.l.b16 %v4621
        %v4910 = vunpack.c.l.b16 %v4622
        %v4911 = vpack.c.b16 %v4768, %v4767
        %v4912 = vpack.c.b16 %v4770, %v4769
        %v4913 = vpack.c.b16 %v4772, %v4771
        %v4914 = vpack.c.b16 %v4774, %v4773
        %v4915 = vpack.c.b16 %v4776, %v4775
        %v4916 = vpack.c.b16 %v4778, %v4777
        %v4917 = vpack.c.b16 %v4780, %v4779
        %v4918 = vpack.c.b16 %v4782, %v4781
        %v4919 = vpack.c.b16 %v4784, %v4783
        %v4920 = vpack.c.b16 %v4786, %v4785
        %v4921 = vpack.c.b16 %v4788, %v4787
        %v4922 = vpack.c.b16 %v4790, %v4789
        %v4923 = vpack.c.b16 %v4792, %v4791
        %v4924 = vpack.c.b16 %v4794, %v4793
        %v4925 = vpack.c.b16 %v4796, %v4795
        %v4926 = vpack.c.b16 %v4798, %v4797
        %v4927 = vpack.c.b16 %v4800, %v4799
        %v4928 = vpack.c.b16 %v4802, %v4801
        %v4929 = vpack.c.b16 %v4804, %v4803
        %v4930 = vpack.c.b16 %v4806, %v4805
        %v4931 = vpack.c.b16 %v4808, %v4807
        %v4932 = vpack.c.b16 %v4810, %v4809
        %v4933 = vpack.c.b16 %v4812, %v4811
        %v4934 = vpack.c.b16 %v4814, %v4813
        %v4935 = vpack.c.b16 %v4816, %v4815
        %v4936 = vpack.c.b16 %v4818, %v4817
        %v4937 = vpack.c.b16 %v4820, %v4819
        %v4938 = vpack.c.b16 %v4822, %v4821
        %v4939 = vpack.c.b16 %v4824, %v4823
        %v4940 = vpack.c.b16 %v4826, %v4825
        %v4941 = vpack.c.b16 %v4828, %v4827
        %v4942 = vpack.c.b16 %v4830, %v4829
        %v4943 = vpack.c.b16 %v4832, %v4831
        %v4944 = vpack.c.b16 %v4834, %v4833
        %v4945 = vpack.c.b16 %v4836, %v4835
        %v4946 = vpack.c.b16 %v4838, %v4837
        %v4947 = vpack.c.b16 %v4840, %v4839
        %v4948 = vpack.c.b16 %v4842, %v4841
        %v4949 = vpack.c.b16 %v4844, %v4843
        %v4950 = vpack.c.b16 %v4846, %v4845
        %v4951 = vpack.c.b16 %v4848, %v4847
        %v4952 = vpack.c.b16 %v4850, %v4849
        %v4953 = vpack.c.b16 %v4852, %v4851
        %v4954 = vpack.c.b16 %v4854, %v4853
        %v4955 = vpack.c.b16 %v4856, %v4855
        %v4956 = vpack.c.b16 %v4858, %v4857
        %v4957 = vpack.c.b16 %v4860, %v4859
        %v4958 = vpack.c.b16 %v4862, %v4861
        %v4959 = vpack.c.b16 %v4864, %v4863
        %v4960 = vpack.c.b16 %v4866, %v4865
        %v4961 = vpack.c.b16 %v4868, %v4867
        %v4962 = vpack.c.b16 %v4870, %v4869
        %v4963 = vpack.c.b16 %v4872, %v4871
        %v4964 = vpack.c.b16 %v4874, %v4873
        %v4965 = vpack.c.b16 %v4876, %v4875
        %v4966 = vpack.c.b16 %v4878, %v4877
        %v4967 = vpack.c.b16 %v4880, %v4879
        %v4968 = vpack.c.b16 %v4882, %v4881
        %v4969 = vpack.c.b16 %v4884, %v4883
        %v4970 = vpack.c.b16 %v4886, %v4885
        %v4971 = vpack.c.b16 %v4888, %v4887
        %v4972 = vpack.c.b16 %v4890, %v4889
        %v4973 = vpack.c.b16 %v4892, %v4891
        %v4974 = vpack.c.b16 %v4894, %v4893
        %v4975 = vpack.c.b16 %v4896, %v4895
        %v4976 = vpack.c.b16 %v4898, %v4897
        %v4977 = vpack.c.b16 %v4900, %v4899
        %v4978 = vpack.c.b16 %v4902, %v4901
        %v4979 = vpack.c.b16 %v4904, %v4903
        %v4980 = vpack.c.b16 %v4906, %v4905
        %v4981 = vpack.c.b16 %v4908, %v4907
        %v4982 = vpack.c.b16 %v4910, %v4909
        %5055 = vmatprep.subr.bf16.mxu0 0
        %5056 = vmatpush1.bf16.msra.mxu0 %v4918
        %5057 = vmatprep.subr.bf16.mxu0 0
        %5058 = vmatpush1.bf16.msra.mxu0 %v4917
        %5059 = vmatprep.subr.bf16.mxu0 0
        %5060 = vmatpush1.bf16.msra.mxu0 %v4916
        %5061 = vmatprep.subr.bf16.mxu0 0
        %5062 = vmatpush1.bf16.msra.mxu0 %v4915
        %5063 = vmatprep.subr.bf16.mxu0 0
        %5064 = vmatpush1.bf16.msra.mxu0 %v4914
        %5065 = vmatprep.subr.bf16.mxu0 0
        %5066 = vmatpush1.bf16.msra.mxu0 %v4913
        %5067 = vmatprep.subr.bf16.mxu0 0
        %5068 = vmatpush1.bf16.msra.mxu0 %v4912
        %5069 = vmatprep.subr.bf16.mxu0 0
        %5070 = vmatpush1.bf16.msra.mxu0 %v4911
        %5071 = vmatprep.subr.bf16.mxu0 0
        %5072 = vmatpush2.bf16.msra.mxu0 %v4926
        %5073 = vmatprep.subr.bf16.mxu0 0
        %5074 = vmatpush2.bf16.msra.mxu0 %v4925
        %5075 = vmatprep.subr.bf16.mxu0 0
        %5076 = vmatpush2.bf16.msra.mxu0 %v4924
        %5077 = vmatprep.subr.bf16.mxu0 0
        %5078 = vmatpush2.bf16.msra.mxu0 %v4923
        %5079 = vmatprep.subr.bf16.mxu0 0
        %5080 = vmatpush2.bf16.msra.mxu0 %v4922
        %5081 = vmatprep.subr.bf16.mxu0 0
        %5082 = vmatpush2.bf16.msra.mxu0 %v4921
        %5083 = vmatprep.subr.bf16.mxu0 0
        %5084 = vmatpush2.bf16.msra.mxu0 %v4920
        %5085 = vmatprep.subr.bf16.mxu0 0
        %5086 = vmatpush2.bf16.msra.mxu0 %v4919
        %5087 = vmatprep.mubr.bf16.mxu0 %v4359
        %5088 = vmatmul.mubr.bf16.gmra.mxu0 %v4295
        %v5089 = vpop.f32.mrf.mxu0
        %v5090 = vadd.f32 0.0, %v5089
        %v5091 = vpop.f32.mrf.mxu0
        %v5092 = vpop.f32.mrf.mxu0
        %v5093 = vadd.f32 0.0, %v5092
        %v5094 = vpop.f32.mrf.mxu0
        %5095 = vmatprep.mubr.bf16.mxu0 %v4360
        %5096 = vmatmul.mubr.bf16.gmra.mxu0 %v4296
        %v5097 = vpop.f32.mrf.mxu0
        %v5098 = vadd.f32 0.0, %v5097
        %v5099 = vpop.f32.mrf.mxu0
        %v5100 = vpop.f32.mrf.mxu0
        %v5101 = vadd.f32 0.0, %v5100
        %v5102 = vpop.f32.mrf.mxu0
        %5103 = vmatprep.mubr.bf16.mxu0 %v4361
        %5104 = vmatmul.mubr.bf16.gmra.mxu0 %v4297
        %v5105 = vpop.f32.mrf.mxu0
        %v5106 = vadd.f32 0.0, %v5105
        %v5107 = vpop.f32.mrf.mxu0
        %v5108 = vpop.f32.mrf.mxu0
        %v5109 = vadd.f32 0.0, %v5108
        %v5110 = vpop.f32.mrf.mxu0
        %5111 = vmatprep.mubr.bf16.mxu0 %v4362
        %5112 = vmatmul.mubr.bf16.gmra.mxu0 %v4298
        %v5113 = vpop.f32.mrf.mxu0
        %v5114 = vadd.f32 0.0, %v5113
        %v5115 = vpop.f32.mrf.mxu0
        %v5116 = vpop.f32.mrf.mxu0
        %v5117 = vadd.f32 0.0, %v5116
        %v5118 = vpop.f32.mrf.mxu0
        %5119 = vmatprep.mubr.bf16.mxu0 %v4363
        %5120 = vmatmul.mubr.bf16.gmra.mxu0 %v4299
        %v5121 = vpop.f32.mrf.mxu0
        %v5122 = vadd.f32 0.0, %v5121
        %v5123 = vpop.f32.mrf.mxu0
        %v5124 = vpop.f32.mrf.mxu0
        %v5125 = vadd.f32 0.0, %v5124
        %v5126 = vpop.f32.mrf.mxu0
        %5127 = vmatprep.mubr.bf16.mxu0 %v4364
        %5128 = vmatmul.mubr.bf16.gmra.mxu0 %v4300
        %v5129 = vpop.f32.mrf.mxu0
        %v5130 = vadd.f32 0.0, %v5129
        %v5131 = vpop.f32.mrf.mxu0
        %v5132 = vpop.f32.mrf.mxu0
        %v5133 = vadd.f32 0.0, %v5132
        %v5134 = vpop.f32.mrf.mxu0
        %5135 = vmatprep.mubr.bf16.mxu0 %v4365
        %5136 = vmatmul.mubr.bf16.gmra.mxu0 %v4301
        %v5137 = vpop.f32.mrf.mxu0
        %v5138 = vadd.f32 0.0, %v5137
        %v5139 = vpop.f32.mrf.mxu0
        %v5140 = vpop.f32.mrf.mxu0
        %v5141 = vadd.f32 0.0, %v5140
        %v5142 = vpop.f32.mrf.mxu0
        %5143 = vmatprep.mubr.bf16.mxu0 %v4366
        %5144 = vmatmul.mubr.bf16.gmra.mxu0 %v4302
        %v5145 = vpop.f32.mrf.mxu0
        %v5146 = vadd.f32 0.0, %v5145
        %v5147 = vpop.f32.mrf.mxu0
        %v5148 = vpop.f32.mrf.mxu0
        %v5149 = vadd.f32 0.0, %v5148
        %v5150 = vpop.f32.mrf.mxu0
        %5151 = vmatprep.mubr.bf16.mxu0 %v4367
        %5152 = vmatmul.mubr.bf16.gmra.mxu0 %v4303
        %v5153 = vpop.f32.mrf.mxu0
        %v5154 = vadd.f32 0.0, %v5153
        %v5155 = vpop.f32.mrf.mxu0
        %v5156 = vpop.f32.mrf.mxu0
        %v5157 = vadd.f32 0.0, %v5156
        %v5158 = vpop.f32.mrf.mxu0
        %5159 = vmatprep.mubr.bf16.mxu0 %v4368
        %5160 = vmatmul.mubr.bf16.gmra.mxu0 %v4304
        %v5161 = vpop.f32.mrf.mxu0
        %v5162 = vadd.f32 0.0, %v5161
        %v5163 = vpop.f32.mrf.mxu0
        %v5164 = vpop.f32.mrf.mxu0
        %v5165 = vadd.f32 0.0, %v5164
        %v5166 = vpop.f32.mrf.mxu0
        %5167 = vmatprep.mubr.bf16.mxu0 %v4369
        %5168 = vmatmul.mubr.bf16.gmra.mxu0 %v4305
        %v5169 = vpop.f32.mrf.mxu0
        %v5170 = vadd.f32 0.0, %v5169
        %v5171 = vpop.f32.mrf.mxu0
        %v5172 = vpop.f32.mrf.mxu0
        %v5173 = vadd.f32 0.0, %v5172
        %v5174 = vpop.f32.mrf.mxu0
        %5175 = vmatprep.mubr.bf16.mxu0 %v4370
        %5176 = vmatmul.mubr.bf16.gmra.mxu0 %v4306
        %v5177 = vpop.f32.mrf.mxu0
        %v5178 = vadd.f32 0.0, %v5177
        %v5179 = vpop.f32.mrf.mxu0
        %v5180 = vpop.f32.mrf.mxu0
        %v5181 = vadd.f32 0.0, %v5180
        %v5182 = vpop.f32.mrf.mxu0
        %5183 = vmatprep.mubr.bf16.mxu0 %v4371
        %5184 = vmatmul.mubr.bf16.gmra.mxu0 %v4307
        %v5185 = vpop.f32.mrf.mxu0
        %v5186 = vadd.f32 0.0, %v5185
        %v5187 = vpop.f32.mrf.mxu0
        %v5188 = vpop.f32.mrf.mxu0
        %v5189 = vadd.f32 0.0, %v5188
        %v5190 = vpop.f32.mrf.mxu0
        %5191 = vmatprep.mubr.bf16.mxu0 %v4372
        %5192 = vmatmul.mubr.bf16.gmra.mxu0 %v4308
        %v5193 = vpop.f32.mrf.mxu0
        %v5194 = vadd.f32 0.0, %v5193
        %v5195 = vpop.f32.mrf.mxu0
        %v5196 = vpop.f32.mrf.mxu0
        %v5197 = vadd.f32 0.0, %v5196
        %v5198 = vpop.f32.mrf.mxu0
        %5199 = vmatprep.mubr.bf16.mxu0 %v4373
        %5200 = vmatmul.mubr.bf16.gmra.mxu0 %v4309
        %v5201 = vpop.f32.mrf.mxu0
        %v5202 = vadd.f32 0.0, %v5201
        %v5203 = vpop.f32.mrf.mxu0
        %v5204 = vpop.f32.mrf.mxu0
        %v5205 = vadd.f32 0.0, %v5204
        %v5206 = vpop.f32.mrf.mxu0
        %5207 = vmatprep.mubr.bf16.mxu0 %v4374
        %5208 = vmatmul.mubr.bf16.gmra.mxu0 %v4310
        %v5209 = vpop.f32.mrf.mxu0
        %v5210 = vadd.f32 0.0, %v5209
        %v5211 = vpop.f32.mrf.mxu0
        %v5212 = vpop.f32.mrf.mxu0
        %v5213 = vadd.f32 0.0, %v5212
        %v5214 = vpop.f32.mrf.mxu0
        %5215 = vdwg.mxu0
        %5216 = vmatprep.subr.bf16.mxu0 0
        %5217 = vmatpush1.bf16.msra.mxu0 %v4934
        %5218 = vmatprep.subr.bf16.mxu0 0
        %5219 = vmatpush1.bf16.msra.mxu0 %v4933
        %5220 = vmatprep.subr.bf16.mxu0 0
        %5221 = vmatpush1.bf16.msra.mxu0 %v4932
        %5222 = vmatprep.subr.bf16.mxu0 0
        %5223 = vmatpush1.bf16.msra.mxu0 %v4931
        %5224 = vmatprep.subr.bf16.mxu0 0
        %5225 = vmatpush1.bf16.msra.mxu0 %v4930
        %5226 = vmatprep.subr.bf16.mxu0 0
        %5227 = vmatpush1.bf16.msra.mxu0 %v4929
        %5228 = vmatprep.subr.bf16.mxu0 0
        %5229 = vmatpush1.bf16.msra.mxu0 %v4928
        %5230 = vmatprep.subr.bf16.mxu0 0
        %5231 = vmatpush1.bf16.msra.mxu0 %v4927
        %5232 = vmatprep.subr.bf16.mxu0 0
        %5233 = vmatpush2.bf16.msra.mxu0 %v4942
        %5234 = vmatprep.subr.bf16.mxu0 0
        %5235 = vmatpush2.bf16.msra.mxu0 %v4941
        %5236 = vmatprep.subr.bf16.mxu0 0
        %5237 = vmatpush2.bf16.msra.mxu0 %v4940
        %5238 = vmatprep.subr.bf16.mxu0 0
        %5239 = vmatpush2.bf16.msra.mxu0 %v4939
        %5240 = vmatprep.subr.bf16.mxu0 0
        %5241 = vmatpush2.bf16.msra.mxu0 %v4938
        %5242 = vmatprep.subr.bf16.mxu0 0
        %5243 = vmatpush2.bf16.msra.mxu0 %v4937
        %5244 = vmatprep.subr.bf16.mxu0 0
        %5245 = vmatpush2.bf16.msra.mxu0 %v4936
        %5246 = vmatprep.subr.bf16.mxu0 0
        %5247 = vmatpush2.bf16.msra.mxu0 %v4935
        %5248 = vmatprep.mubr.bf16.mxu0 %v4296
        %5249 = vmatmul.mubr.bf16.gmra.mxu0 %v4423
        %v5250 = vpop.f32.mrf.mxu0
        %v5251 = vadd.f32 %v5090, %v5250
        %v5252 = vpop.f32.mrf.mxu0
        %v5253 = vpop.f32.mrf.mxu0
        %v5254 = vadd.f32 %v5093, %v5253
        %v5255 = vpop.f32.mrf.mxu0
        %5256 = vmatprep.mubr.bf16.mxu0 %v4297
        %5257 = vmatmul.mubr.bf16.gmra.mxu0 %v4424
        %v5258 = vpop.f32.mrf.mxu0
        %v5259 = vadd.f32 %v5098, %v5258
        %v5260 = vpop.f32.mrf.mxu0
        %v5261 = vpop.f32.mrf.mxu0
        %v5262 = vadd.f32 %v5101, %v5261
        %v5263 = vpop.f32.mrf.mxu0
        %5264 = vmatprep.mubr.bf16.mxu0 %v4298
        %5265 = vmatmul.mubr.bf16.gmra.mxu0 %v4425
        %v5266 = vpop.f32.mrf.mxu0
        %v5267 = vadd.f32 %v5106, %v5266
        %v5268 = vpop.f32.mrf.mxu0
        %v5269 = vpop.f32.mrf.mxu0
        %v5270 = vadd.f32 %v5109, %v5269
        %v5271 = vpop.f32.mrf.mxu0
        %5272 = vmatprep.mubr.bf16.mxu0 %v4299
        %5273 = vmatmul.mubr.bf16.gmra.mxu0 %v4426
        %v5274 = vpop.f32.mrf.mxu0
        %v5275 = vadd.f32 %v5114, %v5274
        %v5276 = vpop.f32.mrf.mxu0
        %v5277 = vpop.f32.mrf.mxu0
        %v5278 = vadd.f32 %v5117, %v5277
        %v5279 = vpop.f32.mrf.mxu0
        %5280 = vmatprep.mubr.bf16.mxu0 %v4300
        %5281 = vmatmul.mubr.bf16.gmra.mxu0 %v4427
        %v5282 = vpop.f32.mrf.mxu0
        %v5283 = vadd.f32 %v5122, %v5282
        %v5284 = vpop.f32.mrf.mxu0
        %v5285 = vpop.f32.mrf.mxu0
        %v5286 = vadd.f32 %v5125, %v5285
        %v5287 = vpop.f32.mrf.mxu0
        %5288 = vmatprep.mubr.bf16.mxu0 %v4301
        %5289 = vmatmul.mubr.bf16.gmra.mxu0 %v4428
        %v5290 = vpop.f32.mrf.mxu0
        %v5291 = vadd.f32 %v5130, %v5290
        %v5292 = vpop.f32.mrf.mxu0
        %v5293 = vpop.f32.mrf.mxu0
        %v5294 = vadd.f32 %v5133, %v5293
        %v5295 = vpop.f32.mrf.mxu0
        %5296 = vmatprep.mubr.bf16.mxu0 %v4302
        %5297 = vmatmul.mubr.bf16.gmra.mxu0 %v4429
        %v5298 = vpop.f32.mrf.mxu0
        %v5299 = vadd.f32 %v5138, %v5298
        %v5300 = vpop.f32.mrf.mxu0
        %v5301 = vpop.f32.mrf.mxu0
        %v5302 = vadd.f32 %v5141, %v5301
        %v5303 = vpop.f32.mrf.mxu0
        %5304 = vmatprep.mubr.bf16.mxu0 %v4303
        %5305 = vmatmul.mubr.bf16.gmra.mxu0 %v4430
        %v5306 = vpop.f32.mrf.mxu0
        %v5307 = vadd.f32 %v5146, %v5306
        %v5308 = vpop.f32.mrf.mxu0
        %v5309 = vpop.f32.mrf.mxu0
        %v5310 = vadd.f32 %v5149, %v5309
        %v5311 = vpop.f32.mrf.mxu0
        %5312 = vmatprep.mubr.bf16.mxu0 %v4304
        %5313 = vmatmul.mubr.bf16.gmra.mxu0 %v4431
        %v5314 = vpop.f32.mrf.mxu0
        %v5315 = vadd.f32 %v5154, %v5314
        %v5316 = vpop.f32.mrf.mxu0
        %v5317 = vpop.f32.mrf.mxu0
        %v5318 = vadd.f32 %v5157, %v5317
        %v5319 = vpop.f32.mrf.mxu0
        %5320 = vmatprep.mubr.bf16.mxu0 %v4305
        %5321 = vmatmul.mubr.bf16.gmra.mxu0 %v4432
        %v5322 = vpop.f32.mrf.mxu0
        %v5323 = vadd.f32 %v5162, %v5322
        %v5324 = vpop.f32.mrf.mxu0
        %v5325 = vpop.f32.mrf.mxu0
        %v5326 = vadd.f32 %v5165, %v5325
        %v5327 = vpop.f32.mrf.mxu0
        %5328 = vmatprep.mubr.bf16.mxu0 %v4306
        %5329 = vmatmul.mubr.bf16.gmra.mxu0 %v4433
        %v5330 = vpop.f32.mrf.mxu0
        %v5331 = vadd.f32 %v5170, %v5330
        %v5332 = vpop.f32.mrf.mxu0
        %v5333 = vpop.f32.mrf.mxu0
        %v5334 = vadd.f32 %v5173, %v5333
        %v5335 = vpop.f32.mrf.mxu0
        %5336 = vmatprep.mubr.bf16.mxu0 %v4307
        %5337 = vmatmul.mubr.bf16.gmra.mxu0 %v4434
        %v5338 = vpop.f32.mrf.mxu0
        %v5339 = vadd.f32 %v5178, %v5338
        %v5340 = vpop.f32.mrf.mxu0
        %v5341 = vpop.f32.mrf.mxu0
        %v5342 = vadd.f32 %v5181, %v5341
        %v5343 = vpop.f32.mrf.mxu0
        %5344 = vmatprep.mubr.bf16.mxu0 %v4308
        %5345 = vmatmul.mubr.bf16.gmra.mxu0 %v4435
        %v5346 = vpop.f32.mrf.mxu0
        %v5347 = vadd.f32 %v5186, %v5346
        %v5348 = vpop.f32.mrf.mxu0
        %v5349 = vpop.f32.mrf.mxu0
        %v5350 = vadd.f32 %v5189, %v5349
        %v5351 = vpop.f32.mrf.mxu0
        %5352 = vmatprep.mubr.bf16.mxu0 %v4309
        %5353 = vmatmul.mubr.bf16.gmra.mxu0 %v4436
        %v5354 = vpop.f32.mrf.mxu0
        %v5355 = vadd.f32 %v5194, %v5354
        %v5356 = vpop.f32.mrf.mxu0
        %v5357 = vpop.f32.mrf.mxu0
        %v5358 = vadd.f32 %v5197, %v5357
        %v5359 = vpop.f32.mrf.mxu0
        %5360 = vmatprep.mubr.bf16.mxu0 %v4310
        %5361 = vmatmul.mubr.bf16.gmra.mxu0 %v4437
        %v5362 = vpop.f32.mrf.mxu0
        %v5363 = vadd.f32 %v5202, %v5362
        %v5364 = vpop.f32.mrf.mxu0
        %v5365 = vpop.f32.mrf.mxu0
        %v5366 = vadd.f32 %v5205, %v5365
        %v5367 = vpop.f32.mrf.mxu0
        %5368 = vmatprep.mubr.bf16.mxu0 %v4457
        %5369 = vmatmul.mubr.bf16.gmra.mxu0 %v4438
        %v5370 = vpop.f32.mrf.mxu0
        %v5371 = vadd.f32 %v5210, %v5370
        %v5372 = vpop.f32.mrf.mxu0
        %v5373 = vpop.f32.mrf.mxu0
        %v5374 = vadd.f32 %v5213, %v5373
        %v5375 = vpop.f32.mrf.mxu0
        %5376 = vdwg.mxu0
        %5377 = vmatprep.subr.bf16.mxu0 0
        %5378 = vmatpush1.bf16.msra.mxu0 %v4950
        %5379 = vmatprep.subr.bf16.mxu0 0
        %5380 = vmatpush1.bf16.msra.mxu0 %v4949
        %5381 = vmatprep.subr.bf16.mxu0 0
        %5382 = vmatpush1.bf16.msra.mxu0 %v4948
        %5383 = vmatprep.subr.bf16.mxu0 0
        %5384 = vmatpush1.bf16.msra.mxu0 %v4947
        %5385 = vmatprep.subr.bf16.mxu0 0
        %5386 = vmatpush1.bf16.msra.mxu0 %v4946
        %5387 = vmatprep.subr.bf16.mxu0 0
        %5388 = vmatpush1.bf16.msra.mxu0 %v4945
        %5389 = vmatprep.subr.bf16.mxu0 0
        %5390 = vmatpush1.bf16.msra.mxu0 %v4944
        %5391 = vmatprep.subr.bf16.mxu0 0
        %5392 = vmatpush1.bf16.msra.mxu0 %v4943
        %5393 = vmatprep.subr.bf16.mxu0 0
        %5394 = vmatpush2.bf16.msra.mxu0 %v4958
        %5395 = vmatprep.subr.bf16.mxu0 0
        %5396 = vmatpush2.bf16.msra.mxu0 %v4957
        %5397 = vmatprep.subr.bf16.mxu0 0
        %5398 = vmatpush2.bf16.msra.mxu0 %v4956
        %5399 = vmatprep.subr.bf16.mxu0 0
        %5400 = vmatpush2.bf16.msra.mxu0 %v4955
        %5401 = vmatprep.subr.bf16.mxu0 0
        %5402 = vmatpush2.bf16.msra.mxu0 %v4954
        %5403 = vmatprep.subr.bf16.mxu0 0
        %5404 = vmatpush2.bf16.msra.mxu0 %v4953
        %5405 = vmatprep.subr.bf16.mxu0 0
        %5406 = vmatpush2.bf16.msra.mxu0 %v4952
        %5407 = vmatprep.subr.bf16.mxu0 0
        %5408 = vmatpush2.bf16.msra.mxu0 %v4951
        %5409 = vmatprep.mubr.bf16.mxu0 %v4424
        %5410 = vmatmul.mubr.bf16.gmra.mxu0 %v4360
        %v5411 = vpop.f32.mrf.mxu0
        %v5412 = vadd.f32 %v5251, %v5411
        %v5413 = vpop.f32.mrf.mxu0
        %v5414 = vpop.f32.mrf.mxu0
        %v5415 = vadd.f32 %v5254, %v5414
        %v5416 = vpop.f32.mrf.mxu0
        %5417 = vmatprep.mubr.bf16.mxu0 %v4425
        %5418 = vmatmul.mubr.bf16.gmra.mxu0 %v4361
        %v5419 = vpop.f32.mrf.mxu0
        %v5420 = vadd.f32 %v5259, %v5419
        %v5421 = vpop.f32.mrf.mxu0
        %v5422 = vpop.f32.mrf.mxu0
        %v5423 = vadd.f32 %v5262, %v5422
        %v5424 = vpop.f32.mrf.mxu0
        %5425 = vmatprep.mubr.bf16.mxu0 %v4426
        %5426 = vmatmul.mubr.bf16.gmra.mxu0 %v4362
        %v5427 = vpop.f32.mrf.mxu0
        %v5428 = vadd.f32 %v5267, %v5427
        %v5429 = vpop.f32.mrf.mxu0
        %v5430 = vpop.f32.mrf.mxu0
        %v5431 = vadd.f32 %v5270, %v5430
        %v5432 = vpop.f32.mrf.mxu0
        %5433 = vmatprep.mubr.bf16.mxu0 %v4427
        %5434 = vmatmul.mubr.bf16.gmra.mxu0 %v4363
        %v5435 = vpop.f32.mrf.mxu0
        %v5436 = vadd.f32 %v5275, %v5435
        %v5437 = vpop.f32.mrf.mxu0
        %v5438 = vpop.f32.mrf.mxu0
        %v5439 = vadd.f32 %v5278, %v5438
        %v5440 = vpop.f32.mrf.mxu0
        %5441 = vmatprep.mubr.bf16.mxu0 %v4428
        %5442 = vmatmul.mubr.bf16.gmra.mxu0 %v4364
        %v5443 = vpop.f32.mrf.mxu0
        %v5444 = vadd.f32 %v5283, %v5443
        %v5445 = vpop.f32.mrf.mxu0
        %v5446 = vpop.f32.mrf.mxu0
        %v5447 = vadd.f32 %v5286, %v5446
        %v5448 = vpop.f32.mrf.mxu0
        %5449 = vmatprep.mubr.bf16.mxu0 %v4429
        %5450 = vmatmul.mubr.bf16.gmra.mxu0 %v4365
        %v5451 = vpop.f32.mrf.mxu0
        %v5452 = vadd.f32 %v5291, %v5451
        %v5453 = vpop.f32.mrf.mxu0
        %v5454 = vpop.f32.mrf.mxu0
        %v5455 = vadd.f32 %v5294, %v5454
        %v5456 = vpop.f32.mrf.mxu0
        %5457 = vmatprep.mubr.bf16.mxu0 %v4430
        %5458 = vmatmul.mubr.bf16.gmra.mxu0 %v4366
        %v5459 = vpop.f32.mrf.mxu0
        %v5460 = vadd.f32 %v5299, %v5459
        %v5461 = vpop.f32.mrf.mxu0
        %v5462 = vpop.f32.mrf.mxu0
        %v5463 = vadd.f32 %v5302, %v5462
        %v5464 = vpop.f32.mrf.mxu0
        %5465 = vmatprep.mubr.bf16.mxu0 %v4431
        %5466 = vmatmul.mubr.bf16.gmra.mxu0 %v4367
        %v5467 = vpop.f32.mrf.mxu0
        %v5468 = vadd.f32 %v5307, %v5467
        %v5469 = vpop.f32.mrf.mxu0
        %v5470 = vpop.f32.mrf.mxu0
        %v5471 = vadd.f32 %v5310, %v5470
        %v5472 = vpop.f32.mrf.mxu0
        %5473 = vmatprep.mubr.bf16.mxu0 %v4432
        %5474 = vmatmul.mubr.bf16.gmra.mxu0 %v4368
        %v5475 = vpop.f32.mrf.mxu0
        %v5476 = vadd.f32 %v5315, %v5475
        %v5477 = vpop.f32.mrf.mxu0
        %v5478 = vpop.f32.mrf.mxu0
        %v5479 = vadd.f32 %v5318, %v5478
        %v5480 = vpop.f32.mrf.mxu0
        %5481 = vmatprep.mubr.bf16.mxu0 %v4433
        %5482 = vmatmul.mubr.bf16.gmra.mxu0 %v4369
        %v5483 = vpop.f32.mrf.mxu0
        %v5484 = vadd.f32 %v5323, %v5483
        %v5485 = vpop.f32.mrf.mxu0
        %v5486 = vpop.f32.mrf.mxu0
        %v5487 = vadd.f32 %v5326, %v5486
        %v5488 = vpop.f32.mrf.mxu0
        %5489 = vmatprep.mubr.bf16.mxu0 %v4434
        %5490 = vmatmul.mubr.bf16.gmra.mxu0 %v4370
        %v5491 = vpop.f32.mrf.mxu0
        %v5492 = vadd.f32 %v5331, %v5491
        %v5493 = vpop.f32.mrf.mxu0
        %v5494 = vpop.f32.mrf.mxu0
        %v5495 = vadd.f32 %v5334, %v5494
        %v5496 = vpop.f32.mrf.mxu0
        %5497 = vmatprep.mubr.bf16.mxu0 %v4435
        %5498 = vmatmul.mubr.bf16.gmra.mxu0 %v4371
        %v5499 = vpop.f32.mrf.mxu0
        %v5500 = vadd.f32 %v5339, %v5499
        %v5501 = vpop.f32.mrf.mxu0
        %v5502 = vpop.f32.mrf.mxu0
        %v5503 = vadd.f32 %v5342, %v5502
        %v5504 = vpop.f32.mrf.mxu0
        %5505 = vmatprep.mubr.bf16.mxu0 %v4436
        %5506 = vmatmul.mubr.bf16.gmra.mxu0 %v4372
        %v5507 = vpop.f32.mrf.mxu0
        %v5508 = vadd.f32 %v5347, %v5507
        %v5509 = vpop.f32.mrf.mxu0
        %v5510 = vpop.f32.mrf.mxu0
        %v5511 = vadd.f32 %v5350, %v5510
        %v5512 = vpop.f32.mrf.mxu0
        %5513 = vmatprep.mubr.bf16.mxu0 %v4437
        %5514 = vmatmul.mubr.bf16.gmra.mxu0 %v4373
        %v5515 = vpop.f32.mrf.mxu0
        %v5516 = vadd.f32 %v5355, %v5515
        %v5517 = vpop.f32.mrf.mxu0
        %v5518 = vpop.f32.mrf.mxu0
        %v5519 = vadd.f32 %v5358, %v5518
        %v5520 = vpop.f32.mrf.mxu0
        %5521 = vmatprep.mubr.bf16.mxu0 %v4438
        %5522 = vmatmul.mubr.bf16.gmra.mxu0 %v4374
        %v5523 = vpop.f32.mrf.mxu0
        %v5524 = vadd.f32 %v5363, %v5523
        %v5525 = vpop.f32.mrf.mxu0
        %v5526 = vpop.f32.mrf.mxu0
        %v5527 = vadd.f32 %v5366, %v5526
        %v5528 = vpop.f32.mrf.mxu0
        %5529 = vmatprep.mubr.bf16.mxu0 %v4465
        %5530 = vmatmul.mubr.bf16.gmra.mxu0 %v4461
        %v5531 = vpop.f32.mrf.mxu0
        %v5532 = vadd.f32 %v5371, %v5531
        %v5533 = vpop.f32.mrf.mxu0
        %v5534 = vpop.f32.mrf.mxu0
        %v5535 = vadd.f32 %v5374, %v5534
        %v5536 = vpop.f32.mrf.mxu0
        %5537 = vdwg.mxu0
        %5538 = vmatprep.subr.bf16.mxu0 0
        %5539 = vmatpush1.bf16.msra.mxu0 %v4966
        %5540 = vmatprep.subr.bf16.mxu0 0
        %5541 = vmatpush1.bf16.msra.mxu0 %v4965
        %5542 = vmatprep.subr.bf16.mxu0 0
        %5543 = vmatpush1.bf16.msra.mxu0 %v4964
        %5544 = vmatprep.subr.bf16.mxu0 0
        %5545 = vmatpush1.bf16.msra.mxu0 %v4963
        %5546 = vmatprep.subr.bf16.mxu0 0
        %5547 = vmatpush1.bf16.msra.mxu0 %v4962
        %5548 = vmatprep.subr.bf16.mxu0 0
        %5549 = vmatpush1.bf16.msra.mxu0 %v4961
        %5550 = vmatprep.subr.bf16.mxu0 0
        %5551 = vmatpush1.bf16.msra.mxu0 %v4960
        %5552 = vmatprep.subr.bf16.mxu0 0
        %5553 = vmatpush1.bf16.msra.mxu0 %v4959
        %5554 = vmatprep.subr.bf16.mxu0 0
        %5555 = vmatpush2.bf16.msra.mxu0 %v4974
        %5556 = vmatprep.subr.bf16.mxu0 0
        %5557 = vmatpush2.bf16.msra.mxu0 %v4973
        %5558 = vmatprep.subr.bf16.mxu0 0
        %5559 = vmatpush2.bf16.msra.mxu0 %v4972
        %5560 = vmatprep.subr.bf16.mxu0 0
        %5561 = vmatpush2.bf16.msra.mxu0 %v4971
        %5562 = vmatprep.subr.bf16.mxu0 0
        %5563 = vmatpush2.bf16.msra.mxu0 %v4970
        %5564 = vmatprep.subr.bf16.mxu0 0
        %5565 = vmatpush2.bf16.msra.mxu0 %v4969
        %5566 = vmatprep.subr.bf16.mxu0 0
        %5567 = vmatpush2.bf16.msra.mxu0 %v4968
        %5568 = vmatprep.subr.bf16.mxu0 0
        %5569 = vmatpush2.bf16.msra.mxu0 %v4967
        %5570 = vmatprep.mubr.bf16.mxu0 %v4361
        %5571 = vmatmul.mubr.bf16.gmra.mxu0 %v4297
        %v5572 = vpop.f32.mrf.mxu0
        %v5573 = vadd.f32 %v5412, %v5572
        %v5574 = vpop.f32.mrf.mxu0
        %v5575 = vpop.f32.mrf.mxu0
        %v5576 = vadd.f32 %v5415, %v5575
        %v5577 = vpop.f32.mrf.mxu0
        %5578 = vmatprep.mubr.bf16.mxu0 %v4362
        %5579 = vmatmul.mubr.bf16.gmra.mxu0 %v4298
        %v5580 = vpop.f32.mrf.mxu0
        %v5581 = vadd.f32 %v5420, %v5580
        %v5582 = vpop.f32.mrf.mxu0
        %v5583 = vpop.f32.mrf.mxu0
        %v5584 = vadd.f32 %v5423, %v5583
        %v5585 = vpop.f32.mrf.mxu0
        %5586 = vmatprep.mubr.bf16.mxu0 %v4363
        %5587 = vmatmul.mubr.bf16.gmra.mxu0 %v4299
        %v5588 = vpop.f32.mrf.mxu0
        %v5589 = vadd.f32 %v5428, %v5588
        %v5590 = vpop.f32.mrf.mxu0
        %v5591 = vpop.f32.mrf.mxu0
        %v5592 = vadd.f32 %v5431, %v5591
        %v5593 = vpop.f32.mrf.mxu0
        %5594 = vmatprep.mubr.bf16.mxu0 %v4364
        %5595 = vmatmul.mubr.bf16.gmra.mxu0 %v4300
        %v5596 = vpop.f32.mrf.mxu0
        %v5597 = vadd.f32 %v5436, %v5596
        %v5598 = vpop.f32.mrf.mxu0
        %v5599 = vpop.f32.mrf.mxu0
        %v5600 = vadd.f32 %v5439, %v5599
        %v5601 = vpop.f32.mrf.mxu0
        %5602 = vmatprep.mubr.bf16.mxu0 %v4365
        %5603 = vmatmul.mubr.bf16.gmra.mxu0 %v4301
        %v5604 = vpop.f32.mrf.mxu0
        %v5605 = vadd.f32 %v5444, %v5604
        %v5606 = vpop.f32.mrf.mxu0
        %v5607 = vpop.f32.mrf.mxu0
        %v5608 = vadd.f32 %v5447, %v5607
        %v5609 = vpop.f32.mrf.mxu0
        %5610 = vmatprep.mubr.bf16.mxu0 %v4366
        %5611 = vmatmul.mubr.bf16.gmra.mxu0 %v4302
        %v5612 = vpop.f32.mrf.mxu0
        %v5613 = vadd.f32 %v5452, %v5612
        %v5614 = vpop.f32.mrf.mxu0
        %v5615 = vpop.f32.mrf.mxu0
        %v5616 = vadd.f32 %v5455, %v5615
        %v5617 = vpop.f32.mrf.mxu0
        %5618 = vmatprep.mubr.bf16.mxu0 %v4367
        %5619 = vmatmul.mubr.bf16.gmra.mxu0 %v4303
        %v5620 = vpop.f32.mrf.mxu0
        %v5621 = vadd.f32 %v5460, %v5620
        %v5622 = vpop.f32.mrf.mxu0
        %v5623 = vpop.f32.mrf.mxu0
        %v5624 = vadd.f32 %v5463, %v5623
        %v5625 = vpop.f32.mrf.mxu0
        %5626 = vmatprep.mubr.bf16.mxu0 %v4368
        %5627 = vmatmul.mubr.bf16.gmra.mxu0 %v4304
        %v5628 = vpop.f32.mrf.mxu0
        %v5629 = vadd.f32 %v5468, %v5628
        %v5630 = vpop.f32.mrf.mxu0
        %v5631 = vpop.f32.mrf.mxu0
        %v5632 = vadd.f32 %v5471, %v5631
        %v5633 = vpop.f32.mrf.mxu0
        %5634 = vmatprep.mubr.bf16.mxu0 %v4369
        %5635 = vmatmul.mubr.bf16.gmra.mxu0 %v4305
        %v5636 = vpop.f32.mrf.mxu0
        %v5637 = vadd.f32 %v5476, %v5636
        %v5638 = vpop.f32.mrf.mxu0
        %v5639 = vpop.f32.mrf.mxu0
        %v5640 = vadd.f32 %v5479, %v5639
        %v5641 = vpop.f32.mrf.mxu0
        %5642 = vmatprep.mubr.bf16.mxu0 %v4370
        %5643 = vmatmul.mubr.bf16.gmra.mxu0 %v4306
        %v5644 = vpop.f32.mrf.mxu0
        %v5645 = vadd.f32 %v5484, %v5644
        %v5646 = vpop.f32.mrf.mxu0
        %v5647 = vpop.f32.mrf.mxu0
        %v5648 = vadd.f32 %v5487, %v5647
        %v5649 = vpop.f32.mrf.mxu0
        %5650 = vmatprep.mubr.bf16.mxu0 %v4371
        %5651 = vmatmul.mubr.bf16.gmra.mxu0 %v4307
        %v5652 = vpop.f32.mrf.mxu0
        %v5653 = vadd.f32 %v5492, %v5652
        %v5654 = vpop.f32.mrf.mxu0
        %v5655 = vpop.f32.mrf.mxu0
        %v5656 = vadd.f32 %v5495, %v5655
        %v5657 = vpop.f32.mrf.mxu0
        %5658 = vmatprep.mubr.bf16.mxu0 %v4372
        %5659 = vmatmul.mubr.bf16.gmra.mxu0 %v4308
        %v5660 = vpop.f32.mrf.mxu0
        %v5661 = vadd.f32 %v5500, %v5660
        %v5662 = vpop.f32.mrf.mxu0
        %v5663 = vpop.f32.mrf.mxu0
        %v5664 = vadd.f32 %v5503, %v5663
        %v5665 = vpop.f32.mrf.mxu0
        %5666 = vmatprep.mubr.bf16.mxu0 %v4373
        %5667 = vmatmul.mubr.bf16.gmra.mxu0 %v4309
        %v5668 = vpop.f32.mrf.mxu0
        %v5669 = vadd.f32 %v5508, %v5668
        %v5670 = vpop.f32.mrf.mxu0
        %v5671 = vpop.f32.mrf.mxu0
        %v5672 = vadd.f32 %v5511, %v5671
        %v5673 = vpop.f32.mrf.mxu0
        %5674 = vmatprep.mubr.bf16.mxu0 %v4374
        %5675 = vmatmul.mubr.bf16.gmra.mxu0 %v4310
        %v5676 = vpop.f32.mrf.mxu0
        %v5677 = vadd.f32 %v5516, %v5676
        %v5678 = vpop.f32.mrf.mxu0
        %v5679 = vpop.f32.mrf.mxu0
        %v5680 = vadd.f32 %v5519, %v5679
        %v5681 = vpop.f32.mrf.mxu0
        %5682 = vmatprep.mubr.bf16.mxu0 %v4461
        %5683 = vmatmul.mubr.bf16.gmra.mxu0 %v4457
        %v5684 = vpop.f32.mrf.mxu0
        %v5685 = vadd.f32 %v5524, %v5684
        %v5686 = vpop.f32.mrf.mxu0
        %v5687 = vpop.f32.mrf.mxu0
        %v5688 = vadd.f32 %v5527, %v5687
        %v5689 = vpop.f32.mrf.mxu0
        %5690 = vmatprep.mubr.bf16.mxu0 %v4473
        %5691 = vmatmul.mubr.bf16.gmra.mxu0 %v4469
        %v5692 = vpop.f32.mrf.mxu0
        %v5693 = vadd.f32 %v5532, %v5692
        %v5694 = vpop.f32.mrf.mxu0
        %v5695 = vpop.f32.mrf.mxu0
        %v5696 = vadd.f32 %v5535, %v5695
        %v5697 = vpop.f32.mrf.mxu0
        %5698 = vdwg.mxu0
        %5699 = vmatprep.subr.bf16.mxu0 0
        %5700 = vmatpush1.bf16.msra.mxu0 %v4982
        %5701 = vmatprep.subr.bf16.mxu0 0
        %5702 = vmatpush1.bf16.msra.mxu0 %v4981
        %5703 = vmatprep.subr.bf16.mxu0 0
        %5704 = vmatpush1.bf16.msra.mxu0 %v4980
        %5705 = vmatprep.subr.bf16.mxu0 0
        %5706 = vmatpush1.bf16.msra.mxu0 %v4979
        %5707 = vmatprep.subr.bf16.mxu0 0
        %5708 = vmatpush1.bf16.msra.mxu0 %v4978
        %5709 = vmatprep.subr.bf16.mxu0 0
        %5710 = vmatpush1.bf16.msra.mxu0 %v4977
        %5711 = vmatprep.subr.bf16.mxu0 0
        %5712 = vmatpush1.bf16.msra.mxu0 %v4976
        %5713 = vmatprep.subr.bf16.mxu0 0
        %5714 = vmatpush1.bf16.msra.mxu0 %v4975
        %5715 = vmatprep.subr.bf16.mxu0 0
        %5716 = vmatpush2.bf16.msra.mxu0 0
        %5717 = vmatprep.subr.bf16.mxu0 0
        %5718 = vmatpush2.bf16.msra.mxu0 0
        %5719 = vmatprep.subr.bf16.mxu0 0
        %5720 = vmatpush2.bf16.msra.mxu0 0
        %5721 = vmatprep.subr.bf16.mxu0 0
        %5722 = vmatpush2.bf16.msra.mxu0 0
        %5723 = vmatprep.subr.bf16.mxu0 0
        %5724 = vmatpush2.bf16.msra.mxu0 0
        %5725 = vmatprep.subr.bf16.mxu0 0
        %5726 = vmatpush2.bf16.msra.mxu0 0
        %5727 = vmatprep.subr.bf16.mxu0 0
        %5728 = vmatpush2.bf16.msra.mxu0 0
        %5729 = vmatprep.subr.bf16.mxu0 0
        %5730 = vmatpush2.bf16.msra.mxu0 0
        %5731 = vmatprep.mubr.bf16.mxu0 0
        %5732 = vmatmul.mubr.bf16.gmra.mxu0 %v4425
        %v5733 = vpop.f32.mrf.mxu0
        %v5734 = vadd.f32 %v5573, %v5733
        %v5735 = vpop.f32.mrf.mxu0
        %v5736 = vpop.f32.mrf.mxu0
        %v5737 = vadd.f32 %v5576, %v5736
        %v5738 = vpop.f32.mrf.mxu0
        %5739 = vmatprep.mubr.bf16.mxu0 0
        %5740 = vmatmul.mubr.bf16.gmra.mxu0 %v4426
        %v5741 = vpop.f32.mrf.mxu0
        %v5742 = vadd.f32 %v5581, %v5741
        %v5743 = vpop.f32.mrf.mxu0
        %v5744 = vpop.f32.mrf.mxu0
        %v5745 = vadd.f32 %v5584, %v5744
        %v5746 = vpop.f32.mrf.mxu0
        %5747 = vmatprep.mubr.bf16.mxu0 0
        %5748 = vmatmul.mubr.bf16.gmra.mxu0 %v4427
        %v5749 = vpop.f32.mrf.mxu0
        %v5750 = vadd.f32 %v5589, %v5749
        %v5751 = vpop.f32.mrf.mxu0
        %v5752 = vpop.f32.mrf.mxu0
        %v5753 = vadd.f32 %v5592, %v5752
        %v5754 = vpop.f32.mrf.mxu0
        %5755 = vmatprep.mubr.bf16.mxu0 0
        %5756 = vmatmul.mubr.bf16.gmra.mxu0 %v4428
        %v5757 = vpop.f32.mrf.mxu0
        %v5758 = vadd.f32 %v5597, %v5757
        %v5759 = vpop.f32.mrf.mxu0
        %v5760 = vpop.f32.mrf.mxu0
        %v5761 = vadd.f32 %v5600, %v5760
        %v5762 = vpop.f32.mrf.mxu0
        %5763 = vmatprep.mubr.bf16.mxu0 0
        %5764 = vmatmul.mubr.bf16.gmra.mxu0 %v4429
        %v5765 = vpop.f32.mrf.mxu0
        %v5766 = vadd.f32 %v5605, %v5765
        %v5767 = vpop.f32.mrf.mxu0
        %v5768 = vpop.f32.mrf.mxu0
        %v5769 = vadd.f32 %v5608, %v5768
        %v5770 = vpop.f32.mrf.mxu0
        %5771 = vmatprep.mubr.bf16.mxu0 0
        %5772 = vmatmul.mubr.bf16.gmra.mxu0 %v4430
        %v5773 = vpop.f32.mrf.mxu0
        %v5774 = vadd.f32 %v5613, %v5773
        %v5775 = vpop.f32.mrf.mxu0
        %v5776 = vpop.f32.mrf.mxu0
        %v5777 = vadd.f32 %v5616, %v5776
        %v5778 = vpop.f32.mrf.mxu0
        %5779 = vmatprep.mubr.bf16.mxu0 0
        %5780 = vmatmul.mubr.bf16.gmra.mxu0 %v4431
        %v5781 = vpop.f32.mrf.mxu0
        %v5782 = vadd.f32 %v5621, %v5781
        %v5783 = vpop.f32.mrf.mxu0
        %v5784 = vpop.f32.mrf.mxu0
        %v5785 = vadd.f32 %v5624, %v5784
        %v5786 = vpop.f32.mrf.mxu0
        %5787 = vmatprep.mubr.bf16.mxu0 0
        %5788 = vmatmul.mubr.bf16.gmra.mxu0 %v4432
        %v5789 = vpop.f32.mrf.mxu0
        %v5790 = vadd.f32 %v5629, %v5789
        %v5791 = vpop.f32.mrf.mxu0
        %v5792 = vpop.f32.mrf.mxu0
        %v5793 = vadd.f32 %v5632, %v5792
        %v5794 = vpop.f32.mrf.mxu0
        %5795 = vmatprep.mubr.bf16.mxu0 0
        %5796 = vmatmul.mubr.bf16.gmra.mxu0 %v4433
        %v5797 = vpop.f32.mrf.mxu0
        %v5798 = vadd.f32 %v5637, %v5797
        %v5799 = vpop.f32.mrf.mxu0
        %v5800 = vpop.f32.mrf.mxu0
        %v5801 = vadd.f32 %v5640, %v5800
        %v5802 = vpop.f32.mrf.mxu0
        %5803 = vmatprep.mubr.bf16.mxu0 0
        %5804 = vmatmul.mubr.bf16.gmra.mxu0 %v4434
        %v5805 = vpop.f32.mrf.mxu0
        %v5806 = vadd.f32 %v5645, %v5805
        %v5807 = vpop.f32.mrf.mxu0
        %v5808 = vpop.f32.mrf.mxu0
        %v5809 = vadd.f32 %v5648, %v5808
        %v5810 = vpop.f32.mrf.mxu0
        %5811 = vmatprep.mubr.bf16.mxu0 0
        %5812 = vmatmul.mubr.bf16.gmra.mxu0 %v4435
        %v5813 = vpop.f32.mrf.mxu0
        %v5814 = vadd.f32 %v5653, %v5813
        %v5815 = vpop.f32.mrf.mxu0
        %v5816 = vpop.f32.mrf.mxu0
        %v5817 = vadd.f32 %v5656, %v5816
        %v5818 = vpop.f32.mrf.mxu0
        %5819 = vmatprep.mubr.bf16.mxu0 0
        %5820 = vmatmul.mubr.bf16.gmra.mxu0 %v4436
        %v5821 = vpop.f32.mrf.mxu0
        %v5822 = vadd.f32 %v5661, %v5821
        %v5823 = vpop.f32.mrf.mxu0
        %v5824 = vpop.f32.mrf.mxu0
        %v5825 = vadd.f32 %v5664, %v5824
        %v5826 = vpop.f32.mrf.mxu0
        %5827 = vmatprep.mubr.bf16.mxu0 0
        %5828 = vmatmul.mubr.bf16.gmra.mxu0 %v4437
        %v5829 = vpop.f32.mrf.mxu0
        %v5830 = vadd.f32 %v5669, %v5829
        %v5831 = vpop.f32.mrf.mxu0
        %v5832 = vpop.f32.mrf.mxu0
        %v5833 = vadd.f32 %v5672, %v5832
        %v5834 = vpop.f32.mrf.mxu0
        %5835 = vmatprep.mubr.bf16.mxu0 0
        %5836 = vmatmul.mubr.bf16.gmra.mxu0 %v4438
        %v5837 = vpop.f32.mrf.mxu0
        %v5838 = vadd.f32 %v5677, %v5837
        %v5839 = vpop.f32.mrf.mxu0
        %v5840 = vpop.f32.mrf.mxu0
        %v5841 = vadd.f32 %v5680, %v5840
        %v5842 = vpop.f32.mrf.mxu0
        %5843 = vmatprep.mubr.bf16.mxu0 0
        %5844 = vmatmul.mubr.bf16.gmra.mxu0 %v4465
        %v5845 = vpop.f32.mrf.mxu0
        %v5846 = vadd.f32 %v5685, %v5845
        %v5847 = vpop.f32.mrf.mxu0
        %v5848 = vpop.f32.mrf.mxu0
        %v5849 = vadd.f32 %v5688, %v5848
        %v5850 = vpop.f32.mrf.mxu0
        %5851 = vmatprep.mubr.bf16.mxu0 0
        %5852 = vmatmul.mubr.bf16.gmra.mxu0 %v4477
        %v5853 = vpop.f32.mrf.mxu0
        %v5854 = vadd.f32 %v5693, %v5853
        %v5855 = vpop.f32.mrf.mxu0
        %v5856 = vpop.f32.mrf.mxu0
        %v5857 = vadd.f32 %v5696, %v5856
        %v5858 = vpop.f32.mrf.mxu0
        %5859 = vdwg.mxu0
        %s5860 = smul.u32 0, 16
        %s5861 = scalar_lea.vmem %s287, %s5860 [#allocation4]
        %v5862 = vld [vmem:[%s5861] sm:$0xff]
        %v5863 = vld [vmem:[%s5861 + $0x8] sm:$0xff]
        %v5864 = vld [vmem:[%s5861 + $0x10] sm:$0xff]
        %v5865 = vld [vmem:[%s5861 + $0x18] sm:$0xff]
        %v5866 = vld [vmem:[%s5861 + $0x20] sm:$0xff]
        %v5867 = vld [vmem:[%s5861 + $0x28] sm:$0xff]
        %v5868 = vld [vmem:[%s5861 + $0x30] sm:$0xff]
        %v5869 = vld [vmem:[%s5861 + $0x38] sm:$0xff]
        %v5870 = vld [vmem:[%s5861 + $0x40] sm:$0xff]
        %v5871 = vld [vmem:[%s5861 + $0x48] sm:$0xff]
        %v5872 = vld [vmem:[%s5861 + $0x50] sm:$0xff]
        %v5873 = vld [vmem:[%s5861 + $0x58] sm:$0xff]
        %v5874 = vld [vmem:[%s5861 + $0x60] sm:$0xff]
        %v5875 = vld [vmem:[%s5861 + $0x68] sm:$0xff]
        %v5876 = vld [vmem:[%s5861 + $0x70] sm:$0xff]
        %v5877 = vld [vmem:[%s5861 + $0x78] sm:$0xff]
        %v5878 = vld [vmem:[%s5861 + $0x80] sm:$0xff]
        %v5879 = vld [vmem:[%s5861 + $0x88] sm:$0xff]
        %v5880 = vld [vmem:[%s5861 + $0x90] sm:$0xff]
        %v5881 = vld [vmem:[%s5861 + $0x98] sm:$0xff]
        %v5882 = vld [vmem:[%s5861 + $0xa0] sm:$0xff]
        %v5883 = vld [vmem:[%s5861 + $0xa8] sm:$0xff]
        %v5884 = vld [vmem:[%s5861 + $0xb0] sm:$0xff]
        %v5885 = vld [vmem:[%s5861 + $0xb8] sm:$0xff]
        %v5886 = vld [vmem:[%s5861 + $0xc0] sm:$0xff]
        %v5887 = vld [vmem:[%s5861 + $0xc8] sm:$0xff]
        %v5888 = vld [vmem:[%s5861 + $0xd0] sm:$0xff]
        %v5889 = vld [vmem:[%s5861 + $0xd8] sm:$0xff]
        %v5890 = vld [vmem:[%s5861 + $0xe0] sm:$0xff]
        %v5891 = vld [vmem:[%s5861 + $0xe8] sm:$0xff]
        %v5892 = vld [vmem:[%s5861 + $0xf0] sm:$0xff]
        %v5893 = vld [vmem:[%s5861 + $0xf8] sm:$0xff]
        %v5894 = vld [vmem:[%s5] sm:$0x1]
        %v5896 = vlaneseq
        %v5897 = vshrl.u32 %v5896, 7
        %v5898 = vsub.s32 0, %v5897
        %v5899 = vrot.slane %v5894, %v5898
        %v5901 = vmul.f32 %v5734, %v5899
        %v5902 = vmul.f32 %v5737, %v5899
        %v5903 = vmul.f32 %v5742, %v5899
        %v5904 = vmul.f32 %v5745, %v5899
        %v5905 = vmul.f32 %v5750, %v5899
        %v5906 = vmul.f32 %v5753, %v5899
        %v5907 = vmul.f32 %v5758, %v5899
        %v5908 = vmul.f32 %v5761, %v5899
        %v5909 = vmul.f32 %v5766, %v5899
        %v5910 = vmul.f32 %v5769, %v5899
        %v5911 = vmul.f32 %v5774, %v5899
        %v5912 = vmul.f32 %v5777, %v5899
        %v5913 = vmul.f32 %v5782, %v5899
        %v5914 = vmul.f32 %v5785, %v5899
        %v5915 = vmul.f32 %v5790, %v5899
        %v5916 = vmul.f32 %v5793, %v5899
        %v5917 = vmul.f32 %v5798, %v5899
        %v5918 = vmul.f32 %v5801, %v5899
        %v5919 = vmul.f32 %v5806, %v5899
        %v5920 = vmul.f32 %v5809, %v5899
        %v5921 = vmul.f32 %v5814, %v5899
        %v5922 = vmul.f32 %v5817, %v5899
        %v5923 = vmul.f32 %v5822, %v5899
        %v5924 = vmul.f32 %v5825, %v5899
        %v5925 = vmul.f32 %v5830, %v5899
        %v5926 = vmul.f32 %v5833, %v5899
        %v5927 = vmul.f32 %v5838, %v5899
        %v5928 = vmul.f32 %v5841, %v5899
        %v5929 = vmul.f32 %v5846, %v5899
        %v5930 = vmul.f32 %v5849, %v5899
        %v5931 = vmul.f32 %v5854, %v5899
        %v5932 = vmul.f32 %v5857, %v5899
        %v5933 = vld [vmem:[%s6] sm:$0x1]
        %v5935 = vlaneseq
        %v5936 = vshrl.u32 %v5935, 7
        %v5937 = vsub.s32 0, %v5936
        %v5938 = vrot.slane %v5933, %v5937
        %v5940 = vadd.f32 %v5901, %v5938
        %v5941 = vadd.f32 %v5902, %v5938
        %v5942 = vadd.f32 %v5903, %v5938
        %v5943 = vadd.f32 %v5904, %v5938
        %v5944 = vadd.f32 %v5905, %v5938
        %v5945 = vadd.f32 %v5906, %v5938
        %v5946 = vadd.f32 %v5907, %v5938
        %v5947 = vadd.f32 %v5908, %v5938
        %v5948 = vadd.f32 %v5909, %v5938
        %v5949 = vadd.f32 %v5910, %v5938
        %v5950 = vadd.f32 %v5911, %v5938
        %v5951 = vadd.f32 %v5912, %v5938
        %v5952 = vadd.f32 %v5913, %v5938
        %v5953 = vadd.f32 %v5914, %v5938
        %v5954 = vadd.f32 %v5915, %v5938
        %v5955 = vadd.f32 %v5916, %v5938
        %v5956 = vadd.f32 %v5917, %v5938
        %v5957 = vadd.f32 %v5918, %v5938
        %v5958 = vadd.f32 %v5919, %v5938
        %v5959 = vadd.f32 %v5920, %v5938
        %v5960 = vadd.f32 %v5921, %v5938
        %v5961 = vadd.f32 %v5922, %v5938
        %v5962 = vadd.f32 %v5923, %v5938
        %v5963 = vadd.f32 %v5924, %v5938
        %v5964 = vadd.f32 %v5925, %v5938
        %v5965 = vadd.f32 %v5926, %v5938
        %v5966 = vadd.f32 %v5927, %v5938
        %v5967 = vadd.f32 %v5928, %v5938
        %v5968 = vadd.f32 %v5929, %v5938
        %v5969 = vadd.f32 %v5930, %v5938
        %v5970 = vadd.f32 %v5931, %v5938
        %v5971 = vadd.f32 %v5932, %v5938
        %v5972 = vadd.f32 %v5940, %v5862
        %v5973 = vadd.f32 %v5941, %v5863
        %v5974 = vadd.f32 %v5942, %v5864
        %v5975 = vadd.f32 %v5943, %v5865
        %v5976 = vadd.f32 %v5944, %v5866
        %v5977 = vadd.f32 %v5945, %v5867
        %v5978 = vadd.f32 %v5946, %v5868
        %v5979 = vadd.f32 %v5947, %v5869
        %v5980 = vadd.f32 %v5948, %v5870
        %v5981 = vadd.f32 %v5949, %v5871
        %v5982 = vadd.f32 %v5950, %v5872
        %v5983 = vadd.f32 %v5951, %v5873
        %v5984 = vadd.f32 %v5952, %v5874
        %v5985 = vadd.f32 %v5953, %v5875
        %v5986 = vadd.f32 %v5954, %v5876
        %v5987 = vadd.f32 %v5955, %v5877
        %v5988 = vadd.f32 %v5956, %v5878
        %v5989 = vadd.f32 %v5957, %v5879
        %v5990 = vadd.f32 %v5958, %v5880
        %v5991 = vadd.f32 %v5959, %v5881
        %v5992 = vadd.f32 %v5960, %v5882
        %v5993 = vadd.f32 %v5961, %v5883
        %v5994 = vadd.f32 %v5962, %v5884
        %v5995 = vadd.f32 %v5963, %v5885
        %v5996 = vadd.f32 %v5964, %v5886
        %v5997 = vadd.f32 %v5965, %v5887
        %v5998 = vadd.f32 %v5966, %v5888
        %v5999 = vadd.f32 %v5967, %v5889
        %v6000 = vadd.f32 %v5968, %v5890
        %v6001 = vadd.f32 %v5969, %v5891
        %v6002 = vadd.f32 %v5970, %v5892
        %v6003 = vadd.f32 %v5971, %v5893
        %v6004 = vmax.f32 %v5972, 0.0
        %v6005 = vmax.f32 %v5973, 0.0
        %v6006 = vmax.f32 %v5974, 0.0
        %v6007 = vmax.f32 %v5975, 0.0
        %v6008 = vmax.f32 %v5976, 0.0
        %v6009 = vmax.f32 %v5977, 0.0
        %v6010 = vmax.f32 %v5978, 0.0
        %v6011 = vmax.f32 %v5979, 0.0
        %v6012 = vmax.f32 %v5980, 0.0
        %v6013 = vmax.f32 %v5981, 0.0
        %v6014 = vmax.f32 %v5982, 0.0
        %v6015 = vmax.f32 %v5983, 0.0
        %v6016 = vmax.f32 %v5984, 0.0
        %v6017 = vmax.f32 %v5985, 0.0
        %v6018 = vmax.f32 %v5986, 0.0
        %v6019 = vmax.f32 %v5987, 0.0
        %v6020 = vmax.f32 %v5988, 0.0
        %v6021 = vmax.f32 %v5989, 0.0
        %v6022 = vmax.f32 %v5990, 0.0
        %v6023 = vmax.f32 %v5991, 0.0
        %v6024 = vmax.f32 %v5992, 0.0
        %v6025 = vmax.f32 %v5993, 0.0
        %v6026 = vmax.f32 %v5994, 0.0
        %v6027 = vmax.f32 %v5995, 0.0
        %v6028 = vmax.f32 %v5996, 0.0
        %v6029 = vmax.f32 %v5997, 0.0
        %v6030 = vmax.f32 %v5998, 0.0
        %v6031 = vmax.f32 %v5999, 0.0
        %v6032 = vmax.f32 %v6000, 0.0
        %v6033 = vmax.f32 %v6001, 0.0
        %v6034 = vmax.f32 %v6002, 0.0
        %v6035 = vmax.f32 %v6003, 0.0
        %s6036 = scalar_lea.vmem %s325, %s5860 [#allocation10]
        %6037 = vst [vmem:[%s6036] sm:$0xff] %v6004
        %6038 = vst [vmem:[%s6036 + $0x8] sm:$0xff] %v6005
        %6039 = vst [vmem:[%s6036 + $0x10] sm:$0xff] %v6006
        %6040 = vst [vmem:[%s6036 + $0x18] sm:$0xff] %v6007
        %6041 = vst [vmem:[%s6036 + $0x20] sm:$0xff] %v6008
        %6042 = vst [vmem:[%s6036 + $0x28] sm:$0xff] %v6009
        %6043 = vst [vmem:[%s6036 + $0x30] sm:$0xff] %v6010
        %6044 = vst [vmem:[%s6036 + $0x38] sm:$0xff] %v6011
        %6045 = vst [vmem:[%s6036 + $0x40] sm:$0xff] %v6012
        %6046 = vst [vmem:[%s6036 + $0x48] sm:$0xff] %v6013
        %6047 = vst [vmem:[%s6036 + $0x50] sm:$0xff] %v6014
        %6048 = vst [vmem:[%s6036 + $0x58] sm:$0xff] %v6015
        %6049 = vst [vmem:[%s6036 + $0x60] sm:$0xff] %v6016
        %6050 = vst [vmem:[%s6036 + $0x68] sm:$0xff] %v6017
        %6051 = vst [vmem:[%s6036 + $0x70] sm:$0xff] %v6018
        %6052 = vst [vmem:[%s6036 + $0x78] sm:$0xff] %v6019
        %6053 = vst [vmem:[%s6036 + $0x80] sm:$0xff] %v6020
        %6054 = vst [vmem:[%s6036 + $0x88] sm:$0xff] %v6021
        %6055 = vst [vmem:[%s6036 + $0x90] sm:$0xff] %v6022
        %6056 = vst [vmem:[%s6036 + $0x98] sm:$0xff] %v6023
        %6057 = vst [vmem:[%s6036 + $0xa0] sm:$0xff] %v6024
        %6058 = vst [vmem:[%s6036 + $0xa8] sm:$0xff] %v6025
        %6059 = vst [vmem:[%s6036 + $0xb0] sm:$0xff] %v6026
        %6060 = vst [vmem:[%s6036 + $0xb8] sm:$0xff] %v6027
        %6061 = vst [vmem:[%s6036 + $0xc0] sm:$0xff] %v6028
        %6062 = vst [vmem:[%s6036 + $0xc8] sm:$0xff] %v6029
        %6063 = vst [vmem:[%s6036 + $0xd0] sm:$0xff] %v6030
        %6064 = vst [vmem:[%s6036 + $0xd8] sm:$0xff] %v6031
        %6065 = vst [vmem:[%s6036 + $0xe0] sm:$0xff] %v6032
        %6066 = vst [vmem:[%s6036 + $0xe8] sm:$0xff] %v6033
        %6067 = vst [vmem:[%s6036 + $0xf0] sm:$0xff] %v6034
        %6068 = vst [vmem:[%s6036 + $0xf8] sm:$0xff] %v6035
        %s6069 = sand.u32 %s185, 1
        %s6070 = scalar_lea.sflag [#allocation6], %s6069
        %s6071 = sand.u32 %s185, 1
        %s6072 = smul.addr %s6071, 256
        %s6073 = scalar_lea.vmem [#allocation10], %s6072
        // Predicated region
        $region61: #{tpu_custom_call.1} parent=47 // pred_check
          %p6074 = pneg %p195
        $region62: #{tpu_custom_call.1} parent=47 // pred_check_branch
          %6076 = sbr.rel (%p6074) target = $region64
        $region63: #{tpu_custom_call.1} parent=47 // pred_region
          %s6078 = ssub.s32 4096, 4096
          %6079 = vsyncadd %s6070, %s6078
          %s6080 = smul.addr %s25, 32
          %s6081 = smul.addr %s6080, 128
          %s6082 = scalar_lea.hbm %s7, %s6081
          %s6083 = sshll.u32 %s6073, 4
          %s6084 = int_to_ptr.vmem [resolvable:$true] %s6083
          %6089 = dma.vmem_to_hbm [thread:$0]  %s6084, 4096, %s6082, %s6070, 128, 128, 8
        $region64: #{tpu_custom_call.1} parent=47 // pred_fallthru
          _
      $region48: #{tpu_custom_call.1} parent=5 // pred_fallthru
        _
      %p6090 = scmp.le.s32.totalorder 2, %s20
      // Predicated region
      $region65: #{tpu_custom_call.1} parent=5 // pred_check
        %p6091 = pneg %p6090
      $region66: #{tpu_custom_call.1} parent=5 // pred_check_branch
        %6093 = sbr.rel (%p6091) target = $region68
      $region67: #{tpu_custom_call.1} parent=5 // pred_region
        %s6094 = ssub.s32 %s20, 2
        // Predicated region
        $region69: #{tpu_custom_call.1} parent=67 // pred_check
          %p6095 = pneg %p201
        $region70: #{tpu_custom_call.1} parent=67 // pred_check_branch
          %6097 = sbr.rel (%p6095) target = $region72
        $region71: #{tpu_custom_call.1} parent=67 // pred_region
          %s6098 = sand.u32 %s186, 1
          %s6099 = scalar_lea.sflag [#allocation6], %s6098
          %s6100 = sand.u32 %s186, 1
          %s6101 = smul.addr %s6100, 256
          %s6102 = scalar_lea.vmem [#allocation10], %s6101
          %6103 = dma.done %s6099, 4096
        $region72: #{tpu_custom_call.1} parent=67 // pred_fallthru
          _
      $region68: #{tpu_custom_call.1} parent=5 // pred_fallthru
        _
    $region6: #{tpu_custom_call.1} parent=1 // loop_footer
      %s24 = sadd.s32 1, %s20
    $region7: #{tpu_custom_call.1} parent=1 // loop_footer_branch
      %19 = sbr.rel target = $region3
    $region8: #{tpu_custom_call.1} parent=1 // loop_exit
      _
    %6104 = vsyncpa [#allocation5], 1
    %s6105 = scalar_lea.sflag [#allocation5], 1
    %6106 = vsyncpa %s6105, 1
    %6107 = vsyncpa [#allocation8], 1
    %6108 = vsyncpa [#allocation6], 1
    %s6109 = scalar_lea.sflag [#allocation6], 1
    %6110 = vsyncpa %s6109, 1

</llo_original>
